<compile_context>
chip_gen: v6e
topology: v6e:2x2x1
jax: 0.10.0
libtpu: 0.0.40
codegen_flags: <defaults>
</compile_context>

<pallas_src>
import math

import jax
import jax.numpy as jnp
import numpy as np
from jax import lax
from jax.experimental import pallas as pl
from jax.experimental.pallas import tpu as pltpu


# ----------------------------- in-kernel helpers -----------------------------

def _layernorm(x, w, b, eps=1e-5):
    mu = jnp.mean(x, axis=-1, keepdims=True)
    xc = x - mu
    var = jnp.mean(xc * xc, axis=-1, keepdims=True)
    return xc * lax.rsqrt(var + eps) * w + b


def _gelu_exact(x):
    # nn.GELU() default: exact erf formulation.
    return 0.5 * x * (1.0 + lax.erf(x * (1.0 / math.sqrt(2.0))))


# --------------------------------- kernels ------------------------------------

def attn_kernel(x_ref, ln1_w, ln1_b, wq, bq, wkv, bkv, wo, bo, o_ref,
                h_scr, k_scr, v_scr, q_scr, m_scr, l_scr, acc_scr, ctx_scr):
    """Fused pre-LN + QKV projection + causal flash attention + out-proj + residual.

    Grid = (B, S // tq); qi axis is 'arbitrary' (sequential) so the K/V scratch
    computed at qi == 0 persists for all query tiles of the same batch row.
    """
    qi = pl.program_id(1)
    H, S, hd = k_scr.shape
    tq = q_scr.shape[1]
    D = H * hd                                   # == d_model for GPT-2
    scale = 1.0 / math.sqrt(hd)

    # ---- once per batch row: LN1(x), K, V for the full sequence --------------
    @pl.when(qi == 0)
    def _():
        x_all = x_ref[0]                                               # (S, D) f32
        h = _layernorm(x_all, ln1_w[...], ln1_b[...]).astype(jnp.bfloat16)
        h_scr[...] = h
        kv = (jnp.dot(h, wkv[...], preferred_element_type=jnp.float32)
              + bkv[...]).astype(jnp.bfloat16)                          # (S, 2D) lane-dense
        for hh in range(H):                       # head split once per batch row
            k_scr[hh] = kv[:, hh * hd:(hh + 1) * hd]
            v_scr[hh] = kv[:, D + hh * hd:D + (hh + 1) * hd]

    # ---- per query tile -------------------------------------------------------
    q0 = pl.multiple_of(qi * tq, tq)
    x_q = x_ref[0, pl.ds(q0, tq), :]                                    # (tq, D) f32 residual
    h_q = h_scr[pl.ds(q0, tq), :]                                       # (tq, D) bf16
    q = (jnp.dot(h_q, wq[...], preferred_element_type=jnp.float32)
         + bq[...]).astype(jnp.bfloat16)                                # single (tq,D)@(D,D)
    for hh in range(H):
        q_scr[hh] = q[:, hh * hd:(hh + 1) * hd]
    qh = q_scr[...]                                                     # (H, tq, hd) bf16

    m_scr[...] = jnp.full_like(m_scr, -1e30)
    l_scr[...] = jnp.zeros_like(l_scr)
    acc_scr[...] = jnp.zeros_like(acc_scr)

    row = q0 + lax.broadcasted_iota(jnp.int32, (tq, tq), 0)

    # online-softmax over the causally needed key tiles only (kv_i <= qi)
    @pl.loop(0, qi + 1)
    def _(kv_i):
        k0 = pl.multiple_of(kv_i * tq, tq)
        k_t = k_scr[:, pl.ds(k0, tq), :]                                # (H, tq, hd) bf16
        v_t = v_scr[:, pl.ds(k0, tq), :]
        s = jnp.einsum("hqe,hke->hqk", qh, k_t,
                       preferred_element_type=jnp.float32) * scale      # (H, tq, tq) f32
        col = k0 + lax.broadcasted_iota(jnp.int32, (tq, tq), 1)
        s = jnp.where((col <= row)[None], s, -1e30)
        m_prev = m_scr[...]
        m_new = jnp.maximum(m_prev, jnp.max(s, axis=-1, keepdims=True))
        alpha = jnp.exp(m_prev - m_new)
        p = jnp.exp(s - m_new)
        l_scr[...] = alpha * l_scr[...] + jnp.sum(p, axis=-1, keepdims=True)
        acc_scr[...] = alpha * acc_scr[...] + jnp.einsum(
            "hqk,hke->hqe", p.astype(jnp.bfloat16), v_t,
            preferred_element_type=jnp.float32)
        m_scr[...] = m_new

    ctx = (acc_scr[...] * pl.reciprocal(l_scr[...], approx=True)).astype(jnp.bfloat16)
    for hh in range(H):                           # merge heads -> (tq, D) lane-dense
        ctx_scr[:, hh * hd:(hh + 1) * hd] = ctx[hh]
    out = jnp.dot(ctx_scr[...], wo[...],          # single (tq, H*hd) @ (H*hd, D)
                  preferred_element_type=jnp.float32)
    o_ref[0] = x_q + out + bo[...]

    # TODO(synk): for very long S where the full (H, S, hd) K/V scratch no longer
    # fits VMEM, K/V would need to be written to HBM and streamed per kv tile.


def mlp_kernel(x_ref, ln_w, ln_b, w1, b1, w2, b2, o_ref, h_scr, acc_scr):
    """x + W2 @ gelu(W1 @ LN2(x) + b1) + b2, streamed over d_ff tiles.

    LN2(x) is computed once (kf == 0) into bf16 scratch; the result is
    accumulated in an f32 scratch and stored to HBM once at the last tile.
    """
    kf = pl.program_id(1)

    @pl.when(kf == 0)
    def _():
        x = x_ref[0]                                                    # (S, D) f32
        h_scr[...] = _layernorm(x, ln_w[...], ln_b[...]).astype(jnp.bfloat16)
        acc_scr[...] = x + b2[...]

    f = jnp.dot(h_scr[...], w1[...], preferred_element_type=jnp.float32) + b1[...]
    f = _gelu_exact(f).astype(jnp.bfloat16)
    acc_scr[...] += jnp.dot(f, w2[...], preferred_element_type=jnp.float32)

    @pl.when(kf == pl.num_programs(1) - 1)
    def _():
        o_ref[0] = acc_scr[...]


def lm_head_kernel(x_ref, lnf_w, lnf_b, wte_t_ref, o_ref, h_scr):
    """Final LN (hoisted to scratch) + tied lm_head over one (padded-)vocab tile."""
    @pl.when(pl.program_id(1) == 0)
    def _():
        h_scr[...] = _layernorm(x_ref[0], lnf_w[...], lnf_b[...]).astype(jnp.bfloat16)
    o_ref[0] = jnp.dot(h_scr[...], wte_t_ref[...], preferred_element_type=jnp.float32)


# --------------------------------- wrappers ----------------------------------

def _nbytes(shape, dtype):
    return int(np.prod(shape)) * np.dtype(dtype).itemsize


def _cparams(sem, est_bytes):
    # est_bytes already counts double-buffered blocks + scratch + intermediates.
    # Clamp at 56 MiB so the plan keeps headroom on v7x's 64 MiB physical VMEM.
    limit = int(min(max(est_bytes + (8 << 20), 32 << 20), 56 << 20))
    return pltpu.CompilerParams(dimension_semantics=sem, vmem_limit_bytes=limit)


def _rep_spec(a):
    """Whole-array block replicated across every grid step (small weights)."""
    nd = a.ndim
    return pl.BlockSpec(a.shape, lambda *_, _nd=nd: (0,) * _nd)


def _choose_tile(n, target, align):
    """Largest tile <= target that divides n and is a multiple of align.
    Fails loudly instead of silently falling back to the full dimension."""
    if n <= target:
        return n
    if n % align:
        raise ValueError(f"dim {n} must be padded to a multiple of {align} before tiling")
    t = (target // align) * align
    while t >= align:
        if n % t == 0:
            return t
        t -= align
    raise ValueError(f"no {align}-aligned tile <= {target} divides {n}; pad the dim")


def run_attn_block(x, lp, H, hd):
    B, S, D = x.shape
    tq = _choose_tile(S, 128, 8)                 # query-row tile
    args = [lp["ln1_w"], lp["ln1_b"], lp["wq"], lp["bq"],
            lp["wkv"], lp["bkv"], lp["wo"], lp["bo"]]
    est = (2 * _nbytes((1, S, D), jnp.float32)            # x (double-buffered)
           + 2 * _nbytes((1, tq, D), jnp.float32)         # out
           + _nbytes((S, D), jnp.bfloat16)                # LN1(x) scratch
           + 2 * _nbytes((H, S, hd), jnp.bfloat16)        # K/V scratch
           + 2 * _nbytes((H, tq, hd), jnp.bfloat16)       # Q scratch + ctx
           + _nbytes((H, tq, hd), jnp.float32)            # acc scratch
           + 2 * _nbytes((H, tq, 128), jnp.float32)       # m/l (lane-padded)
           + _nbytes((H, tq, tq), jnp.float32)            # score tile
           + 2 * sum(_nbytes(a.shape, a.dtype) for a in args))
    return pl.pallas_call(
        attn_kernel,
        out_shape=jax.ShapeDtypeStruct((B, S, D), jnp.float32),
        grid=(B, S // tq),
        in_specs=[pl.BlockSpec((1, S, D), lambda b, qi: (b, 0, 0))]
                 + [_rep_spec(a) for a in args],
        out_specs=pl.BlockSpec((1, tq, D), lambda b, qi: (b, qi, 0)),
        scratch_shapes=[
            pltpu.VMEM((S, D), jnp.bfloat16),       # LN1(x)
            pltpu.VMEM((H, S, hd), jnp.bfloat16),   # K
            pltpu.VMEM((H, S, hd), jnp.bfloat16),   # V
            pltpu.VMEM((H, tq, hd), jnp.bfloat16),  # Q (head-batched)
            pltpu.VMEM((H, tq, 1), jnp.float32),    # running max
            pltpu.VMEM((H, tq, 1), jnp.float32),    # running sum
            pltpu.VMEM((H, tq, hd), jnp.float32),   # attention accumulator
            pltpu.VMEM((tq, D), jnp.bfloat16),      # merged-heads context
        ],
        # qi axis must be sequential: K/V scratch is filled at qi == 0.
        compiler_params=_cparams(("parallel", "arbitrary"), est),
    )(x, *args)


def run_mlp_block(x, lp):
    B, S, D = x.shape
    d_ff = lp["w1"].shape[1]
    tf = _choose_tile(d_ff, 1024, 128)           # stream W1/W2 in d_ff tiles
    est = (4 * _nbytes((1, S, D), jnp.float32)             # x + out, double-buffered
           + _nbytes((S, D), jnp.bfloat16)                 # LN2(x) scratch
           + _nbytes((S, D), jnp.float32)                  # accumulator
           + 2 * (_nbytes((D, tf), jnp.bfloat16) + _nbytes((tf, D), jnp.bfloat16))
           + _nbytes((S, tf), jnp.float32))                # hidden tile
    return pl.pallas_call(
        mlp_kernel,
        out_shape=jax.ShapeDtypeStruct((B, S, D), jnp.float32),
        grid=(B, d_ff // tf),
        in_specs=[pl.BlockSpec((1, S, D), lambda b, kf: (b, 0, 0)),
                  _rep_spec(lp["ln2_w"]), _rep_spec(lp["ln2_b"]),
                  pl.BlockSpec((D, tf), lambda b, kf: (0, kf)),
                  pl.BlockSpec((1, tf), lambda b, kf: (0, kf)),
                  pl.BlockSpec((tf, D), lambda b, kf: (kf, 0)),
                  _rep_spec(lp["b2"])],
        out_specs=pl.BlockSpec((1, S, D), lambda b, kf: (b, 0, 0)),
        scratch_shapes=[pltpu.VMEM((S, D), jnp.bfloat16),
                        pltpu.VMEM((S, D), jnp.float32)],
        compiler_params=_cparams(("parallel", "arbitrary"), est),
    )(x, lp["ln2_w"], lp["ln2_b"], lp["w1"], lp["b1"], lp["w2"], lp["b2"])


def run_lm_head(x, lnf_w, lnf_b, wte_t):
    B, S, D = x.shape
    Vp = wte_t.shape[1]                          # padded vocab (multiple of 128)
    tv = _choose_tile(Vp, 2048, 128)             # lane-dense vocab tiles
    est = (2 * _nbytes((1, S, D), jnp.float32)
           + _nbytes((S, D), jnp.bfloat16)
           + 2 * _nbytes((D, tv), jnp.bfloat16)
           + 2 * _nbytes((1, S, tv), jnp.float32))
    return pl.pallas_call(
        lm_head_kernel,
        out_shape=jax.ShapeDtypeStruct((B, S, Vp), jnp.float32),
        grid=(B, Vp // tv),
        in_specs=[pl.BlockSpec((1, S, D), lambda b, j: (b, 0, 0)),
                  _rep_spec(lnf_w), _rep_spec(lnf_b),
                  pl.BlockSpec((D, tv), lambda b, j: (0, j))],
        out_specs=pl.BlockSpec((1, S, tv), lambda b, j: (b, 0, j)),
        scratch_shapes=[pltpu.VMEM((S, D), jnp.bfloat16)],
        compiler_params=_cparams(("parallel", "arbitrary"), est),
    )(x, lnf_w, lnf_b, wte_t)


def gpt2_forward(input_ids, packed, num_heads, head_dim):
    # Embedding gather is glue (not the hot path). Residual stream stays f32.
    x = jnp.take(packed["wte"], input_ids, axis=0).astype(jnp.float32)
    for lp in packed["layers"]:
        x = run_attn_block(x, lp, num_heads, head_dim)
        x = run_mlp_block(x, lp)
    return run_lm_head(x, packed["lnf_w"], packed["lnf_b"], packed["wte_t"])


# ------------------------- params: init / kernel layout -----------------------

def init_params(key, vocab, d_model, num_layers, d_ff):
    """Standard (PyTorch-like) layout; matmul weights stored bf16 in HBM."""
    std = 0.02
    keys = iter(jax.random.split(key, 1 + num_layers * 6))

    def w(shape):
        return (std * jax.random.normal(next(keys), shape, jnp.float32)).astype(jnp.bfloat16)

    wte = w((vocab, d_model))
    layers = []
    for _ in range(num_layers):
        layers.append({
            "ln1_w": jnp.ones((1, d_model), jnp.float32),
            "ln1_b": jnp.zeros((1, d_model), jnp.float32),
            "wq": w((d_model, d_model)), "bq": jnp.zeros((1, d_model), jnp.float32),
            "wk": w((d_model, d_model)), "bk": jnp.zeros((1, d_model), jnp.float32),
            "wv": w((d_model, d_model)), "bv": jnp.zeros((1, d_model), jnp.float32),
            "wo": w((d_model, d_model)), "bo": jnp.zeros((1, d_model), jnp.float32),
            "ln2_w": jnp.ones((1, d_model), jnp.float32),
            "ln2_b": jnp.zeros((1, d_model), jnp.float32),
            "w1": w((d_model, d_ff)), "b1": jnp.zeros((1, d_ff), jnp.float32),
            "w2": w((d_ff, d_model)), "b2": jnp.zeros((1, d_model), jnp.float32),
        })
    return {"wte": wte, "layers": layers,
            "lnf_w": jnp.ones((1, d_model), jnp.float32),
            "lnf_b": jnp.zeros((1, d_model), jnp.float32)}


def prepack_params(params):
    """One-time re-layout: fused (D, 2D) K/V weights, vocab-padded transposed wte."""
    layers = []
    for lp in params["layers"]:
        layers.append({
            "ln1_w": lp["ln1_w"], "ln1_b": lp["ln1_b"],
            "wq": lp["wq"], "bq": lp["bq"],
            "wkv": jnp.concatenate([lp["wk"], lp["wv"]], axis=1),
            "bkv": jnp.concatenate([lp["bk"], lp["bv"]], axis=1),
            "wo": lp["wo"], "bo": lp["bo"],
            "ln2_w": lp["ln2_w"], "ln2_b": lp["ln2_b"],
            "w1": lp["w1"], "b1": lp["b1"], "w2": lp["w2"], "b2": lp["b2"],
        })
    V, D = params["wte"].shape
    Vp = ((V + 127) // 128) * 128                # pad vocab for lane-dense tiling
    wte_t = jnp.zeros((D, Vp), params["wte"].dtype).at[:, :V].set(params["wte"].T)
    return {"wte": params["wte"], "wte_t": wte_t, "layers": layers,
            "lnf_w": params["lnf_w"], "lnf_b": params["lnf_b"]}


# ------------------------------ pure-JAX reference ----------------------------

def gpt2_reference(input_ids, params, num_heads, head_dim):
    f32 = lambda a: jnp.asarray(a, jnp.float32)

    def ln(x, w, b):
        mu = jnp.mean(x, -1, keepdims=True)
        var = jnp.mean((x - mu) ** 2, -1, keepdims=True)
        return (x - mu) / jnp.sqrt(var + 1e-5) * w + b

    x = jnp.take(params["wte"], input_ids, axis=0).astype(jnp.float32)
    B, S, D = x.shape
    causal = jnp.tril(jnp.ones((S, S), bool))
    for lp in params["layers"]:
        h = ln(x, lp["ln1_w"], lp["ln1_b"])
        q = h @ f32(lp["wq"]) + lp["bq"]
        k = h @ f32(lp["wk"]) + lp["bk"]
        v = h @ f32(lp["wv"]) + lp["bv"]
        q = q.reshape(B, S, num_heads, head_dim).transpose(0, 2, 1, 3)
        k = k.reshape(B, S, num_heads, head_dim).transpose(0, 2, 1, 3)
        v = v.reshape(B, S, num_heads, head_dim).transpose(0, 2, 1, 3)
        s = jnp.einsum("bhqd,bhkd->bhqk", q, k) / math.sqrt(head_dim)
        s = jnp.where(causal, s, -1e30)
        p = jax.nn.softmax(s, axis=-1)
        a = jnp.einsum("bhqk,bhkd->bhqd", p, v).transpose(0, 2, 1, 3).reshape(B, S, D)
        x = x + (a @ f32(lp["wo"]) + lp["bo"])
        h2 = ln(x, lp["ln2_w"], lp["ln2_b"])
        f = jax.nn.gelu(h2 @ f32(lp["w1"]) + lp["b1"], approximate=False)
        x = x + (f @ f32(lp["w2"]) + lp["b2"])
    x = ln(x, params["lnf_w"], params["lnf_b"])
    return x @ f32(params["wte"]).T


# ----------------------------------- main -------------------------------------

if __name__ == "__main__":
    vocab_size, d_model, num_heads, num_layers, d_ff = 128, 64, 4, 2, 128
    head_dim = d_model // num_heads
    B, S = 2, 16

    root = jax.random.PRNGKey(0)
    k_param, k_ids = jax.random.split(root)
    params = init_params(k_param, vocab_size, d_model, num_layers, d_ff)
    packed = prepack_params(params)
    input_ids = jax.random.randint(k_ids, (B, S), 0, vocab_size, dtype=jnp.int32)

    # num_heads / head_dim / vocab_size captured statically via closure.
    fwd = jax.jit(lambda ids, p: gpt2_forward(ids, p, num_heads, head_dim)[..., :vocab_size])
    logits = jax.block_until_ready(fwd(input_ids, packed))
    assert logits.shape == (B, S, vocab_size)

    ref = gpt2_reference(input_ids, params, num_heads, head_dim)
    np.testing.assert_allclose(np.asarray(logits), np.asarray(ref, dtype=np.float32),
                               rtol=3e-2, atol=3e-2)

    print("KERNEL_OK")
</pallas_src>

<mosaic_0001>
module attributes {stable_mosaic.version = 11 : i64} {
  func.func @lm_head_kernel(%arg0: i32, %arg1: i32, %arg2: memref<1x16x64xf32, #tpu.memory_space<vmem>>, %arg3: memref<1x64xf32, #tpu.memory_space<vmem>>, %arg4: memref<1x64xf32, #tpu.memory_space<vmem>>, %arg5: memref<64x128xbf16, #tpu.memory_space<vmem>>, %arg6: memref<1x16x128xf32, #tpu.memory_space<vmem>>, %arg7: memref<16x64xbf16, #tpu.memory_space<vmem>>) attributes {dimension_semantics = [#tpu.dimension_semantics<parallel>, #tpu.dimension_semantics<arbitrary>], iteration_bounds = array<i64: 2, 1>, scalar_prefetch = 0 : i64, scratch_operands = 1 : i64, tpu.core_type = #tpu.core_type<tc>, window_params = [{transform_indices = @transform_0, window_bounds = array<i64: 1, 16, 64>}, {pipeline_mode = #tpu.pipeline_mode<synchronous>, transform_indices = @transform_1, window_bounds = array<i64: 1, 64>}, {pipeline_mode = #tpu.pipeline_mode<synchronous>, transform_indices = @transform_2, window_bounds = array<i64: 1, 64>}, {transform_indices = @transform_3, window_bounds = array<i64: 64, 128>}, {transform_indices = @transform_4, window_bounds = array<i64: 1, 16, 128>}]} {
    %c0_i32 = arith.constant 0 : i32
    %0 = arith.cmpi eq, %arg1, %c0_i32 : i32
    %1 = arith.extui %0 : i1 to i32
    %c0_i32_0 = arith.constant 0 : i32
    %2 = arith.cmpi ne, %1, %c0_i32_0 : i32
    scf.if %2 {
      %c0_7 = arith.constant 0 : index
      %c0_8 = arith.constant 0 : index
      %c0_9 = arith.constant 0 : index
      %9 = vector.load %arg2[%c0_7, %c0_8, %c0_9] : memref<1x16x64xf32, #tpu.memory_space<vmem>>, vector<1x16x64xf32>
      %10 = vector.shape_cast %9 : vector<1x16x64xf32> to vector<16x64xf32>
      %c0_10 = arith.constant 0 : index
      %c0_11 = arith.constant 0 : index
      %11 = vector.load %arg3[%c0_10, %c0_11] : memref<1x64xf32, #tpu.memory_space<vmem>>, vector<1x64xf32>
      %c0_12 = arith.constant 0 : index
      %c0_13 = arith.constant 0 : index
      %12 = vector.load %arg4[%c0_12, %c0_13] : memref<1x64xf32, #tpu.memory_space<vmem>>, vector<1x64xf32>
      %cst_14 = arith.constant dense<0.000000e+00> : vector<16xf32>
      %13 = vector.multi_reduction <add>, %10, %cst_14 [1] : vector<16x64xf32> to vector<16xf32>
      %14 = vector.shape_cast %13 : vector<16xf32> to vector<16x1xf32>
      %cst_15 = arith.constant 6.400000e+01 : f32
      %15 = vector.broadcast %cst_15 : f32 to vector<16x1xf32>
      %16 = arith.divf %14, %15 : vector<16x1xf32>
      %17 = vector.broadcast %16 : vector<16x1xf32> to vector<16x64xf32>
      %18 = arith.subf %10, %17 : vector<16x64xf32>
      %19 = arith.mulf %18, %18 : vector<16x64xf32>
      %cst_16 = arith.constant dense<0.000000e+00> : vector<16xf32>
      %20 = vector.multi_reduction <add>, %19, %cst_16 [1] : vector<16x64xf32> to vector<16xf32>
      %21 = vector.shape_cast %20 : vector<16xf32> to vector<16x1xf32>
      %cst_17 = arith.constant 6.400000e+01 : f32
      %22 = vector.broadcast %cst_17 : f32 to vector<16x1xf32>
      %23 = arith.divf %21, %22 : vector<16x1xf32>
      %cst_18 = arith.constant 9.99999974E-6 : f32
      %24 = vector.broadcast %cst_18 : f32 to vector<16x1xf32>
      %25 = arith.addf %23, %24 : vector<16x1xf32>
      %26 = math.rsqrt %25 : vector<16x1xf32>
      %27 = vector.broadcast %26 : vector<16x1xf32> to vector<16x64xf32>
      %28 = arith.mulf %18, %27 : vector<16x64xf32>
      %29 = vector.broadcast %11 : vector<1x64xf32> to vector<16x64xf32>
      %30 = arith.mulf %28, %29 : vector<16x64xf32>
      %31 = vector.broadcast %12 : vector<1x64xf32> to vector<16x64xf32>
      %32 = arith.addf %30, %31 : vector<16x64xf32>
      %33 = arith.truncf %32 : vector<16x64xf32> to vector<16x64xbf16>
      %c0_19 = arith.constant 0 : index
      %c0_20 = arith.constant 0 : index
      %34 = vector.load %arg7[%c0_19, %c0_20] : memref<16x64xbf16, #tpu.memory_space<vmem>>, vector<16x64xbf16>
      tpu.vector_store %arg7[%c0_19, %c0_20], %33 {strides = array<i32>} : memref<16x64xbf16, #tpu.memory_space<vmem>>, vector<16x64xbf16>,
    } else {
    }
    %c0 = arith.constant 0 : index
    %c0_1 = arith.constant 0 : index
    %3 = vector.load %arg7[%c0, %c0_1] : memref<16x64xbf16, #tpu.memory_space<vmem>>, vector<16x64xbf16>
    %c0_2 = arith.constant 0 : index
    %c0_3 = arith.constant 0 : index
    %4 = vector.load %arg5[%c0_2, %c0_3] : memref<64x128xbf16, #tpu.memory_space<vmem>>, vector<64x128xbf16>
    %cst = arith.constant dense<0.000000e+00> : vector<16x128xf32>
    %5 = tpu.matmul %3, %4, %cst {dimension_numbers = #tpu.dot_dimension_numbers<[1], [0], [0], [1], [0, 0, 1, 1], [], []>} : vector<16x64xbf16>, vector<64x128xbf16>, vector<16x128xf32> -> vector<16x128xf32>
    %c0_4 = arith.constant 0 : index
    %c0_5 = arith.constant 0 : index
    %c0_6 = arith.constant 0 : index
    %6 = vector.load %arg6[%c0_4, %c0_5, %c0_6] : memref<1x16x128xf32, #tpu.memory_space<vmem>>, vector<1x16x128xf32>
    %7 = vector.shape_cast %6 : vector<1x16x128xf32> to vector<16x128xf32>
    %8 = vector.shape_cast %5 : vector<16x128xf32> to vector<1x16x128xf32>
    tpu.vector_store %arg6[%c0_4, %c0_5, %c0_6], %8 {strides = array<i32>} : memref<1x16x128xf32, #tpu.memory_space<vmem>>, vector<1x16x128xf32>,
    return
  }
  func.func @transform_0(%arg0: i32, %arg1: i32) -> (i32, i32, i32) {
    %c0_i32 = arith.constant 0 : i32
    %c0_i32_0 = arith.constant 0 : i32
    %c0_i32_1 = arith.constant 0 : i32
    return %arg0, %c0_i32, %c0_i32_0 : i32, i32, i32
  }
  func.func @transform_1(%arg0: i32, %arg1: i32) -> (i32, i32) {
    %c0_i32 = arith.constant 0 : i32
    %c0_i32_0 = arith.constant 0 : i32
    %c0_i32_1 = arith.constant 0 : i32
    return %c0_i32, %c0_i32_0 : i32, i32
  }
  func.func @transform_2(%arg0: i32, %arg1: i32) -> (i32, i32) {
    %c0_i32 = arith.constant 0 : i32
    %c0_i32_0 = arith.constant 0 : i32
    %c0_i32_1 = arith.constant 0 : i32
    return %c0_i32, %c0_i32_0 : i32, i32
  }
  func.func @transform_3(%arg0: i32, %arg1: i32) -> (i32, i32) {
    %c0_i32 = arith.constant 0 : i32
    %c0_i32_0 = arith.constant 0 : i32
    return %c0_i32, %arg1 : i32, i32
  }
  func.func @transform_4(%arg0: i32, %arg1: i32) -> (i32, i32, i32) {
    %c0_i32 = arith.constant 0 : i32
    %c0_i32_0 = arith.constant 0 : i32
    return %arg0, %c0_i32, %arg1 : i32, i32, i32
  }
}

module attributes {stable_mosaic.version = 11 : i64} {
  func.func @mlp_kernel(%arg0: i32, %arg1: i32, %arg2: memref<1x16x64xf32, #tpu.memory_space<vmem>>, %arg3: memref<1x64xf32, #tpu.memory_space<vmem>>, %arg4: memref<1x64xf32, #tpu.memory_space<vmem>>, %arg5: memref<64x128xbf16, #tpu.memory_space<vmem>>, %arg6: memref<1x128xf32, #tpu.memory_space<vmem>>, %arg7: memref<128x64xbf16, #tpu.memory_space<vmem>>, %arg8: memref<1x64xf32, #tpu.memory_space<vmem>>, %arg9: memref<1x16x64xf32, #tpu.memory_space<vmem>>, %arg10: memref<16x64xbf16, #tpu.memory_space<vmem>>, %arg11: memref<16x64xf32, #tpu.memory_space<vmem>>) attributes {dimension_semantics = [#tpu.dimension_semantics<parallel>, #tpu.dimension_semantics<arbitrary>], iteration_bounds = array<i64: 2, 1>, scalar_prefetch = 0 : i64, scratch_operands = 2 : i64, tpu.core_type = #tpu.core_type<tc>, window_params = [{transform_indices = @transform_0, window_bounds = array<i64: 1, 16, 64>}, {pipeline_mode = #tpu.pipeline_mode<synchronous>, transform_indices = @transform_1, window_bounds = array<i64: 1, 64>}, {pipeline_mode = #tpu.pipeline_mode<synchronous>, transform_indices = @transform_2, window_bounds = array<i64: 1, 64>}, {transform_indices = @transform_3, window_bounds = array<i64: 64, 128>}, {transform_indices = @transform_4, window_bounds = array<i64: 1, 128>}, {transform_indices = @transform_5, window_bounds = array<i64: 128, 64>}, {pipeline_mode = #tpu.pipeline_mode<synchronous>, transform_indices = @transform_6, window_bounds = array<i64: 1, 64>}, {transform_indices = @transform_7, window_bounds = array<i64: 1, 16, 64>}]} {
    %c0_i32 = arith.constant 0 : i32
    %0 = arith.cmpi eq, %arg1, %c0_i32 : i32
    %1 = arith.extui %0 : i1 to i32
    %c0_i32_0 = arith.constant 0 : i32
    %2 = arith.cmpi ne, %1, %c0_i32_0 : i32
    scf.if %2 {
      %c0_18 = arith.constant 0 : index
      %c0_19 = arith.constant 0 : index
      %c0_20 = arith.constant 0 : index
      %26 = vector.load %arg2[%c0_18, %c0_19, %c0_20] : memref<1x16x64xf32, #tpu.memory_space<vmem>>, vector<1x16x64xf32>
      %27 = vector.shape_cast %26 : vector<1x16x64xf32> to vector<16x64xf32>
      %c0_21 = arith.constant 0 : index
      %c0_22 = arith.constant 0 : index
      %28 = vector.load %arg3[%c0_21, %c0_22] : memref<1x64xf32, #tpu.memory_space<vmem>>, vector<1x64xf32>
      %c0_23 = arith.constant 0 : index
      %c0_24 = arith.constant 0 : index
      %29 = vector.load %arg4[%c0_23, %c0_24] : memref<1x64xf32, #tpu.memory_space<vmem>>, vector<1x64xf32>
      %cst_25 = arith.constant dense<0.000000e+00> : vector<16xf32>
      %30 = vector.multi_reduction <add>, %27, %cst_25 [1] : vector<16x64xf32> to vector<16xf32>
      %31 = vector.shape_cast %30 : vector<16xf32> to vector<16x1xf32>
      %cst_26 = arith.constant 6.400000e+01 : f32
      %32 = vector.broadcast %cst_26 : f32 to vector<16x1xf32>
      %33 = arith.divf %31, %32 : vector<16x1xf32>
      %34 = vector.broadcast %33 : vector<16x1xf32> to vector<16x64xf32>
      %35 = arith.subf %27, %34 : vector<16x64xf32>
      %36 = arith.mulf %35, %35 : vector<16x64xf32>
      %cst_27 = arith.constant dense<0.000000e+00> : vector<16xf32>
      %37 = vector.multi_reduction <add>, %36, %cst_27 [1] : vector<16x64xf32> to vector<16xf32>
      %38 = vector.shape_cast %37 : vector<16xf32> to vector<16x1xf32>
      %cst_28 = arith.constant 6.400000e+01 : f32
      %39 = vector.broadcast %cst_28 : f32 to vector<16x1xf32>
      %40 = arith.divf %38, %39 : vector<16x1xf32>
      %cst_29 = arith.constant 9.99999974E-6 : f32
      %41 = vector.broadcast %cst_29 : f32 to vector<16x1xf32>
      %42 = arith.addf %40, %41 : vector<16x1xf32>
      %43 = math.rsqrt %42 : vector<16x1xf32>
      %44 = vector.broadcast %43 : vector<16x1xf32> to vector<16x64xf32>
      %45 = arith.mulf %35, %44 : vector<16x64xf32>
      %46 = vector.broadcast %28 : vector<1x64xf32> to vector<16x64xf32>
      %47 = arith.mulf %45, %46 : vector<16x64xf32>
      %48 = vector.broadcast %29 : vector<1x64xf32> to vector<16x64xf32>
      %49 = arith.addf %47, %48 : vector<16x64xf32>
      %50 = arith.truncf %49 : vector<16x64xf32> to vector<16x64xbf16>
      %c0_30 = arith.constant 0 : index
      %c0_31 = arith.constant 0 : index
      %51 = vector.load %arg10[%c0_30, %c0_31] : memref<16x64xbf16, #tpu.memory_space<vmem>>, vector<16x64xbf16>
      tpu.vector_store %arg10[%c0_30, %c0_31], %50 {strides = array<i32>} : memref<16x64xbf16, #tpu.memory_space<vmem>>, vector<16x64xbf16>,
      %c0_32 = arith.constant 0 : index
      %c0_33 = arith.constant 0 : index
      %52 = vector.load %arg8[%c0_32, %c0_33] : memref<1x64xf32, #tpu.memory_space<vmem>>, vector<1x64xf32>
      %53 = vector.broadcast %52 : vector<1x64xf32> to vector<16x64xf32>
      %54 = arith.addf %27, %53 : vector<16x64xf32>
      %c0_34 = arith.constant 0 : index
      %c0_35 = arith.constant 0 : index
      %55 = vector.load %arg11[%c0_34, %c0_35] : memref<16x64xf32, #tpu.memory_space<vmem>>, vector<16x64xf32>
      tpu.vector_store %arg11[%c0_34, %c0_35], %54 {strides = array<i32>} : memref<16x64xf32, #tpu.memory_space<vmem>>, vector<16x64xf32>,
    } else {
    }
    %c0 = arith.constant 0 : index
    %c0_1 = arith.constant 0 : index
    %3 = vector.load %arg10[%c0, %c0_1] : memref<16x64xbf16, #tpu.memory_space<vmem>>, vector<16x64xbf16>
    %c0_2 = arith.constant 0 : index
    %c0_3 = arith.constant 0 : index
    %4 = vector.load %arg5[%c0_2, %c0_3] : memref<64x128xbf16, #tpu.memory_space<vmem>>, vector<64x128xbf16>
    %cst = arith.constant dense<0.000000e+00> : vector<16x128xf32>
    %5 = tpu.matmul %3, %4, %cst {dimension_numbers = #tpu.dot_dimension_numbers<[1], [0], [0], [1], [0, 0, 1, 1], [], []>} : vector<16x64xbf16>, vector<64x128xbf16>, vector<16x128xf32> -> vector<16x128xf32>
    %c0_4 = arith.constant 0 : index
    %c0_5 = arith.constant 0 : index
    %6 = vector.load %arg6[%c0_4, %c0_5] : memref<1x128xf32, #tpu.memory_space<vmem>>, vector<1x128xf32>
    %7 = vector.broadcast %6 : vector<1x128xf32> to vector<16x128xf32>
    %8 = arith.addf %5, %7 : vector<16x128xf32>
    %cst_6 = arith.constant 5.000000e-01 : f32
    %9 = vector.broadcast %cst_6 : f32 to vector<16x128xf32>
    %10 = arith.mulf %9, %8 : vector<16x128xf32>
    %cst_7 = arith.constant 0.707106769 : f32
    %11 = vector.broadcast %cst_7 : f32 to vector<16x128xf32>
    %12 = arith.mulf %8, %11 : vector<16x128xf32>
    %13 = math.erf %12 : vector<16x128xf32>
    %cst_8 = arith.constant 1.000000e+00 : f32
    %14 = vector.broadcast %cst_8 : f32 to vector<16x128xf32>
    %15 = arith.addf %14, %13 : vector<16x128xf32>
    %16 = arith.mulf %10, %15 : vector<16x128xf32>
    %17 = arith.truncf %16 : vector<16x128xf32> to vector<16x128xbf16>
    %c0_9 = arith.constant 0 : index
    %c0_10 = arith.constant 0 : index
    %18 = vector.load %arg11[%c0_9, %c0_10] : memref<16x64xf32, #tpu.memory_space<vmem>>, vector<16x64xf32>
    %c0_11 = arith.constant 0 : index
    %c0_12 = arith.constant 0 : index
    %19 = vector.load %arg7[%c0_11, %c0_12] : memref<128x64xbf16, #tpu.memory_space<vmem>>, vector<128x64xbf16>
    %cst_13 = arith.constant dense<0.000000e+00> : vector<16x64xf32>
    %20 = tpu.matmul %17, %19, %cst_13 {dimension_numbers = #tpu.dot_dimension_numbers<[1], [0], [0], [1], [0, 0, 1, 1], [], []>} : vector<16x128xbf16>, vector<128x64xbf16>, vector<16x64xf32> -> vector<16x64xf32>
    %21 = arith.addf %18, %20 : vector<16x64xf32>
    %c0_14 = arith.constant 0 : index
    %c0_15 = arith.constant 0 : index
    %22 = vector.load %arg11[%c0_14, %c0_15] : memref<16x64xf32, #tpu.memory_space<vmem>>, vector<16x64xf32>
    tpu.vector_store %arg11[%c0_14, %c0_15], %21 {strides = array<i32>} : memref<16x64xf32, #tpu.memory_space<vmem>>, vector<16x64xf32>,
    %c0_i32_16 = arith.constant 0 : i32
    %23 = arith.cmpi eq, %arg1, %c0_i32_16 : i32
    %24 = arith.extui %23 : i1 to i32
    %c0_i32_17 = arith.constant 0 : i32
    %25 = arith.cmpi ne, %24, %c0_i32_17 : i32
    scf.if %25 {
      %c0_18 = arith.constant 0 : index
      %c0_19 = arith.constant 0 : index
      %26 = vector.load %arg11[%c0_18, %c0_19] : memref<16x64xf32, #tpu.memory_space<vmem>>, vector<16x64xf32>
      %c0_20 = arith.constant 0 : index
      %c0_21 = arith.constant 0 : index
      %c0_22 = arith.constant 0 : index
      %27 = vector.load %arg9[%c0_20, %c0_21, %c0_22] : memref<1x16x64xf32, #tpu.memory_space<vmem>>, vector<1x16x64xf32>
      %28 = vector.shape_cast %27 : vector<1x16x64xf32> to vector<16x64xf32>
      %29 = vector.shape_cast %26 : vector<16x64xf32> to vector<1x16x64xf32>
      tpu.vector_store %arg9[%c0_20, %c0_21, %c0_22], %29 {strides = array<i32>} : memref<1x16x64xf32, #tpu.memory_space<vmem>>, vector<1x16x64xf32>,
    } else {
    }
    return
  }
  func.func @transform_0(%arg0: i32, %arg1: i32) -> (i32, i32, i32) {
    %c0_i32 = arith.constant 0 : i32
    %c0_i32_0 = arith.constant 0 : i32
    %c0_i32_1 = arith.constant 0 : i32
    return %arg0, %c0_i32, %c0_i32_0 : i32, i32, i32
  }
  func.func @transform_1(%arg0: i32, %arg1: i32) -> (i32, i32) {
    %c0_i32 = arith.constant 0 : i32
    %c0_i32_0 = arith.constant 0 : i32
    %c0_i32_1 = arith.constant 0 : i32
    return %c0_i32, %c0_i32_0 : i32, i32
  }
  func.func @transform_2(%arg0: i32, %arg1: i32) -> (i32, i32) {
    %c0_i32 = arith.constant 0 : i32
    %c0_i32_0 = arith.constant 0 : i32
    %c0_i32_1 = arith.constant 0 : i32
    return %c0_i32, %c0_i32_0 : i32, i32
  }
  func.func @transform_3(%arg0: i32, %arg1: i32) -> (i32, i32) {
    %c0_i32 = arith.constant 0 : i32
    %c0_i32_0 = arith.constant 0 : i32
    return %c0_i32, %arg1 : i32, i32
  }
  func.func @transform_4(%arg0: i32, %arg1: i32) -> (i32, i32) {
    %c0_i32 = arith.constant 0 : i32
    %c0_i32_0 = arith.constant 0 : i32
    return %c0_i32, %arg1 : i32, i32
  }
  func.func @transform_5(%arg0: i32, %arg1: i32) -> (i32, i32) {
    %c0_i32 = arith.constant 0 : i32
    %c0_i32_0 = arith.constant 0 : i32
    return %arg1, %c0_i32 : i32, i32
  }
  func.func @transform_6(%arg0: i32, %arg1: i32) -> (i32, i32) {
    %c0_i32 = arith.constant 0 : i32
    %c0_i32_0 = arith.constant 0 : i32
    %c0_i32_1 = arith.constant 0 : i32
    return %c0_i32, %c0_i32_0 : i32, i32
  }
  func.func @transform_7(%arg0: i32, %arg1: i32) -> (i32, i32, i32) {
    %c0_i32 = arith.constant 0 : i32
    %c0_i32_0 = arith.constant 0 : i32
    %c0_i32_1 = arith.constant 0 : i32
    return %arg0, %c0_i32, %c0_i32_0 : i32, i32, i32
  }
}

module attributes {stable_mosaic.version = 11 : i64} {
  func.func @attn_kernel(%arg0: i32, %arg1: i32, %arg2: memref<1x16x64xf32, #tpu.memory_space<vmem>>, %arg3: memref<1x64xf32, #tpu.memory_space<vmem>>, %arg4: memref<1x64xf32, #tpu.memory_space<vmem>>, %arg5: memref<64x64xbf16, #tpu.memory_space<vmem>>, %arg6: memref<1x64xf32, #tpu.memory_space<vmem>>, %arg7: memref<64x128xbf16, #tpu.memory_space<vmem>>, %arg8: memref<1x128xf32, #tpu.memory_space<vmem>>, %arg9: memref<64x64xbf16, #tpu.memory_space<vmem>>, %arg10: memref<1x64xf32, #tpu.memory_space<vmem>>, %arg11: memref<1x16x64xf32, #tpu.memory_space<vmem>>, %arg12: memref<16x64xbf16, #tpu.memory_space<vmem>>, %arg13: memref<4x16x16xbf16, #tpu.memory_space<vmem>>, %arg14: memref<4x16x16xbf16, #tpu.memory_space<vmem>>, %arg15: memref<4x16x16xbf16, #tpu.memory_space<vmem>>, %arg16: memref<4x16x1xf32, #tpu.memory_space<vmem>>, %arg17: memref<4x16x1xf32, #tpu.memory_space<vmem>>, %arg18: memref<4x16x16xf32, #tpu.memory_space<vmem>>, %arg19: memref<16x64xbf16, #tpu.memory_space<vmem>>) attributes {dimension_semantics = [#tpu.dimension_semantics<parallel>, #tpu.dimension_semantics<arbitrary>], iteration_bounds = array<i64: 2, 1>, scalar_prefetch = 0 : i64, scratch_operands = 8 : i64, tpu.core_type = #tpu.core_type<tc>, window_params = [{transform_indices = @transform_0, window_bounds = array<i64: 1, 16, 64>}, {pipeline_mode = #tpu.pipeline_mode<synchronous>, transform_indices = @transform_1, window_bounds = array<i64: 1, 64>}, {pipeline_mode = #tpu.pipeline_mode<synchronous>, transform_indices = @transform_2, window_bounds = array<i64: 1, 64>}, {pipeline_mode = #tpu.pipeline_mode<synchronous>, transform_indices = @transform_3, window_bounds = array<i64: 64, 64>}, {pipeline_mode = #tpu.pipeline_mode<synchronous>, transform_indices = @transform_4, window_bounds = array<i64: 1, 64>}, {pipeline_mode = #tpu.pipeline_mode<synchronous>, transform_indices = @transform_5, window_bounds = array<i64: 64, 128>}, {pipeline_mode = #tpu.pipeline_mode<synchronous>, transform_indices = @transform_6, window_bounds = array<i64: 1, 128>}, {pipeline_mode = #tpu.pipeline_mode<synchronous>, transform_indices = @transform_7, window_bounds = array<i64: 64, 64>}, {pipeline_mode = #tpu.pipeline_mode<synchronous>, transform_indices = @transform_8, window_bounds = array<i64: 1, 64>}, {transform_indices = @transform_9, window_bounds = array<i64: 1, 16, 64>}]} {
    %c0_i32 = arith.constant 0 : i32
    %0 = arith.cmpi eq, %arg1, %c0_i32 : i32
    %1 = arith.extui %0 : i1 to i32
    %c0_i32_0 = arith.constant 0 : i32
    %2 = arith.cmpi ne, %1, %c0_i32_0 : i32
    scf.if %2 {
      %c0_60 = arith.constant 0 : index
      %c0_61 = arith.constant 0 : index
      %c0_62 = arith.constant 0 : index
      %77 = vector.load %arg2[%c0_60, %c0_61, %c0_62] : memref<1x16x64xf32, #tpu.memory_space<vmem>>, vector<1x16x64xf32>
      %78 = vector.shape_cast %77 : vector<1x16x64xf32> to vector<16x64xf32>
      %c0_63 = arith.constant 0 : index
      %c0_64 = arith.constant 0 : index
      %79 = vector.load %arg3[%c0_63, %c0_64] : memref<1x64xf32, #tpu.memory_space<vmem>>, vector<1x64xf32>
      %c0_65 = arith.constant 0 : index
      %c0_66 = arith.constant 0 : index
      %80 = vector.load %arg4[%c0_65, %c0_66] : memref<1x64xf32, #tpu.memory_space<vmem>>, vector<1x64xf32>
      %cst_67 = arith.constant dense<0.000000e+00> : vector<16xf32>
      %81 = vector.multi_reduction <add>, %78, %cst_67 [1] : vector<16x64xf32> to vector<16xf32>
      %82 = vector.shape_cast %81 : vector<16xf32> to vector<16x1xf32>
      %cst_68 = arith.constant 6.400000e+01 : f32
      %83 = vector.broadcast %cst_68 : f32 to vector<16x1xf32>
      %84 = arith.divf %82, %83 : vector<16x1xf32>
      %85 = vector.broadcast %84 : vector<16x1xf32> to vector<16x64xf32>
      %86 = arith.subf %78, %85 : vector<16x64xf32>
      %87 = arith.mulf %86, %86 : vector<16x64xf32>
      %cst_69 = arith.constant dense<0.000000e+00> : vector<16xf32>
      %88 = vector.multi_reduction <add>, %87, %cst_69 [1] : vector<16x64xf32> to vector<16xf32>
      %89 = vector.shape_cast %88 : vector<16xf32> to vector<16x1xf32>
      %cst_70 = arith.constant 6.400000e+01 : f32
      %90 = vector.broadcast %cst_70 : f32 to vector<16x1xf32>
      %91 = arith.divf %89, %90 : vector<16x1xf32>
      %cst_71 = arith.constant 9.99999974E-6 : f32
      %92 = vector.broadcast %cst_71 : f32 to vector<16x1xf32>
      %93 = arith.addf %91, %92 : vector<16x1xf32>
      %94 = math.rsqrt %93 : vector<16x1xf32>
      %95 = vector.broadcast %94 : vector<16x1xf32> to vector<16x64xf32>
      %96 = arith.mulf %86, %95 : vector<16x64xf32>
      %97 = vector.broadcast %79 : vector<1x64xf32> to vector<16x64xf32>
      %98 = arith.mulf %96, %97 : vector<16x64xf32>
      %99 = vector.broadcast %80 : vector<1x64xf32> to vector<16x64xf32>
      %100 = arith.addf %98, %99 : vector<16x64xf32>
      %101 = arith.truncf %100 : vector<16x64xf32> to vector<16x64xbf16>
      %c0_72 = arith.constant 0 : index
      %c0_73 = arith.constant 0 : index
      %102 = vector.load %arg12[%c0_72, %c0_73] : memref<16x64xbf16, #tpu.memory_space<vmem>>, vector<16x64xbf16>
      tpu.vector_store %arg12[%c0_72, %c0_73], %101 {strides = array<i32>} : memref<16x64xbf16, #tpu.memory_space<vmem>>, vector<16x64xbf16>,
      %c0_74 = arith.constant 0 : index
      %c0_75 = arith.constant 0 : index
      %103 = vector.load %arg7[%c0_74, %c0_75] : memref<64x128xbf16, #tpu.memory_space<vmem>>, vector<64x128xbf16>
      %cst_76 = arith.constant dense<0.000000e+00> : vector<16x128xf32>
      %104 = tpu.matmul %101, %103, %cst_76 {dimension_numbers = #tpu.dot_dimension_numbers<[1], [0], [0], [1], [0, 0, 1, 1], [], []>} : vector<16x64xbf16>, vector<64x128xbf16>, vector<16x128xf32> -> vector<16x128xf32>
      %c0_77 = arith.constant 0 : index
      %c0_78 = arith.constant 0 : index
      %105 = vector.load %arg8[%c0_77, %c0_78] : memref<1x128xf32, #tpu.memory_space<vmem>>, vector<1x128xf32>
      %106 = vector.broadcast %105 : vector<1x128xf32> to vector<16x128xf32>
      %107 = arith.addf %104, %106 : vector<16x128xf32>
      %108 = arith.truncf %107 : vector<16x128xf32> to vector<16x128xbf16>
      %109 = vector.extract_strided_slice %108 {offsets = [0, 0], sizes = [16, 16], strides = [1, 1]} : vector<16x128xbf16> to vector<16x16xbf16>
      %c0_79 = arith.constant 0 : index
      %c0_80 = arith.constant 0 : index
      %c0_81 = arith.constant 0 : index
      %110 = vector.load %arg13[%c0_79, %c0_80, %c0_81] : memref<4x16x16xbf16, #tpu.memory_space<vmem>>, vector<1x16x16xbf16>
      %111 = vector.shape_cast %110 : vector<1x16x16xbf16> to vector<16x16xbf16>
      %112 = vector.shape_cast %109 : vector<16x16xbf16> to vector<1x16x16xbf16>
      tpu.vector_store %arg13[%c0_79, %c0_80, %c0_81], %112 {strides = array<i32>} : memref<4x16x16xbf16, #tpu.memory_space<vmem>>, vector<1x16x16xbf16>,
      %113 = vector.extract_strided_slice %108 {offsets = [0, 64], sizes = [16, 16], strides = [1, 1]} : vector<16x128xbf16> to vector<16x16xbf16>
      %c0_82 = arith.constant 0 : index
      %c0_83 = arith.constant 0 : index
      %c0_84 = arith.constant 0 : index
      %114 = vector.load %arg14[%c0_82, %c0_83, %c0_84] : memref<4x16x16xbf16, #tpu.memory_space<vmem>>, vector<1x16x16xbf16>
      %115 = vector.shape_cast %114 : vector<1x16x16xbf16> to vector<16x16xbf16>
      %116 = vector.shape_cast %113 : vector<16x16xbf16> to vector<1x16x16xbf16>
      tpu.vector_store %arg14[%c0_82, %c0_83, %c0_84], %116 {strides = array<i32>} : memref<4x16x16xbf16, #tpu.memory_space<vmem>>, vector<1x16x16xbf16>,
      %117 = vector.extract_strided_slice %108 {offsets = [0, 16], sizes = [16, 16], strides = [1, 1]} : vector<16x128xbf16> to vector<16x16xbf16>
      %c1_85 = arith.constant 1 : index
      %c0_86 = arith.constant 0 : index
      %c0_87 = arith.constant 0 : index
      %118 = vector.load %arg13[%c1_85, %c0_86, %c0_87] : memref<4x16x16xbf16, #tpu.memory_space<vmem>>, vector<1x16x16xbf16>
      %119 = vector.shape_cast %118 : vector<1x16x16xbf16> to vector<16x16xbf16>
      %120 = vector.shape_cast %117 : vector<16x16xbf16> to vector<1x16x16xbf16>
      tpu.vector_store %arg13[%c1_85, %c0_86, %c0_87], %120 {strides = array<i32>} : memref<4x16x16xbf16, #tpu.memory_space<vmem>>, vector<1x16x16xbf16>,
      %121 = vector.extract_strided_slice %108 {offsets = [0, 80], sizes = [16, 16], strides = [1, 1]} : vector<16x128xbf16> to vector<16x16xbf16>
      %c1_88 = arith.constant 1 : index
      %c0_89 = arith.constant 0 : index
      %c0_90 = arith.constant 0 : index
      %122 = vector.load %arg14[%c1_88, %c0_89, %c0_90] : memref<4x16x16xbf16, #tpu.memory_space<vmem>>, vector<1x16x16xbf16>
      %123 = vector.shape_cast %122 : vector<1x16x16xbf16> to vector<16x16xbf16>
      %124 = vector.shape_cast %121 : vector<16x16xbf16> to vector<1x16x16xbf16>
      tpu.vector_store %arg14[%c1_88, %c0_89, %c0_90], %124 {strides = array<i32>} : memref<4x16x16xbf16, #tpu.memory_space<vmem>>, vector<1x16x16xbf16>,
      %125 = vector.extract_strided_slice %108 {offsets = [0, 32], sizes = [16, 16], strides = [1, 1]} : vector<16x128xbf16> to vector<16x16xbf16>
      %c2_91 = arith.constant 2 : index
      %c0_92 = arith.constant 0 : index
      %c0_93 = arith.constant 0 : index
      %126 = vector.load %arg13[%c2_91, %c0_92, %c0_93] : memref<4x16x16xbf16, #tpu.memory_space<vmem>>, vector<1x16x16xbf16>
      %127 = vector.shape_cast %126 : vector<1x16x16xbf16> to vector<16x16xbf16>
      %128 = vector.shape_cast %125 : vector<16x16xbf16> to vector<1x16x16xbf16>
      tpu.vector_store %arg13[%c2_91, %c0_92, %c0_93], %128 {strides = array<i32>} : memref<4x16x16xbf16, #tpu.memory_space<vmem>>, vector<1x16x16xbf16>,
      %129 = vector.extract_strided_slice %108 {offsets = [0, 96], sizes = [16, 16], strides = [1, 1]} : vector<16x128xbf16> to vector<16x16xbf16>
      %c2_94 = arith.constant 2 : index
      %c0_95 = arith.constant 0 : index
      %c0_96 = arith.constant 0 : index
      %130 = vector.load %arg14[%c2_94, %c0_95, %c0_96] : memref<4x16x16xbf16, #tpu.memory_space<vmem>>, vector<1x16x16xbf16>
      %131 = vector.shape_cast %130 : vector<1x16x16xbf16> to vector<16x16xbf16>
      %132 = vector.shape_cast %129 : vector<16x16xbf16> to vector<1x16x16xbf16>
      tpu.vector_store %arg14[%c2_94, %c0_95, %c0_96], %132 {strides = array<i32>} : memref<4x16x16xbf16, #tpu.memory_space<vmem>>, vector<1x16x16xbf16>,
      %133 = vector.extract_strided_slice %108 {offsets = [0, 48], sizes = [16, 16], strides = [1, 1]} : vector<16x128xbf16> to vector<16x16xbf16>
      %c3_97 = arith.constant 3 : index
      %c0_98 = arith.constant 0 : index
      %c0_99 = arith.constant 0 : index
      %134 = vector.load %arg13[%c3_97, %c0_98, %c0_99] : memref<4x16x16xbf16, #tpu.memory_space<vmem>>, vector<1x16x16xbf16>
      %135 = vector.shape_cast %134 : vector<1x16x16xbf16> to vector<16x16xbf16>
      %136 = vector.shape_cast %133 : vector<16x16xbf16> to vector<1x16x16xbf16>
      tpu.vector_store %arg13[%c3_97, %c0_98, %c0_99], %136 {strides = array<i32>} : memref<4x16x16xbf16, #tpu.memory_space<vmem>>, vector<1x16x16xbf16>,
      %137 = vector.extract_strided_slice %108 {offsets = [0, 112], sizes = [16, 16], strides = [1, 1]} : vector<16x128xbf16> to vector<16x16xbf16>
      %c3_100 = arith.constant 3 : index
      %c0_101 = arith.constant 0 : index
      %c0_102 = arith.constant 0 : index
      %138 = vector.load %arg14[%c3_100, %c0_101, %c0_102] : memref<4x16x16xbf16, #tpu.memory_space<vmem>>, vector<1x16x16xbf16>
      %139 = vector.shape_cast %138 : vector<1x16x16xbf16> to vector<16x16xbf16>
      %140 = vector.shape_cast %137 : vector<16x16xbf16> to vector<1x16x16xbf16>
      tpu.vector_store %arg14[%c3_100, %c0_101, %c0_102], %140 {strides = array<i32>} : memref<4x16x16xbf16, #tpu.memory_space<vmem>>, vector<1x16x16xbf16>,
    } else {
    }
    %c16_i32 = arith.constant 16 : i32
    %3 = arith.muli %arg1, %c16_i32 : i32
    %4 = tpu.assume_multiple %3, 16 : i32
    %c0 = arith.constant 0 : index
    %5 = arith.index_cast %4 : i32 to index
    %c0_1 = arith.constant 0 : index
    %6 = vector.load %arg2[%c0, %5, %c0_1] : memref<1x16x64xf32, #tpu.memory_space<vmem>>, vector<1x16x64xf32>
    %7 = vector.shape_cast %6 : vector<1x16x64xf32> to vector<16x64xf32>
    %8 = arith.index_cast %4 : i32 to index
    %c0_2 = arith.constant 0 : index
    %9 = vector.load %arg12[%8, %c0_2] : memref<16x64xbf16, #tpu.memory_space<vmem>>, vector<16x64xbf16>
    %c0_3 = arith.constant 0 : index
    %c0_4 = arith.constant 0 : index
    %10 = vector.load %arg5[%c0_3, %c0_4] : memref<64x64xbf16, #tpu.memory_space<vmem>>, vector<64x64xbf16>
    %cst = arith.constant dense<0.000000e+00> : vector<16x64xf32>
    %11 = tpu.matmul %9, %10, %cst {dimension_numbers = #tpu.dot_dimension_numbers<[1], [0], [0], [1], [0, 0, 1, 1], [], []>} : vector<16x64xbf16>, vector<64x64xbf16>, vector<16x64xf32> -> vector<16x64xf32>
    %c0_5 = arith.constant 0 : index
    %c0_6 = arith.constant 0 : index
    %12 = vector.load %arg6[%c0_5, %c0_6] : memref<1x64xf32, #tpu.memory_space<vmem>>, vector<1x64xf32>
    %13 = vector.broadcast %12 : vector<1x64xf32> to vector<16x64xf32>
    %14 = arith.addf %11, %13 : vector<16x64xf32>
    %15 = arith.truncf %14 : vector<16x64xf32> to vector<16x64xbf16>
    %16 = vector.extract_strided_slice %15 {offsets = [0, 0], sizes = [16, 16], strides = [1, 1]} : vector<16x64xbf16> to vector<16x16xbf16>
    %c0_7 = arith.constant 0 : index
    %c0_8 = arith.constant 0 : index
    %c0_9 = arith.constant 0 : index
    %17 = vector.load %arg15[%c0_7, %c0_8, %c0_9] : memref<4x16x16xbf16, #tpu.memory_space<vmem>>, vector<1x16x16xbf16>
    %18 = vector.shape_cast %17 : vector<1x16x16xbf16> to vector<16x16xbf16>
    %19 = vector.shape_cast %16 : vector<16x16xbf16> to vector<1x16x16xbf16>
    tpu.vector_store %arg15[%c0_7, %c0_8, %c0_9], %19 {strides = array<i32>} : memref<4x16x16xbf16, #tpu.memory_space<vmem>>, vector<1x16x16xbf16>,
    %20 = vector.extract_strided_slice %15 {offsets = [0, 16], sizes = [16, 16], strides = [1, 1]} : vector<16x64xbf16> to vector<16x16xbf16>
    %c1 = arith.constant 1 : index
    %c0_10 = arith.constant 0 : index
    %c0_11 = arith.constant 0 : index
    %21 = vector.load %arg15[%c1, %c0_10, %c0_11] : memref<4x16x16xbf16, #tpu.memory_space<vmem>>, vector<1x16x16xbf16>
    %22 = vector.shape_cast %21 : vector<1x16x16xbf16> to vector<16x16xbf16>
    %23 = vector.shape_cast %20 : vector<16x16xbf16> to vector<1x16x16xbf16>
    tpu.vector_store %arg15[%c1, %c0_10, %c0_11], %23 {strides = array<i32>} : memref<4x16x16xbf16, #tpu.memory_space<vmem>>, vector<1x16x16xbf16>,
    %24 = vector.extract_strided_slice %15 {offsets = [0, 32], sizes = [16, 16], strides = [1, 1]} : vector<16x64xbf16> to vector<16x16xbf16>
    %c2 = arith.constant 2 : index
    %c0_12 = arith.constant 0 : index
    %c0_13 = arith.constant 0 : index
    %25 = vector.load %arg15[%c2, %c0_12, %c0_13] : memref<4x16x16xbf16, #tpu.memory_space<vmem>>, vector<1x16x16xbf16>
    %26 = vector.shape_cast %25 : vector<1x16x16xbf16> to vector<16x16xbf16>
    %27 = vector.shape_cast %24 : vector<16x16xbf16> to vector<1x16x16xbf16>
    tpu.vector_store %arg15[%c2, %c0_12, %c0_13], %27 {strides = array<i32>} : memref<4x16x16xbf16, #tpu.memory_space<vmem>>, vector<1x16x16xbf16>,
    %28 = vector.extract_strided_slice %15 {offsets = [0, 48], sizes = [16, 16], strides = [1, 1]} : vector<16x64xbf16> to vector<16x16xbf16>
    %c3 = arith.constant 3 : index
    %c0_14 = arith.constant 0 : index
    %c0_15 = arith.constant 0 : index
    %29 = vector.load %arg15[%c3, %c0_14, %c0_15] : memref<4x16x16xbf16, #tpu.memory_space<vmem>>, vector<1x16x16xbf16>
    %30 = vector.shape_cast %29 : vector<1x16x16xbf16> to vector<16x16xbf16>
    %31 = vector.shape_cast %28 : vector<16x16xbf16> to vector<1x16x16xbf16>
    tpu.vector_store %arg15[%c3, %c0_14, %c0_15], %31 {strides = array<i32>} : memref<4x16x16xbf16, #tpu.memory_space<vmem>>, vector<1x16x16xbf16>,
    %c0_16 = arith.constant 0 : index
    %c0_17 = arith.constant 0 : index
    %c0_18 = arith.constant 0 : index
    %32 = vector.load %arg15[%c0_16, %c0_17, %c0_18] : memref<4x16x16xbf16, #tpu.memory_space<vmem>>, vector<4x16x16xbf16>
    %cst_19 = arith.constant -1.000000e+30 : f32
    %33 = vector.broadcast %cst_19 : f32 to vector<4x16x1xf32>
    %c0_20 = arith.constant 0 : index
    %c0_21 = arith.constant 0 : index
    %c0_22 = arith.constant 0 : index
    %34 = vector.load %arg16[%c0_20, %c0_21, %c0_22] : memref<4x16x1xf32, #tpu.memory_space<vmem>>, vector<4x16x1xf32>
    tpu.vector_store %arg16[%c0_20, %c0_21, %c0_22], %33 {strides = array<i32>} : memref<4x16x1xf32, #tpu.memory_space<vmem>>, vector<4x16x1xf32>,
    %cst_23 = arith.constant 0.000000e+00 : f32
    %35 = vector.broadcast %cst_23 : f32 to vector<4x16x1xf32>
    %c0_24 = arith.constant 0 : index
    %c0_25 = arith.constant 0 : index
    %c0_26 = arith.constant 0 : index
    %36 = vector.load %arg17[%c0_24, %c0_25, %c0_26] : memref<4x16x1xf32, #tpu.memory_space<vmem>>, vector<4x16x1xf32>
    tpu.vector_store %arg17[%c0_24, %c0_25, %c0_26], %35 {strides = array<i32>} : memref<4x16x1xf32, #tpu.memory_space<vmem>>, vector<4x16x1xf32>,
    %cst_27 = arith.constant 0.000000e+00 : f32
    %37 = vector.broadcast %cst_27 : f32 to vector<4x16x16xf32>
    %c0_28 = arith.constant 0 : index
    %c0_29 = arith.constant 0 : index
    %c0_30 = arith.constant 0 : index
    %38 = vector.load %arg18[%c0_28, %c0_29, %c0_30] : memref<4x16x16xf32, #tpu.memory_space<vmem>>, vector<4x16x16xf32>
    tpu.vector_store %arg18[%c0_28, %c0_29, %c0_30], %37 {strides = array<i32>} : memref<4x16x16xf32, #tpu.memory_space<vmem>>, vector<4x16x16xf32>,
    %39 = tpu.iota {dimensions = array<i32: 0>} : vector<16x16xi32>
    %40 = vector.broadcast %4 : i32 to vector<16x16xi32>
    %41 = arith.addi %40, %39 : vector<16x16xi32>
    %c1_i32 = arith.constant 1 : i32
    %42 = arith.addi %arg1, %c1_i32 : i32
    %c0_i32_31 = arith.constant 0 : i32
    %43 = arith.subi %42, %c0_i32_31 : i32
    %c1_i32_32 = arith.constant 1 : i32
    %c1_i32_33 = arith.constant 1 : i32
    %44 = arith.subi %c1_i32_32, %c1_i32_33 : i32
    %45 = arith.addi %43, %44 : i32
    %c1_i32_34 = arith.constant 1 : i32
    %46 = arith.divsi %45, %c1_i32_34 : i32
    %c1_i32_35 = arith.constant 1 : i32
    %c0_i32_36 = arith.constant 0 : i32
    %c0_i32_37 = arith.constant 0 : i32
    %47 = arith.subi %46, %c0_i32_37 : i32
    %48 = arith.addi %c0_i32_37, %47 : i32
    %c1_i32_38 = arith.constant 1 : i32
    scf.for %arg20 = %c0_i32_37 to %48 step %c1_i32_38  : i32 {
      %77 = arith.muli %arg20, %c1_i32_35 : i32
      %78 = arith.addi %c0_i32_36, %77 : i32
      %c16_i32_60 = arith.constant 16 : i32
      %79 = arith.muli %78, %c16_i32_60 : i32
      %80 = tpu.assume_multiple %79, 16 : i32
      %c0_61 = arith.constant 0 : index
      %81 = arith.index_cast %80 : i32 to index
      %c0_62 = arith.constant 0 : index
      %82 = vector.load %arg13[%c0_61, %81, %c0_62] : memref<4x16x16xbf16, #tpu.memory_space<vmem>>, vector<4x16x16xbf16>
      %c0_63 = arith.constant 0 : index
      %83 = arith.index_cast %80 : i32 to index
      %c0_64 = arith.constant 0 : index
      %84 = vector.load %arg14[%c0_63, %83, %c0_64] : memref<4x16x16xbf16, #tpu.memory_space<vmem>>, vector<4x16x16xbf16>
      "tpu.trace_start"() <{level = 10 : i32, message = "hqe,hke->hqk"}> : () -> ()
      %cst_65 = arith.constant dense<0.000000e+00> : vector<4x16x16xf32>
      %85 = tpu.matmul %32, %82, %cst_65 {dimension_numbers = #tpu.dot_dimension_numbers<[2], [2], [1], [1], [0, 0, 0, 1, 1, 1], [0], [0]>} : vector<4x16x16xbf16>, vector<4x16x16xbf16>, vector<4x16x16xf32> -> vector<4x16x16xf32>
      "tpu.trace_stop"() : () -> ()
      %cst_66 = arith.constant 2.500000e-01 : f32
      %86 = vector.broadcast %cst_66 : f32 to vector<4x16x16xf32>
      %87 = arith.mulf %85, %86 : vector<4x16x16xf32>
      %88 = tpu.iota {dimensions = array<i32: 1>} : vector<16x16xi32>
      %89 = vector.broadcast %80 : i32 to vector<16x16xi32>
      %90 = arith.addi %89, %88 : vector<16x16xi32>
      %91 = arith.cmpi sle, %90, %41 : vector<16x16xi32>
      %92 = vector.shape_cast %91 : vector<16x16xi1> to vector<1x16x16xi1>
      %cst_67 = arith.constant -1.000000e+30 : f32
      %93 = vector.shape_cast %92 : vector<1x16x16xi1> to vector<1x16x16xi1>
      %94 = vector.broadcast %93 : vector<1x16x16xi1> to vector<4x16x16xi1>
      %95 = vector.broadcast %cst_67 : f32 to vector<4x16x16xf32>
      %96 = arith.select %94, %87, %95 : vector<4x16x16xi1>, vector<4x16x16xf32>
      %c0_68 = arith.constant 0 : index
      %c0_69 = arith.constant 0 : index
      %c0_70 = arith.constant 0 : index
      %97 = vector.load %arg16[%c0_68, %c0_69, %c0_70] : memref<4x16x1xf32, #tpu.memory_space<vmem>>, vector<4x16x1xf32>
      %cst_71 = arith.constant dense<0xFF800000> : vector<4x16xf32>
      %98 = vector.multi_reduction <maximumf>, %96, %cst_71 [2] : vector<4x16x16xf32> to vector<4x16xf32>
      %99 = vector.shape_cast %98 : vector<4x16xf32> to vector<4x16x1xf32>
      %100 = arith.maximumf %97, %99 : vector<4x16x1xf32>
      %101 = arith.subf %97, %100 : vector<4x16x1xf32>
      %102 = math.exp %101 : vector<4x16x1xf32>
      %103 = vector.broadcast %100 : vector<4x16x1xf32> to vector<4x16x16xf32>
      %104 = arith.subf %96, %103 : vector<4x16x16xf32>
      %105 = math.exp %104 : vector<4x16x16xf32>
      %c0_72 = arith.constant 0 : index
      %c0_73 = arith.constant 0 : index
      %c0_74 = arith.constant 0 : index
      %106 = vector.load %arg17[%c0_72, %c0_73, %c0_74] : memref<4x16x1xf32, #tpu.memory_space<vmem>>, vector<4x16x1xf32>
      %107 = arith.mulf %102, %106 : vector<4x16x1xf32>
      %cst_75 = arith.constant dense<0.000000e+00> : vector<4x16xf32>
      %108 = vector.multi_reduction <add>, %105, %cst_75 [2] : vector<4x16x16xf32> to vector<4x16xf32>
      %109 = vector.shape_cast %108 : vector<4x16xf32> to vector<4x16x1xf32>
      %110 = arith.addf %107, %109 : vector<4x16x1xf32>
      %c0_76 = arith.constant 0 : index
      %c0_77 = arith.constant 0 : index
      %c0_78 = arith.constant 0 : index
      %111 = vector.load %arg17[%c0_76, %c0_77, %c0_78] : memref<4x16x1xf32, #tpu.memory_space<vmem>>, vector<4x16x1xf32>
      tpu.vector_store %arg17[%c0_76, %c0_77, %c0_78], %110 {strides = array<i32>} : memref<4x16x1xf32, #tpu.memory_space<vmem>>, vector<4x16x1xf32>,
      %c0_79 = arith.constant 0 : index
      %c0_80 = arith.constant 0 : index
      %c0_81 = arith.constant 0 : index
      %112 = vector.load %arg18[%c0_79, %c0_80, %c0_81] : memref<4x16x16xf32, #tpu.memory_space<vmem>>, vector<4x16x16xf32>
      %113 = vector.broadcast %102 : vector<4x16x1xf32> to vector<4x16x16xf32>
      %114 = arith.mulf %113, %112 : vector<4x16x16xf32>
      %115 = arith.truncf %105 : vector<4x16x16xf32> to vector<4x16x16xbf16>
      "tpu.trace_start"() <{level = 10 : i32, message = "hqk,hke->hqe"}> : () -> ()
      %cst_82 = arith.constant dense<0.000000e+00> : vector<4x16x16xf32>
      %116 = tpu.matmul %115, %84, %cst_82 {dimension_numbers = #tpu.dot_dimension_numbers<[2], [1], [1], [2], [0, 0, 0, 1, 1, 2], [0], [0]>} : vector<4x16x16xbf16>, vector<4x16x16xbf16>, vector<4x16x16xf32> -> vector<4x16x16xf32>
      "tpu.trace_stop"() : () -> ()
      %117 = arith.addf %114, %116 : vector<4x16x16xf32>
      %c0_83 = arith.constant 0 : index
      %c0_84 = arith.constant 0 : index
      %c0_85 = arith.constant 0 : index
      %118 = vector.load %arg18[%c0_83, %c0_84, %c0_85] : memref<4x16x16xf32, #tpu.memory_space<vmem>>, vector<4x16x16xf32>
      tpu.vector_store %arg18[%c0_83, %c0_84, %c0_85], %117 {strides = array<i32>} : memref<4x16x16xf32, #tpu.memory_space<vmem>>, vector<4x16x16xf32>,
      %c0_86 = arith.constant 0 : index
      %c0_87 = arith.constant 0 : index
      %c0_88 = arith.constant 0 : index
      %119 = vector.load %arg16[%c0_86, %c0_87, %c0_88] : memref<4x16x1xf32, #tpu.memory_space<vmem>>, vector<4x16x1xf32>
      tpu.vector_store %arg16[%c0_86, %c0_87, %c0_88], %100 {strides = array<i32>} : memref<4x16x1xf32, #tpu.memory_space<vmem>>, vector<4x16x1xf32>,
    }
    %c0_39 = arith.constant 0 : index
    %c0_40 = arith.constant 0 : index
    %c0_41 = arith.constant 0 : index
    %49 = vector.load %arg18[%c0_39, %c0_40, %c0_41] : memref<4x16x16xf32, #tpu.memory_space<vmem>>, vector<4x16x16xf32>
    %c0_42 = arith.constant 0 : index
    %c0_43 = arith.constant 0 : index
    %c0_44 = arith.constant 0 : index
    %50 = vector.load %arg17[%c0_42, %c0_43, %c0_44] : memref<4x16x1xf32, #tpu.memory_space<vmem>>, vector<4x16x1xf32>
    %51 = tpu.reciprocal %50 {approx = true} : vector<4x16x1xf32> -> vector<4x16x1xf32>
    %52 = vector.broadcast %51 : vector<4x16x1xf32> to vector<4x16x16xf32>
    %53 = arith.mulf %49, %52 : vector<4x16x16xf32>
    %54 = arith.truncf %53 : vector<4x16x16xf32> to vector<4x16x16xbf16>
    %55 = vector.extract_strided_slice %54 {offsets = [0, 0, 0], sizes = [1, 16, 16], strides = [1, 1, 1]} : vector<4x16x16xbf16> to vector<1x16x16xbf16>
    %56 = vector.shape_cast %55 : vector<1x16x16xbf16> to vector<16x16xbf16>
    %c0_45 = arith.constant 0 : index
    %c0_46 = arith.constant 0 : index
    %57 = vector.load %arg19[%c0_45, %c0_46] : memref<16x64xbf16, #tpu.memory_space<vmem>>, vector<16x16xbf16>
    tpu.vector_store %arg19[%c0_45, %c0_46], %56 {strides = array<i32>} : memref<16x64xbf16, #tpu.memory_space<vmem>>, vector<16x16xbf16>,
    %58 = vector.extract_strided_slice %54 {offsets = [1, 0, 0], sizes = [1, 16, 16], strides = [1, 1, 1]} : vector<4x16x16xbf16> to vector<1x16x16xbf16>
    %59 = vector.shape_cast %58 : vector<1x16x16xbf16> to vector<16x16xbf16>
    %c0_47 = arith.constant 0 : index
    %c16 = arith.constant 16 : index
    %60 = vector.load %arg19[%c0_47, %c16] : memref<16x64xbf16, #tpu.memory_space<vmem>>, vector<16x16xbf16>
    tpu.vector_store %arg19[%c0_47, %c16], %59 {strides = array<i32>} : memref<16x64xbf16, #tpu.memory_space<vmem>>, vector<16x16xbf16>,
    %61 = vector.extract_strided_slice %54 {offsets = [2, 0, 0], sizes = [1, 16, 16], strides = [1, 1, 1]} : vector<4x16x16xbf16> to vector<1x16x16xbf16>
    %62 = vector.shape_cast %61 : vector<1x16x16xbf16> to vector<16x16xbf16>
    %c0_48 = arith.constant 0 : index
    %c32 = arith.constant 32 : index
    %63 = vector.load %arg19[%c0_48, %c32] : memref<16x64xbf16, #tpu.memory_space<vmem>>, vector<16x16xbf16>
    tpu.vector_store %arg19[%c0_48, %c32], %62 {strides = array<i32>} : memref<16x64xbf16, #tpu.memory_space<vmem>>, vector<16x16xbf16>,
    %64 = vector.extract_strided_slice %54 {offsets = [3, 0, 0], sizes = [1, 16, 16], strides = [1, 1, 1]} : vector<4x16x16xbf16> to vector<1x16x16xbf16>
    %65 = vector.shape_cast %64 : vector<1x16x16xbf16> to vector<16x16xbf16>
    %c0_49 = arith.constant 0 : index
    %c48 = arith.constant 48 : index
    %66 = vector.load %arg19[%c0_49, %c48] : memref<16x64xbf16, #tpu.memory_space<vmem>>, vector<16x16xbf16>
    tpu.vector_store %arg19[%c0_49, %c48], %65 {strides = array<i32>} : memref<16x64xbf16, #tpu.memory_space<vmem>>, vector<16x16xbf16>,
    %c0_50 = arith.constant 0 : index
    %c0_51 = arith.constant 0 : index
    %67 = vector.load %arg19[%c0_50, %c0_51] : memref<16x64xbf16, #tpu.memory_space<vmem>>, vector<16x64xbf16>
    %c0_52 = arith.constant 0 : index
    %c0_53 = arith.constant 0 : index
    %68 = vector.load %arg9[%c0_52, %c0_53] : memref<64x64xbf16, #tpu.memory_space<vmem>>, vector<64x64xbf16>
    %cst_54 = arith.constant dense<0.000000e+00> : vector<16x64xf32>
    %69 = tpu.matmul %67, %68, %cst_54 {dimension_numbers = #tpu.dot_dimension_numbers<[1], [0], [0], [1], [0, 0, 1, 1], [], []>} : vector<16x64xbf16>, vector<64x64xbf16>, vector<16x64xf32> -> vector<16x64xf32>
    %70 = arith.addf %7, %69 : vector<16x64xf32>
    %c0_55 = arith.constant 0 : index
    %c0_56 = arith.constant 0 : index
    %71 = vector.load %arg10[%c0_55, %c0_56] : memref<1x64xf32, #tpu.memory_space<vmem>>, vector<1x64xf32>
    %72 = vector.broadcast %71 : vector<1x64xf32> to vector<16x64xf32>
    %73 = arith.addf %70, %72 : vector<16x64xf32>
    %c0_57 = arith.constant 0 : index
    %c0_58 = arith.constant 0 : index
    %c0_59 = arith.constant 0 : index
    %74 = vector.load %arg11[%c0_57, %c0_58, %c0_59] : memref<1x16x64xf32, #tpu.memory_space<vmem>>, vector<1x16x64xf32>
    %75 = vector.shape_cast %74 : vector<1x16x64xf32> to vector<16x64xf32>
    %76 = vector.shape_cast %73 : vector<16x64xf32> to vector<1x16x64xf32>
    tpu.vector_store %arg11[%c0_57, %c0_58, %c0_59], %76 {strides = array<i32>} : memref<1x16x64xf32, #tpu.memory_space<vmem>>, vector<1x16x64xf32>,
    return
  }
  func.func @transform_0(%arg0: i32, %arg1: i32) -> (i32, i32, i32) {
    %c0_i32 = arith.constant 0 : i32
    %c0_i32_0 = arith.constant 0 : i32
    %c0_i32_1 = arith.constant 0 : i32
    return %arg0, %c0_i32, %c0_i32_0 : i32, i32, i32
  }
  func.func @transform_1(%arg0: i32, %arg1: i32) -> (i32, i32) {
    %c0_i32 = arith.constant 0 : i32
    %c0_i32_0 = arith.constant 0 : i32
    %c0_i32_1 = arith.constant 0 : i32
    return %c0_i32, %c0_i32_0 : i32, i32
  }
  func.func @transform_2(%arg0: i32, %arg1: i32) -> (i32, i32) {
    %c0_i32 = arith.constant 0 : i32
    %c0_i32_0 = arith.constant 0 : i32
    %c0_i32_1 = arith.constant 0 : i32
    return %c0_i32, %c0_i32_0 : i32, i32
  }
  func.func @transform_3(%arg0: i32, %arg1: i32) -> (i32, i32) {
    %c0_i32 = arith.constant 0 : i32
    %c0_i32_0 = arith.constant 0 : i32
    %c0_i32_1 = arith.constant 0 : i32
    return %c0_i32, %c0_i32_0 : i32, i32
  }
  func.func @transform_4(%arg0: i32, %arg1: i32) -> (i32, i32) {
    %c0_i32 = arith.constant 0 : i32
    %c0_i32_0 = arith.constant 0 : i32
    %c0_i32_1 = arith.constant 0 : i32
    return %c0_i32, %c0_i32_0 : i32, i32
  }
  func.func @transform_5(%arg0: i32, %arg1: i32) -> (i32, i32) {
    %c0_i32 = arith.constant 0 : i32
    %c0_i32_0 = arith.constant 0 : i32
    %c0_i32_1 = arith.constant 0 : i32
    return %c0_i32, %c0_i32_0 : i32, i32
  }
  func.func @transform_6(%arg0: i32, %arg1: i32) -> (i32, i32) {
    %c0_i32 = arith.constant 0 : i32
    %c0_i32_0 = arith.constant 0 : i32
    %c0_i32_1 = arith.constant 0 : i32
    return %c0_i32, %c0_i32_0 : i32, i32
  }
  func.func @transform_7(%arg0: i32, %arg1: i32) -> (i32, i32) {
    %c0_i32 = arith.constant 0 : i32
    %c0_i32_0 = arith.constant 0 : i32
    %c0_i32_1 = arith.constant 0 : i32
    return %c0_i32, %c0_i32_0 : i32, i32
  }
  func.func @transform_8(%arg0: i32, %arg1: i32) -> (i32, i32) {
    %c0_i32 = arith.constant 0 : i32
    %c0_i32_0 = arith.constant 0 : i32
    %c0_i32_1 = arith.constant 0 : i32
    return %c0_i32, %c0_i32_0 : i32, i32
  }
  func.func @transform_9(%arg0: i32, %arg1: i32) -> (i32, i32, i32) {
    %c0_i32 = arith.constant 0 : i32
    %c0_i32_0 = arith.constant 0 : i32
    return %arg0, %arg1, %c0_i32 : i32, i32, i32
  }
}

</mosaic_0001>

<llo_original>
// kernel: _lambda_.9
$region0: #{_lambda_.9}
  #allocation0 [shape = 'u32[]', space=smem, size = 0x4, offset = 0x4, fixed_abs, tag = 'smem constant byte address 0x4 - core index']
  #allocation1 [shape = 'u32[144,128]{1,0:T(1,128)}', space=vmem, size = 0x12000, scoped, tag = 'internal scratch']
  #allocation2 [shape = 'bf16[16,64]{1,0:T(8,128)(2,1)}', space=vmem, size = 0x1000, scoped, tag = 'scratch operand']
  %s0 = inlined_call_operand.vmem [shape: f32[2,16,64], index: 0, kind: input, shape index: {}]
  %s1 = inlined_call_operand.vmem [shape: f32[1,64], index: 1, kind: input, shape index: {}]
  %s2 = inlined_call_operand.vmem [shape: f32[1,64], index: 2, kind: input, shape index: {}]
  %s3 = inlined_call_operand.vmem [shape: bf16[64,128], index: 3, kind: input, shape index: {}]
  %s4 = inlined_call_operand.hbm [shape: f32[2,16,128], index: 4, kind: output, shape index: {}]
  %s5 = sld [smem:[#allocation0]]
  $region53: #{_lambda_.9} parent=0
    _
  %s7 = ssub.s32 1, %s5
  %s8 = scalar_select 0, %s7, %s5
  $region1: #{_lambda_.9} parent=0
    #allocation3 [shape = 'u8[16384]{0}', space=vmem, size = 0x4000, scoped, tag = 'output window, operand 0']
    #allocation4 [shape = 's32[2]{0}', space=sflag, size = 0x8, scoped, tag = 'scoped memory for _lambda_.9']
    %9 = vsyncpa [#allocation4], 0
    %s10 = scalar_lea.sflag [#allocation4], 1
    %11 = vsyncpa %s10, 0
    loop: start=0, step=1, limit=4
    $region2: #{_lambda_.9} parent=1 // loop_pre_header
      _
    $region3: #{_lambda_.9} parent=1 // loop_header
      %s13 = sphi 0, %s17
      %p14 = scmp.ge.s32.totalorder %s13, 4
      %s20 = sphi 0, %s32
      %s21 = sphi 0, %s28
      %s22 = sphi 0, %s20
      %s23 = sphi 0, %s21
      %s24 = sphi 0, %s22
      %s25 = sphi 0, %s23
      %s35 = sphi 0, %s37
      %s38 = sphi 0, %s35
      %s39 = sphi 0, %s38
      %s55 = sphi 0, %s39
      %s59 = sphi 0, %s59
      %s61 = sphi 0, %s59
      %s62 = sphi 0, %s61
      %s76 = sphi 0, %s62
      %s80 = sphi 0, %s80
      %s82 = sphi 0, %s80
      %s83 = sphi 0, %s82
      %s97 = sphi 0, %s83
      %s103 = sphi 0, %s105
      %s106 = sphi 0, %s103
      %s107 = sphi 0, %s106
      %s123 = sphi 0, %s107
      %s131 = sphi 0, %s133
      %s134 = sphi 0, %s131
      %s135 = sphi 0, %s134
      %s151 = sphi 0, %s135
    $region4: #{_lambda_.9} parent=1 // loop_header_branch
      %16 = sbr.rel (%p14) target = $region8
    $region5: #{_lambda_.9} parent=1 // loop_body
      %s18 = ssub.s32 %s13, 1
      %s19 = ssub.s32 %s13, 2
      %s26 = sadd.s32 1, %s21
      %p27 = scmp.ge.s32.totalorder %s26, 1
      %s28 = scalar_select %p27, 0, %s26
      %s29 = sadd.s32 1, %s20
      %s30 = scalar_select %p27, %s29, %s20
      %p31 = scmp.ge.s32.totalorder %s30, 2
      %s32 = scalar_select %p31, 0, %s30
      %s33 = ssub.s32 %s20, %s32
      %p34 = scmp.eq.s32.totalorder %s33, 0
      %s36 = sadd.s32 %s35, 1
      %s37 = scalar_select %p34, %s35, %s36
      %p40 = pneg %p34
      %p41 = scmp.eq.s32.totalorder %s13, 1
      %p42 = por %p40, %p41
      %p43 = scmp.ne.s32.totalorder %s35, %s38
      %p44 = scmp.eq.s32.totalorder %s13, 0
      %p45 = por %p43, %p44
      %p46 = scmp.ne.s32.totalorder %s35, %s38
      %p47 = scmp.eq.s32.totalorder %s18, 1
      %p48 = por %p46, %p47
      %p49 = scmp.ne.s32.totalorder %s38, %s39
      %p50 = scmp.eq.s32.totalorder %s18, 0
      %p51 = por %p49, %p50
      %p52 = scmp.ne.s32.totalorder %s38, %s39
      %p53 = scmp.eq.s32.totalorder %s19, 1
      %p54 = por %p52, %p53
      %p56 = scmp.ne.s32.totalorder %s39, %s55
      %p57 = scmp.eq.s32.totalorder %s19, 0
      %p58 = por %p56, %p57
      %s60 = sadd.s32 %s59, 1
      %p63 = scmp.eq.s32.totalorder %s13, 1
      %p64 = scmp.ne.s32.totalorder %s59, %s61
      %p65 = scmp.eq.s32.totalorder %s13, 0
      %p66 = por %p64, %p65
      %p67 = scmp.ne.s32.totalorder %s59, %s61
      %p68 = scmp.eq.s32.totalorder %s18, 1
      %p69 = por %p67, %p68
      %p70 = scmp.ne.s32.totalorder %s61, %s62
      %p71 = scmp.eq.s32.totalorder %s18, 0
      %p72 = por %p70, %p71
      %p73 = scmp.ne.s32.totalorder %s61, %s62
      %p74 = scmp.eq.s32.totalorder %s19, 1
      %p75 = por %p73, %p74
      %p77 = scmp.ne.s32.totalorder %s62, %s76
      %p78 = scmp.eq.s32.totalorder %s19, 0
      %p79 = por %p77, %p78
      %s81 = sadd.s32 %s80, 1
      %p84 = scmp.eq.s32.totalorder %s13, 1
      %p85 = scmp.ne.s32.totalorder %s80, %s82
      %p86 = scmp.eq.s32.totalorder %s13, 0
      %p87 = por %p85, %p86
      %p88 = scmp.ne.s32.totalorder %s80, %s82
      %p89 = scmp.eq.s32.totalorder %s18, 1
      %p90 = por %p88, %p89
      %p91 = scmp.ne.s32.totalorder %s82, %s83
      %p92 = scmp.eq.s32.totalorder %s18, 0
      %p93 = por %p91, %p92
      %p94 = scmp.ne.s32.totalorder %s82, %s83
      %p95 = scmp.eq.s32.totalorder %s19, 1
      %p96 = por %p94, %p95
      %p98 = scmp.ne.s32.totalorder %s83, %s97
      %p99 = scmp.eq.s32.totalorder %s19, 0
      %p100 = por %p98, %p99
      %s101 = ssub.s32 %s21, %s28
      %p102 = scmp.eq.s32.totalorder %s101, 0
      %s104 = sadd.s32 %s103, 1
      %s105 = scalar_select %p102, %s103, %s104
      %p108 = pneg %p102
      %p109 = scmp.eq.s32.totalorder %s13, 1
      %p110 = por %p108, %p109
      %p111 = scmp.ne.s32.totalorder %s103, %s106
      %p112 = scmp.eq.s32.totalorder %s13, 0
      %p113 = por %p111, %p112
      %p114 = scmp.ne.s32.totalorder %s103, %s106
      %p115 = scmp.eq.s32.totalorder %s18, 1
      %p116 = por %p114, %p115
      %p117 = scmp.ne.s32.totalorder %s106, %s107
      %p118 = scmp.eq.s32.totalorder %s18, 0
      %p119 = por %p117, %p118
      %p120 = scmp.ne.s32.totalorder %s106, %s107
      %p121 = scmp.eq.s32.totalorder %s19, 1
      %p122 = por %p120, %p121
      %p124 = scmp.ne.s32.totalorder %s107, %s123
      %p125 = scmp.eq.s32.totalorder %s19, 0
      %p126 = por %p124, %p125
      %s127 = ssub.s32 %s20, %s32
      %s128 = ssub.s32 %s21, %s28
      %s129 = sor.u32 %s127, %s128
      %p130 = scmp.eq.s32.totalorder %s129, 0
      %s132 = sadd.s32 %s131, 1
      %s133 = scalar_select %p130, %s131, %s132
      %p136 = pneg %p130
      %p137 = scmp.eq.s32.totalorder %s13, 1
      %p138 = por %p136, %p137
      %p139 = scmp.ne.s32.totalorder %s131, %s134
      %p140 = scmp.eq.s32.totalorder %s13, 0
      %p141 = por %p139, %p140
      %p142 = scmp.ne.s32.totalorder %s131, %s134
      %p143 = scmp.eq.s32.totalorder %s18, 1
      %p144 = por %p142, %p143
      %p145 = scmp.ne.s32.totalorder %s134, %s135
      %p146 = scmp.eq.s32.totalorder %s18, 0
      %p147 = por %p145, %p146
      %p148 = scmp.ne.s32.totalorder %s134, %s135
      %p149 = scmp.eq.s32.totalorder %s19, 1
      %p150 = por %p148, %p149
      %p152 = scmp.ne.s32.totalorder %s135, %s151
      %p153 = scmp.eq.s32.totalorder %s19, 0
      %p154 = por %p152, %p153
      %p155 = scmp.le.s32.totalorder 1, %s13
      %p156 = scmp.lt.s32.totalorder %s13, 3
      %p157 = pnand %p155, %p156
      %p158 = pneg %p157
      // Predicated region
      $region9: #{_lambda_.9} parent=5 // pred_check
        _
      $region10: #{_lambda_.9} parent=5 // pred_check_branch
        %160 = sbr.rel (%p157) target = $region12
      $region11: #{_lambda_.9} parent=5 // pred_region
        %s161 = ssub.s32 %s13, 1
        // Predicated region
        $region13: #{_lambda_.9} parent=11 // pred_check
          %p162 = pneg %p72
        $region14: #{_lambda_.9} parent=11 // pred_check_branch
          %164 = sbr.rel (%p162) target = $region16
        $region15: #{_lambda_.9} parent=11 // pred_region
          _
        $region16: #{_lambda_.9} parent=11 // pred_fallthru
          _
        // Predicated region
        $region17: #{_lambda_.9} parent=11 // pred_check
          %p165 = pneg %p93
        $region18: #{_lambda_.9} parent=11 // pred_check_branch
          %167 = sbr.rel (%p165) target = $region20
        $region19: #{_lambda_.9} parent=11 // pred_region
          _
        $region20: #{_lambda_.9} parent=11 // pred_fallthru
          _
        // Predicated region
        $region21: #{_lambda_.9} parent=11 // pred_check
          %p168 = pneg %p119
        $region22: #{_lambda_.9} parent=11 // pred_check_branch
          %170 = sbr.rel (%p168) target = $region24
        $region23: #{_lambda_.9} parent=11 // pred_region
          %p171 = scmp.lt.s32.totalorder %s23, 0
          %s172 = scalar_select %p171, %s23, 0
          %s173 = smul.addr %s172, 4
          %s174 = scalar_lea.vmem %s3, %s173
        $region24: #{_lambda_.9} parent=11 // pred_fallthru
          _
      $region12: #{_lambda_.9} parent=5 // pred_fallthru
        _
      %p175 = scmp.lt.s32.totalorder %s13, 2
      // Predicated region
      $region25: #{_lambda_.9} parent=5 // pred_check
        %p176 = pneg %p175
      $region26: #{_lambda_.9} parent=5 // pred_check_branch
        %178 = sbr.rel (%p176) target = $region28
      $region27: #{_lambda_.9} parent=5 // pred_region
        // Predicated region
        $region29: #{_lambda_.9} parent=27 // pred_check
          %p179 = pneg %p45
        $region30: #{_lambda_.9} parent=27 // pred_check_branch
          %181 = sbr.rel (%p179) target = $region32
        $region31: #{_lambda_.9} parent=27 // pred_region
          %p182 = scmp.lt.s32.totalorder %s20, 1
          %s183 = scalar_select %p182, %s20, 1
          %s184 = smul.addr %s183, 2
          %s185 = smul.addr %s184, 8
          %s186 = scalar_lea.vmem %s0, %s185
        $region32: #{_lambda_.9} parent=27 // pred_fallthru
          _
      $region28: #{_lambda_.9} parent=5 // pred_fallthru
        _
      %p187 = scmp.le.s32.totalorder 1, %s13
      %p188 = scmp.lt.s32.totalorder %s13, 3
      %p189 = pnand %p187, %p188
      %p190 = pneg %p189
      // Predicated region
      $region33: #{_lambda_.9} parent=5 // pred_check
        _
      $region34: #{_lambda_.9} parent=5 // pred_check_branch
        %192 = sbr.rel (%p189) target = $region36
      $region35: #{_lambda_.9} parent=5 // pred_region
        %s193 = ssub.s32 %s13, 1
        %p194 = scmp.lt.s32.totalorder %s22, 1
        %s195 = scalar_select %p194, %s22, 1
        %s196 = smul.addr %s195, 2
        %s197 = smul.addr %s196, 8
        %s198 = scalar_lea.vmem %s0, %s197
        %p199 = pneg %p51
        %p200 = pneg %p48
        %p201 = pneg %p72
        %p202 = pneg %p69
        %p203 = pneg %p93
        %p204 = pneg %p90
        %p205 = scmp.lt.s32.totalorder %s23, 0
        %s206 = scalar_select %p205, %s23, 0
        %s207 = smul.addr %s206, 4
        %s208 = scalar_lea.vmem %s3, %s207
        %p209 = pneg %p119
        %p210 = pneg %p116
        %p211 = pneg %p147
        %p212 = pneg %p144
        %s213 = sand.u32 %s134, 1
        %s214 = scalar_lea.sflag [#allocation4], %s213
        %s215 = sand.u32 %s134, 1
        %s216 = smul.addr %s215, 16
        %s217 = scalar_lea.vmem [#allocation3], %s216
        %p218 = scmp.lt.s32.totalorder %s22, 1
        %s219 = scalar_select %p218, %s22, 1
        %s220 = smul.addr %s219, 2
        %s221 = smul.addr %s220, 8
        %s222 = scalar_lea.vmem %s0, %s221
        %p223 = scmp.lt.s32.totalorder %s23, 0
        %s224 = scalar_select %p223, %s23, 0
        %s225 = smul.addr %s224, 4
        %s226 = scalar_lea.vmem %s3, %s225
        %p228 = scmp.eq.s32.totalorder %s23, 0
        // Predicated region
        $region37: #{_lambda_.9} parent=35 // pred_check
          %p229 = pneg %p228
        $region38: #{_lambda_.9} parent=35 // pred_check_branch
          %231 = sbr.rel (%p229) target = $region40
        $region39: #{_lambda_.9} parent=35 // pred_region
          %v232 = vld [vmem:[%s222] sm:$0xff]
          %v233 = vld [vmem:[%s222 + $0x8] sm:$0xff]
          %v234 = vld [vmem:[%s1] sm:$0x1]
          %v235 = vld [vmem:[%s2] sm:$0x1]
          %vm236 = vcmask 523264
          %v237 = vsel %vm236, %v232, 0.0
          %238 = vadd.xlane.f32.xlu0 %v237
          %v239 = vpop.xlane.xlu0 %238
          %v240 = vsel %vm236, %v233, 0.0
          %241 = vadd.xlane.f32.xlu0 %v240
          %v242 = vpop.xlane.xlu0 %241
          %v243 = vrcp.pop 64.0
          %v244 = vmul.f32 %v239, %v243
          %v245 = vmul.f32 %v242, %v243
          %v246 = vsub.f32 %v232, %v244
          %v247 = vsub.f32 %v233, %v245
          %v248 = vmul.f32 %v246, %v246
          %v249 = vmul.f32 %v247, %v247
          %v250 = vsel %vm236, %v248, 0.0
          %251 = vadd.xlane.f32.xlu0 %v250
          %v252 = vpop.xlane.xlu0 %251
          %v253 = vsel %vm236, %v249, 0.0
          %254 = vadd.xlane.f32.xlu0 %v253
          %v255 = vpop.xlane.xlu0 %254
          %v256 = vmul.f32 %v252, %v243
          %v257 = vmul.f32 %v255, %v243
          %v258 = vadd.f32 %v256, 1e-05
          %v259 = vadd.f32 %v257, 1e-05
          %v260 = vrsqrt.pop %v258
          %v261 = vrsqrt.pop %v259
          %v262 = vmul.f32 %v246, %v260
          %v263 = vmul.f32 %v247, %v261
          %v265 = vlaneseq
          %v266 = vshrl.u32 %v265, 7
          %v267 = vsub.s32 0, %v266
          %v268 = vrot.slane %v234, %v267
          %v270 = vmul.f32 %v262, %v268
          %v271 = vmul.f32 %v263, %v268
          %v273 = vlaneseq
          %v274 = vshrl.u32 %v273, 7
          %v275 = vsub.s32 0, %v274
          %v276 = vrot.slane %v235, %v275
          %v278 = vadd.f32 %v270, %v276
          %v279 = vadd.f32 %v271, %v276
          %v280 = vpack.c.bf16 %v279, %v278
          %v282 = vunpack.c.l.b16 %v280
          %v283 = vunpack.c.h.b16 %v280
          %v284 = vpack.c.b16 %v282, %v282
          %v285 = vpack.c.b16 %v283, %v283
          %vm288 = vcmask 519168
          %289 = vst.msk [vmem:[#allocation2] sm:$0xf] %vm288, %v284
          %290 = vst.msk [vmem:[#allocation2 + $0x4] sm:$0xf] %vm288, %v285
        $region40: #{_lambda_.9} parent=35 // pred_fallthru
          _
        %v291 = vld [vmem:[#allocation2] sm:$0xf]
        %v292 = vld [vmem:[#allocation2 + $0x4] sm:$0xf]
        %v293 = vld [vmem:[%s226] sm:$0xf]
        %v294 = vld [vmem:[%s226 + $0x4] sm:$0xf]
        %v295 = vld [vmem:[%s226 + $0x8] sm:$0xf]
        %v296 = vld [vmem:[%s226 + $0xc] sm:$0xf]
        %v297 = vld [vmem:[%s226 + $0x10] sm:$0xf]
        %v298 = vld [vmem:[%s226 + $0x14] sm:$0xf]
        %v299 = vld [vmem:[%s226 + $0x18] sm:$0xf]
        %v300 = vld [vmem:[%s226 + $0x1c] sm:$0xf]
        %v303 = vunpack.c.l.b16 %v291
        %v304 = vunpack.c.l.b16 %v292
        %v305 = vpack.c.b16 %v304, %v303
        %v314 = vunpack.c.l.b16 %v293
        %v315 = vunpack.c.l.b16 %v294
        %v316 = vunpack.c.l.b16 %v295
        %v317 = vunpack.c.l.b16 %v296
        %v318 = vunpack.c.l.b16 %v297
        %v319 = vunpack.c.l.b16 %v298
        %v320 = vunpack.c.l.b16 %v299
        %v321 = vunpack.c.l.b16 %v300
        %v322 = vpack.c.b16 %v315, %v314
        %v323 = vpack.c.b16 %v317, %v316
        %v324 = vpack.c.b16 %v319, %v318
        %v325 = vpack.c.b16 %v321, %v320
        %vm330 = vcmask 523264
        %v332 = vsel %vm330, %v305, 0
        %334 = vmatprep.subr.bf16.mxu0 0
        %335 = vmatpush1.bf16.msra.mxu0 0
        %336 = vmatprep.subr.bf16.mxu0 0
        %337 = vmatpush1.bf16.msra.mxu0 0
        %338 = vmatprep.subr.bf16.mxu0 0
        %339 = vmatpush1.bf16.msra.mxu0 0
        %340 = vmatprep.subr.bf16.mxu0 0
        %341 = vmatpush1.bf16.msra.mxu0 0
        %342 = vmatprep.subr.bf16.mxu0 0
        %343 = vmatpush1.bf16.msra.mxu0 %v325
        %344 = vmatprep.subr.bf16.mxu0 0
        %345 = vmatpush1.bf16.msra.mxu0 %v324
        %346 = vmatprep.subr.bf16.mxu0 0
        %347 = vmatpush1.bf16.msra.mxu0 %v323
        %348 = vmatprep.subr.bf16.mxu0 0
        %349 = vmatpush1.bf16.msra.mxu0 %v322
        %350 = vmatprep.subr.bf16.mxu0 0
        %351 = vmatpush2.bf16.msra.mxu0 0
        %352 = vmatprep.subr.bf16.mxu0 0
        %353 = vmatpush2.bf16.msra.mxu0 0
        %354 = vmatprep.subr.bf16.mxu0 0
        %355 = vmatpush2.bf16.msra.mxu0 0
        %356 = vmatprep.subr.bf16.mxu0 0
        %357 = vmatpush2.bf16.msra.mxu0 0
        %358 = vmatprep.subr.bf16.mxu0 0
        %359 = vmatpush2.bf16.msra.mxu0 0
        %360 = vmatprep.subr.bf16.mxu0 0
        %361 = vmatpush2.bf16.msra.mxu0 0
        %362 = vmatprep.subr.bf16.mxu0 0
        %363 = vmatpush2.bf16.msra.mxu0 0
        %364 = vmatprep.subr.bf16.mxu0 0
        %365 = vmatpush2.bf16.msra.mxu0 0
        %366 = vmatprep.mubr.bf16.mxu0 0
        %367 = vmatmul.mubr.bf16.gmra.mxu0 %v332
        %v368 = vpop.f32.mrf.mxu0
        %v369 = vadd.f32 0.0, %v368
        %v370 = vpop.f32.mrf.mxu0
        %v371 = vpop.f32.mrf.mxu0
        %v372 = vadd.f32 0.0, %v371
        %v373 = vpop.f32.mrf.mxu0
        %374 = vdwg.mxu0
        %375 = vst [vmem:[%s217] sm:$0xff] %v369
        %376 = vst [vmem:[%s217 + $0x8] sm:$0xff] %v372
        %s377 = sand.u32 %s134, 1
        %s378 = scalar_lea.sflag [#allocation4], %s377
        %s379 = sand.u32 %s134, 1
        %s380 = smul.addr %s379, 16
        %s381 = scalar_lea.vmem [#allocation3], %s380
        // Predicated region
        $region41: #{_lambda_.9} parent=35 // pred_check
          %p382 = pneg %p144
        $region42: #{_lambda_.9} parent=35 // pred_check_branch
          %384 = sbr.rel (%p382) target = $region44
        $region43: #{_lambda_.9} parent=35 // pred_region
          %s386 = ssub.s32 256, 256
          %387 = vsyncadd %s378, %s386
          %s388 = smul.addr %s22, 2
          %s389 = sadd.s32 %s23, %s388
          %s390 = smul.addr %s389, 128
          %s391 = scalar_lea.hbm %s4, %s390
          %s392 = sshll.u32 %s381, 4
          %s393 = int_to_ptr.vmem [resolvable:$true] %s392
          %398 = dma.vmem_to_hbm [thread:$0]  %s393, 256, %s391, %s378, 128, 128, 8
        $region44: #{_lambda_.9} parent=35 // pred_fallthru
          _
      $region36: #{_lambda_.9} parent=5 // pred_fallthru
        _
      %p399 = scmp.le.s32.totalorder 2, %s13
      // Predicated region
      $region45: #{_lambda_.9} parent=5 // pred_check
        %p400 = pneg %p399
      $region46: #{_lambda_.9} parent=5 // pred_check_branch
        %402 = sbr.rel (%p400) target = $region48
      $region47: #{_lambda_.9} parent=5 // pred_region
        %s403 = ssub.s32 %s13, 2
        // Predicated region
        $region49: #{_lambda_.9} parent=47 // pred_check
          %p404 = pneg %p150
        $region50: #{_lambda_.9} parent=47 // pred_check_branch
          %406 = sbr.rel (%p404) target = $region52
        $region51: #{_lambda_.9} parent=47 // pred_region
          %s407 = sand.u32 %s135, 1
          %s408 = scalar_lea.sflag [#allocation4], %s407
          %s409 = sand.u32 %s135, 1
          %s410 = smul.addr %s409, 16
          %s411 = scalar_lea.vmem [#allocation3], %s410
          %412 = dma.done %s408, 256
        $region52: #{_lambda_.9} parent=47 // pred_fallthru
          _
      $region48: #{_lambda_.9} parent=5 // pred_fallthru
        _
    $region6: #{_lambda_.9} parent=1 // loop_footer
      %s17 = sadd.s32 1, %s13
    $region7: #{_lambda_.9} parent=1 // loop_footer_branch
      %12 = sbr.rel target = $region3
    $region8: #{_lambda_.9} parent=1 // loop_exit
      _
    %413 = vsyncpa [#allocation4], 1
    %s414 = scalar_lea.sflag [#allocation4], 1
    %415 = vsyncpa %s414, 1

// kernel: _lambda_.6
$region0: #{_lambda_.6}
  #allocation0 [shape = 'u32[]', space=smem, size = 0x4, offset = 0x4, fixed_abs, tag = 'smem constant byte address 0x4 - core index']
  #allocation1 [shape = 'u32[144,128]{1,0:T(1,128)}', space=vmem, size = 0x12000, scoped, tag = 'internal scratch']
  #allocation2 [shape = 'bf16[16,64]{1,0:T(8,128)(2,1)}', space=vmem, size = 0x1000, scoped, tag = 'scratch operand']
  #allocation3 [shape = 'f32[16,64]{1,0:T(8,128)}', space=vmem, size = 0x2000, scoped, tag = 'scratch operand']
  %s0 = inlined_call_operand.vmem [shape: f32[2,16,64], index: 0, kind: input, shape index: {}]
  %s1 = inlined_call_operand.vmem [shape: f32[1,64], index: 1, kind: input, shape index: {}]
  %s2 = inlined_call_operand.vmem [shape: f32[1,64], index: 2, kind: input, shape index: {}]
  %s3 = inlined_call_operand.vmem [shape: bf16[64,128], index: 3, kind: input, shape index: {}]
  %s4 = inlined_call_operand.vmem [shape: f32[1,128], index: 4, kind: input, shape index: {}]
  %s5 = inlined_call_operand.vmem [shape: bf16[128,64], index: 5, kind: input, shape index: {}]
  %s6 = inlined_call_operand.vmem [shape: f32[1,64], index: 6, kind: input, shape index: {}]
  %s7 = inlined_call_operand.vmem [shape: f32[2,16,64], index: 7, kind: output, shape index: {}]
  %s8 = sld [smem:[#allocation0]]
  $region69: #{_lambda_.6} parent=0
    _
  %s10 = ssub.s32 1, %s8
  %s11 = scalar_select 0, %s10, %s8
  loop: start=0, step=1, limit=4
  $region2: #{_lambda_.6} parent=0 // loop_pre_header
    _
  $region3: #{_lambda_.6} parent=0 // loop_header
    %s13 = sphi 0, %s17
    %p14 = scmp.ge.s32.totalorder %s13, 4
    %s20 = sphi 0, %s32
    %s21 = sphi 0, %s28
    %s22 = sphi 0, %s20
    %s23 = sphi 0, %s21
    %s24 = sphi 0, %s22
    %s25 = sphi 0, %s23
    %s35 = sphi 0, %s37
    %s38 = sphi 0, %s35
    %s39 = sphi 0, %s38
    %s55 = sphi 0, %s39
    %s59 = sphi 0, %s59
    %s61 = sphi 0, %s59
    %s62 = sphi 0, %s61
    %s76 = sphi 0, %s62
    %s80 = sphi 0, %s80
    %s82 = sphi 0, %s80
    %s83 = sphi 0, %s82
    %s97 = sphi 0, %s83
    %s103 = sphi 0, %s105
    %s106 = sphi 0, %s103
    %s107 = sphi 0, %s106
    %s123 = sphi 0, %s107
    %s129 = sphi 0, %s131
    %s132 = sphi 0, %s129
    %s133 = sphi 0, %s132
    %s149 = sphi 0, %s133
    %s155 = sphi 0, %s157
    %s158 = sphi 0, %s155
    %s159 = sphi 0, %s158
    %s175 = sphi 0, %s159
    %s179 = sphi 0, %s179
    %s181 = sphi 0, %s179
    %s182 = sphi 0, %s181
    %s196 = sphi 0, %s182
    %s202 = sphi 0, %s204
    %s205 = sphi 0, %s202
    %s206 = sphi 0, %s205
    %s222 = sphi 0, %s206
  $region4: #{_lambda_.6} parent=0 // loop_header_branch
    %16 = sbr.rel (%p14) target = $region8
  $region5: #{_lambda_.6} parent=0 // loop_body
    %s18 = ssub.s32 %s13, 1
    %s19 = ssub.s32 %s13, 2
    %s26 = sadd.s32 1, %s21
    %p27 = scmp.ge.s32.totalorder %s26, 1
    %s28 = scalar_select %p27, 0, %s26
    %s29 = sadd.s32 1, %s20
    %s30 = scalar_select %p27, %s29, %s20
    %p31 = scmp.ge.s32.totalorder %s30, 2
    %s32 = scalar_select %p31, 0, %s30
    %s33 = ssub.s32 %s20, %s32
    %p34 = scmp.eq.s32.totalorder %s33, 0
    %s36 = sadd.s32 %s35, 1
    %s37 = scalar_select %p34, %s35, %s36
    %p40 = pneg %p34
    %p41 = scmp.eq.s32.totalorder %s13, 1
    %p42 = por %p40, %p41
    %p43 = scmp.ne.s32.totalorder %s35, %s38
    %p44 = scmp.eq.s32.totalorder %s13, 0
    %p45 = por %p43, %p44
    %p46 = scmp.ne.s32.totalorder %s35, %s38
    %p47 = scmp.eq.s32.totalorder %s18, 1
    %p48 = por %p46, %p47
    %p49 = scmp.ne.s32.totalorder %s38, %s39
    %p50 = scmp.eq.s32.totalorder %s18, 0
    %p51 = por %p49, %p50
    %p52 = scmp.ne.s32.totalorder %s38, %s39
    %p53 = scmp.eq.s32.totalorder %s19, 1
    %p54 = por %p52, %p53
    %p56 = scmp.ne.s32.totalorder %s39, %s55
    %p57 = scmp.eq.s32.totalorder %s19, 0
    %p58 = por %p56, %p57
    %s60 = sadd.s32 %s59, 1
    %p63 = scmp.eq.s32.totalorder %s13, 1
    %p64 = scmp.ne.s32.totalorder %s59, %s61
    %p65 = scmp.eq.s32.totalorder %s13, 0
    %p66 = por %p64, %p65
    %p67 = scmp.ne.s32.totalorder %s59, %s61
    %p68 = scmp.eq.s32.totalorder %s18, 1
    %p69 = por %p67, %p68
    %p70 = scmp.ne.s32.totalorder %s61, %s62
    %p71 = scmp.eq.s32.totalorder %s18, 0
    %p72 = por %p70, %p71
    %p73 = scmp.ne.s32.totalorder %s61, %s62
    %p74 = scmp.eq.s32.totalorder %s19, 1
    %p75 = por %p73, %p74
    %p77 = scmp.ne.s32.totalorder %s62, %s76
    %p78 = scmp.eq.s32.totalorder %s19, 0
    %p79 = por %p77, %p78
    %s81 = sadd.s32 %s80, 1
    %p84 = scmp.eq.s32.totalorder %s13, 1
    %p85 = scmp.ne.s32.totalorder %s80, %s82
    %p86 = scmp.eq.s32.totalorder %s13, 0
    %p87 = por %p85, %p86
    %p88 = scmp.ne.s32.totalorder %s80, %s82
    %p89 = scmp.eq.s32.totalorder %s18, 1
    %p90 = por %p88, %p89
    %p91 = scmp.ne.s32.totalorder %s82, %s83
    %p92 = scmp.eq.s32.totalorder %s18, 0
    %p93 = por %p91, %p92
    %p94 = scmp.ne.s32.totalorder %s82, %s83
    %p95 = scmp.eq.s32.totalorder %s19, 1
    %p96 = por %p94, %p95
    %p98 = scmp.ne.s32.totalorder %s83, %s97
    %p99 = scmp.eq.s32.totalorder %s19, 0
    %p100 = por %p98, %p99
    %s101 = ssub.s32 %s21, %s28
    %p102 = scmp.eq.s32.totalorder %s101, 0
    %s104 = sadd.s32 %s103, 1
    %s105 = scalar_select %p102, %s103, %s104
    %p108 = pneg %p102
    %p109 = scmp.eq.s32.totalorder %s13, 1
    %p110 = por %p108, %p109
    %p111 = scmp.ne.s32.totalorder %s103, %s106
    %p112 = scmp.eq.s32.totalorder %s13, 0
    %p113 = por %p111, %p112
    %p114 = scmp.ne.s32.totalorder %s103, %s106
    %p115 = scmp.eq.s32.totalorder %s18, 1
    %p116 = por %p114, %p115
    %p117 = scmp.ne.s32.totalorder %s106, %s107
    %p118 = scmp.eq.s32.totalorder %s18, 0
    %p119 = por %p117, %p118
    %p120 = scmp.ne.s32.totalorder %s106, %s107
    %p121 = scmp.eq.s32.totalorder %s19, 1
    %p122 = por %p120, %p121
    %p124 = scmp.ne.s32.totalorder %s107, %s123
    %p125 = scmp.eq.s32.totalorder %s19, 0
    %p126 = por %p124, %p125
    %s127 = ssub.s32 %s21, %s28
    %p128 = scmp.eq.s32.totalorder %s127, 0
    %s130 = sadd.s32 %s129, 1
    %s131 = scalar_select %p128, %s129, %s130
    %p134 = pneg %p128
    %p135 = scmp.eq.s32.totalorder %s13, 1
    %p136 = por %p134, %p135
    %p137 = scmp.ne.s32.totalorder %s129, %s132
    %p138 = scmp.eq.s32.totalorder %s13, 0
    %p139 = por %p137, %p138
    %p140 = scmp.ne.s32.totalorder %s129, %s132
    %p141 = scmp.eq.s32.totalorder %s18, 1
    %p142 = por %p140, %p141
    %p143 = scmp.ne.s32.totalorder %s132, %s133
    %p144 = scmp.eq.s32.totalorder %s18, 0
    %p145 = por %p143, %p144
    %p146 = scmp.ne.s32.totalorder %s132, %s133
    %p147 = scmp.eq.s32.totalorder %s19, 1
    %p148 = por %p146, %p147
    %p150 = scmp.ne.s32.totalorder %s133, %s149
    %p151 = scmp.eq.s32.totalorder %s19, 0
    %p152 = por %p150, %p151
    %s153 = ssub.s32 %s21, %s28
    %p154 = scmp.eq.s32.totalorder %s153, 0
    %s156 = sadd.s32 %s155, 1
    %s157 = scalar_select %p154, %s155, %s156
    %p160 = pneg %p154
    %p161 = scmp.eq.s32.totalorder %s13, 1
    %p162 = por %p160, %p161
    %p163 = scmp.ne.s32.totalorder %s155, %s158
    %p164 = scmp.eq.s32.totalorder %s13, 0
    %p165 = por %p163, %p164
    %p166 = scmp.ne.s32.totalorder %s155, %s158
    %p167 = scmp.eq.s32.totalorder %s18, 1
    %p168 = por %p166, %p167
    %p169 = scmp.ne.s32.totalorder %s158, %s159
    %p170 = scmp.eq.s32.totalorder %s18, 0
    %p171 = por %p169, %p170
    %p172 = scmp.ne.s32.totalorder %s158, %s159
    %p173 = scmp.eq.s32.totalorder %s19, 1
    %p174 = por %p172, %p173
    %p176 = scmp.ne.s32.totalorder %s159, %s175
    %p177 = scmp.eq.s32.totalorder %s19, 0
    %p178 = por %p176, %p177
    %s180 = sadd.s32 %s179, 1
    %p183 = scmp.eq.s32.totalorder %s13, 1
    %p184 = scmp.ne.s32.totalorder %s179, %s181
    %p185 = scmp.eq.s32.totalorder %s13, 0
    %p186 = por %p184, %p185
    %p187 = scmp.ne.s32.totalorder %s179, %s181
    %p188 = scmp.eq.s32.totalorder %s18, 1
    %p189 = por %p187, %p188
    %p190 = scmp.ne.s32.totalorder %s181, %s182
    %p191 = scmp.eq.s32.totalorder %s18, 0
    %p192 = por %p190, %p191
    %p193 = scmp.ne.s32.totalorder %s181, %s182
    %p194 = scmp.eq.s32.totalorder %s19, 1
    %p195 = por %p193, %p194
    %p197 = scmp.ne.s32.totalorder %s182, %s196
    %p198 = scmp.eq.s32.totalorder %s19, 0
    %p199 = por %p197, %p198
    %s200 = ssub.s32 %s20, %s32
    %p201 = scmp.eq.s32.totalorder %s200, 0
    %s203 = sadd.s32 %s202, 1
    %s204 = scalar_select %p201, %s202, %s203
    %p207 = pneg %p201
    %p208 = scmp.eq.s32.totalorder %s13, 1
    %p209 = por %p207, %p208
    %p210 = scmp.ne.s32.totalorder %s202, %s205
    %p211 = scmp.eq.s32.totalorder %s13, 0
    %p212 = por %p210, %p211
    %p213 = scmp.ne.s32.totalorder %s202, %s205
    %p214 = scmp.eq.s32.totalorder %s18, 1
    %p215 = por %p213, %p214
    %p216 = scmp.ne.s32.totalorder %s205, %s206
    %p217 = scmp.eq.s32.totalorder %s18, 0
    %p218 = por %p216, %p217
    %p219 = scmp.ne.s32.totalorder %s205, %s206
    %p220 = scmp.eq.s32.totalorder %s19, 1
    %p221 = por %p219, %p220
    %p223 = scmp.ne.s32.totalorder %s206, %s222
    %p224 = scmp.eq.s32.totalorder %s19, 0
    %p225 = por %p223, %p224
    %p226 = scmp.le.s32.totalorder 1, %s13
    %p227 = scmp.lt.s32.totalorder %s13, 3
    %p228 = pnand %p226, %p227
    %p229 = pneg %p228
    // Predicated region
    $region9: #{_lambda_.6} parent=5 // pred_check
      _
    $region10: #{_lambda_.6} parent=5 // pred_check_branch
      %231 = sbr.rel (%p228) target = $region12
    $region11: #{_lambda_.6} parent=5 // pred_region
      %s232 = ssub.s32 %s13, 1
      // Predicated region
      $region13: #{_lambda_.6} parent=11 // pred_check
        %p233 = pneg %p72
      $region14: #{_lambda_.6} parent=11 // pred_check_branch
        %235 = sbr.rel (%p233) target = $region16
      $region15: #{_lambda_.6} parent=11 // pred_region
        _
      $region16: #{_lambda_.6} parent=11 // pred_fallthru
        _
      // Predicated region
      $region17: #{_lambda_.6} parent=11 // pred_check
        %p236 = pneg %p93
      $region18: #{_lambda_.6} parent=11 // pred_check_branch
        %238 = sbr.rel (%p236) target = $region20
      $region19: #{_lambda_.6} parent=11 // pred_region
        _
      $region20: #{_lambda_.6} parent=11 // pred_fallthru
        _
      // Predicated region
      $region21: #{_lambda_.6} parent=11 // pred_check
        %p239 = pneg %p119
      $region22: #{_lambda_.6} parent=11 // pred_check_branch
        %241 = sbr.rel (%p239) target = $region24
      $region23: #{_lambda_.6} parent=11 // pred_region
        %p242 = scmp.lt.s32.totalorder %s23, 0
        %s243 = scalar_select %p242, %s23, 0
        %s244 = smul.addr %s243, 4
        %s245 = scalar_lea.vmem %s3, %s244
      $region24: #{_lambda_.6} parent=11 // pred_fallthru
        _
      // Predicated region
      $region25: #{_lambda_.6} parent=11 // pred_check
        %p246 = pneg %p145
      $region26: #{_lambda_.6} parent=11 // pred_check_branch
        %248 = sbr.rel (%p246) target = $region28
      $region27: #{_lambda_.6} parent=11 // pred_region
        %p249 = scmp.lt.s32.totalorder %s23, 0
        %s250 = scalar_select %p249, %s23, 0
        %s251 = scalar_lea.vmem %s4, %s250
      $region28: #{_lambda_.6} parent=11 // pred_fallthru
        _
      // Predicated region
      $region29: #{_lambda_.6} parent=11 // pred_check
        %p252 = pneg %p171
      $region30: #{_lambda_.6} parent=11 // pred_check_branch
        %254 = sbr.rel (%p252) target = $region32
      $region31: #{_lambda_.6} parent=11 // pred_region
        %s255 = smul.u32 16, %s23
        %p256 = scmp.lt.s32.totalorder %s255, 15
        %s257 = scalar_select %p256, %s255, 15
        %s258 = smul.addr %s257, 4
        %s259 = scalar_lea.vmem %s5, %s258
        %s260 = smul.u32 16, %s23
      $region32: #{_lambda_.6} parent=11 // pred_fallthru
        _
      // Predicated region
      $region33: #{_lambda_.6} parent=11 // pred_check
        %p261 = pneg %p192
      $region34: #{_lambda_.6} parent=11 // pred_check_branch
        %263 = sbr.rel (%p261) target = $region36
      $region35: #{_lambda_.6} parent=11 // pred_region
        _
      $region36: #{_lambda_.6} parent=11 // pred_fallthru
        _
    $region12: #{_lambda_.6} parent=5 // pred_fallthru
      _
    %p264 = scmp.lt.s32.totalorder %s13, 2
    // Predicated region
    $region37: #{_lambda_.6} parent=5 // pred_check
      %p265 = pneg %p264
    $region38: #{_lambda_.6} parent=5 // pred_check_branch
      %267 = sbr.rel (%p265) target = $region40
    $region39: #{_lambda_.6} parent=5 // pred_region
      // Predicated region
      $region41: #{_lambda_.6} parent=39 // pred_check
        %p268 = pneg %p45
      $region42: #{_lambda_.6} parent=39 // pred_check_branch
        %270 = sbr.rel (%p268) target = $region44
      $region43: #{_lambda_.6} parent=39 // pred_region
        %p271 = scmp.lt.s32.totalorder %s20, 1
        %s272 = scalar_select %p271, %s20, 1
        %s273 = smul.addr %s272, 2
        %s274 = smul.addr %s273, 8
        %s275 = scalar_lea.vmem %s0, %s274
      $region44: #{_lambda_.6} parent=39 // pred_fallthru
        _
    $region40: #{_lambda_.6} parent=5 // pred_fallthru
      _
    %p276 = scmp.le.s32.totalorder 1, %s13
    %p277 = scmp.lt.s32.totalorder %s13, 3
    %p278 = pnand %p276, %p277
    %p279 = pneg %p278
    // Predicated region
    $region45: #{_lambda_.6} parent=5 // pred_check
      _
    $region46: #{_lambda_.6} parent=5 // pred_check_branch
      %281 = sbr.rel (%p278) target = $region48
    $region47: #{_lambda_.6} parent=5 // pred_region
      %s282 = ssub.s32 %s13, 1
      %p283 = scmp.lt.s32.totalorder %s22, 1
      %s284 = scalar_select %p283, %s22, 1
      %s285 = smul.addr %s284, 2
      %s286 = smul.addr %s285, 8
      %s287 = scalar_lea.vmem %s0, %s286
      %p288 = pneg %p51
      %p289 = pneg %p48
      %p290 = pneg %p72
      %p291 = pneg %p69
      %p292 = pneg %p93
      %p293 = pneg %p90
      %p294 = scmp.lt.s32.totalorder %s23, 0
      %s295 = scalar_select %p294, %s23, 0
      %s296 = smul.addr %s295, 4
      %s297 = scalar_lea.vmem %s3, %s296
      %p298 = pneg %p119
      %p299 = pneg %p116
      %p300 = scmp.lt.s32.totalorder %s23, 0
      %s301 = scalar_select %p300, %s23, 0
      %s302 = scalar_lea.vmem %s4, %s301
      %p303 = pneg %p145
      %p304 = pneg %p142
      %s305 = smul.u32 16, %s23
      %p306 = scmp.lt.s32.totalorder %s305, 15
      %s307 = scalar_select %p306, %s305, 15
      %s308 = smul.addr %s307, 4
      %s309 = scalar_lea.vmem %s5, %s308
      %p310 = pneg %p171
      %p311 = pneg %p168
      %p312 = pneg %p192
      %p313 = pneg %p189
      %p314 = pneg %p218
      %p315 = pneg %p215
      %p316 = scmp.lt.s32.totalorder %s22, 1
      %s317 = scalar_select %p316, %s22, 1
      %s318 = smul.addr %s317, 2
      %s319 = smul.addr %s318, 8
      %s320 = scalar_lea.vmem %s7, %s319
      %p321 = scmp.lt.s32.totalorder %s22, 1
      %s322 = scalar_select %p321, %s22, 1
      %s323 = smul.addr %s322, 2
      %s324 = smul.addr %s323, 8
      %s325 = scalar_lea.vmem %s0, %s324
      %p326 = scmp.lt.s32.totalorder %s23, 0
      %s327 = scalar_select %p326, %s23, 0
      %s328 = smul.addr %s327, 4
      %s329 = scalar_lea.vmem %s3, %s328
      %p330 = scmp.lt.s32.totalorder %s23, 0
      %s331 = scalar_select %p330, %s23, 0
      %s332 = scalar_lea.vmem %s4, %s331
      %s333 = smul.u32 16, %s23
      %p334 = scmp.lt.s32.totalorder %s333, 15
      %s335 = scalar_select %p334, %s333, 15
      %s336 = smul.addr %s335, 4
      %s337 = scalar_lea.vmem %s5, %s336
      %s338 = smul.u32 16, %s23
      %p339 = scmp.lt.s32.totalorder %s22, 1
      %s340 = scalar_select %p339, %s22, 1
      %s341 = smul.addr %s340, 2
      %s342 = smul.addr %s341, 8
      %s343 = scalar_lea.vmem %s7, %s342
      %p345 = scmp.eq.s32.totalorder %s23, 0
      // Predicated region
      $region49: #{_lambda_.6} parent=47 // pred_check
        %p346 = pneg %p345
      $region50: #{_lambda_.6} parent=47 // pred_check_branch
        %348 = sbr.rel (%p346) target = $region52
      $region51: #{_lambda_.6} parent=47 // pred_region
        %v349 = vld [vmem:[%s325] sm:$0xff]
        %v350 = vld [vmem:[%s325 + $0x8] sm:$0xff]
        %v351 = vld [vmem:[%s1] sm:$0x1]
        %v352 = vld [vmem:[%s2] sm:$0x1]
        %vm353 = vcmask 523264
        %v354 = vsel %vm353, %v349, 0.0
        %355 = vadd.xlane.f32.xlu0 %v354
        %v356 = vpop.xlane.xlu0 %355
        %v357 = vsel %vm353, %v350, 0.0
        %358 = vadd.xlane.f32.xlu0 %v357
        %v359 = vpop.xlane.xlu0 %358
        %v360 = vrcp.pop 64.0
        %v361 = vmul.f32 %v356, %v360
        %v362 = vmul.f32 %v359, %v360
        %v363 = vsub.f32 %v349, %v361
        %v364 = vsub.f32 %v350, %v362
        %v365 = vmul.f32 %v363, %v363
        %v366 = vmul.f32 %v364, %v364
        %v367 = vsel %vm353, %v365, 0.0
        %368 = vadd.xlane.f32.xlu0 %v367
        %v369 = vpop.xlane.xlu0 %368
        %v370 = vsel %vm353, %v366, 0.0
        %371 = vadd.xlane.f32.xlu0 %v370
        %v372 = vpop.xlane.xlu0 %371
        %v373 = vmul.f32 %v369, %v360
        %v374 = vmul.f32 %v372, %v360
        %v375 = vadd.f32 %v373, 1e-05
        %v376 = vadd.f32 %v374, 1e-05
        %v377 = vrsqrt.pop %v375
        %v378 = vrsqrt.pop %v376
        %v379 = vmul.f32 %v363, %v377
        %v380 = vmul.f32 %v364, %v378
        %v382 = vlaneseq
        %v383 = vshrl.u32 %v382, 7
        %v384 = vsub.s32 0, %v383
        %v385 = vrot.slane %v351, %v384
        %v387 = vmul.f32 %v379, %v385
        %v388 = vmul.f32 %v380, %v385
        %v390 = vlaneseq
        %v391 = vshrl.u32 %v390, 7
        %v392 = vsub.s32 0, %v391
        %v393 = vrot.slane %v352, %v392
        %v395 = vadd.f32 %v387, %v393
        %v396 = vadd.f32 %v388, %v393
        %v397 = vpack.c.bf16 %v396, %v395
        %v399 = vunpack.c.l.b16 %v397
        %v400 = vunpack.c.h.b16 %v397
        %v401 = vpack.c.b16 %v399, %v399
        %v402 = vpack.c.b16 %v400, %v400
        %vm405 = vcmask 519168
        %406 = vst.msk [vmem:[#allocation2] sm:$0xf] %vm405, %v401
        %407 = vst.msk [vmem:[#allocation2 + $0x4] sm:$0xf] %vm405, %v402
        %v408 = vld [vmem:[%s6] sm:$0x1]
        %v410 = vlaneseq
        %v411 = vshrl.u32 %v410, 7
        %v412 = vsub.s32 0, %v411
        %v413 = vrot.slane %v408, %v412
        %v415 = vadd.f32 %v349, %v413
        %v416 = vadd.f32 %v350, %v413
        %417 = vst.msk [vmem:[#allocation3] sm:$0xff] %vm353, %v415
        %418 = vst.msk [vmem:[#allocation3 + $0x8] sm:$0xff] %vm353, %v416
      $region52: #{_lambda_.6} parent=47 // pred_fallthru
        _
      %v419 = vld [vmem:[#allocation2] sm:$0xf]
      %v420 = vld [vmem:[#allocation2 + $0x4] sm:$0xf]
      %v421 = vld [vmem:[%s329] sm:$0xf]
      %v422 = vld [vmem:[%s329 + $0x4] sm:$0xf]
      %v423 = vld [vmem:[%s329 + $0x8] sm:$0xf]
      %v424 = vld [vmem:[%s329 + $0xc] sm:$0xf]
      %v425 = vld [vmem:[%s329 + $0x10] sm:$0xf]
      %v426 = vld [vmem:[%s329 + $0x14] sm:$0xf]
      %v427 = vld [vmem:[%s329 + $0x18] sm:$0xf]
      %v428 = vld [vmem:[%s329 + $0x1c] sm:$0xf]
      %v429 = vld [vmem:[%s332] sm:$0x1]
      %v431 = vlaneseq
      %v432 = vshrl.u32 %v431, 7
      %v433 = vsub.s32 0, %v432
      %v434 = vrot.slane %v429, %v433
      %v438 = vunpack.c.l.b16 %v419
      %v439 = vunpack.c.l.b16 %v420
      %v440 = vpack.c.b16 %v439, %v438
      %v449 = vunpack.c.l.b16 %v421
      %v450 = vunpack.c.l.b16 %v422
      %v451 = vunpack.c.l.b16 %v423
      %v452 = vunpack.c.l.b16 %v424
      %v453 = vunpack.c.l.b16 %v425
      %v454 = vunpack.c.l.b16 %v426
      %v455 = vunpack.c.l.b16 %v427
      %v456 = vunpack.c.l.b16 %v428
      %v457 = vpack.c.b16 %v450, %v449
      %v458 = vpack.c.b16 %v452, %v451
      %v459 = vpack.c.b16 %v454, %v453
      %v460 = vpack.c.b16 %v456, %v455
      %vm465 = vcmask 523264
      %v467 = vsel %vm465, %v440, 0
      %469 = vmatprep.subr.bf16.mxu0 0
      %470 = vmatpush1.bf16.msra.mxu0 0
      %471 = vmatprep.subr.bf16.mxu0 0
      %472 = vmatpush1.bf16.msra.mxu0 0
      %473 = vmatprep.subr.bf16.mxu0 0
      %474 = vmatpush1.bf16.msra.mxu0 0
      %475 = vmatprep.subr.bf16.mxu0 0
      %476 = vmatpush1.bf16.msra.mxu0 0
      %477 = vmatprep.subr.bf16.mxu0 0
      %478 = vmatpush1.bf16.msra.mxu0 %v460
      %479 = vmatprep.subr.bf16.mxu0 0
      %480 = vmatpush1.bf16.msra.mxu0 %v459
      %481 = vmatprep.subr.bf16.mxu0 0
      %482 = vmatpush1.bf16.msra.mxu0 %v458
      %483 = vmatprep.subr.bf16.mxu0 0
      %484 = vmatpush1.bf16.msra.mxu0 %v457
      %485 = vmatprep.subr.bf16.mxu0 0
      %486 = vmatpush2.bf16.msra.mxu0 0
      %487 = vmatprep.subr.bf16.mxu0 0
      %488 = vmatpush2.bf16.msra.mxu0 0
      %489 = vmatprep.subr.bf16.mxu0 0
      %490 = vmatpush2.bf16.msra.mxu0 0
      %491 = vmatprep.subr.bf16.mxu0 0
      %492 = vmatpush2.bf16.msra.mxu0 0
      %493 = vmatprep.subr.bf16.mxu0 0
      %494 = vmatpush2.bf16.msra.mxu0 0
      %495 = vmatprep.subr.bf16.mxu0 0
      %496 = vmatpush2.bf16.msra.mxu0 0
      %497 = vmatprep.subr.bf16.mxu0 0
      %498 = vmatpush2.bf16.msra.mxu0 0
      %499 = vmatprep.subr.bf16.mxu0 0
      %500 = vmatpush2.bf16.msra.mxu0 0
      %501 = vmatprep.mubr.bf16.mxu0 0
      %502 = vmatmul.mubr.bf16.gmra.mxu0 %v467
      %v503 = vpop.f32.mrf.mxu0
      %v504 = vadd.f32 %v434, %v503
      %v505 = vpop.f32.mrf.mxu0
      %v506 = vpop.f32.mrf.mxu0
      %v507 = vadd.f32 %v434, %v506
      %v508 = vpop.f32.mrf.mxu0
      %509 = vdwg.mxu0
      %v510 = vmul.f32 %v504, 0.5
      %v511 = vmul.f32 %v507, 0.5
      %v512 = vmul.f32 %v504, 0.70710677
      %v513 = vmul.f32 %v507, 0.70710677
      %v514 = verf.f32.pop %v512
      %v515 = verf.f32.pop %v513
      %v516 = vadd.f32 %v514, 1.0
      %v517 = vadd.f32 %v515, 1.0
      %v518 = vmul.f32 %v510, %v516
      %v519 = vmul.f32 %v511, %v517
      %v520 = vpack.c.bf16 %v519, %v518
      %v521 = vld [vmem:[#allocation3] sm:$0xff]
      %v522 = vld [vmem:[#allocation3 + $0x8] sm:$0xff]
      %v523 = vld [vmem:[%s337] sm:$0xf]
      %v524 = vld [vmem:[%s337 + $0x4] sm:$0xf]
      %v525 = vld [vmem:[%s337 + $0x8] sm:$0xf]
      %v526 = vld [vmem:[%s337 + $0xc] sm:$0xf]
      %v527 = vld [vmem:[%s337 + $0x10] sm:$0xf]
      %v528 = vld [vmem:[%s337 + $0x14] sm:$0xf]
      %v529 = vld [vmem:[%s337 + $0x18] sm:$0xf]
      %v530 = vld [vmem:[%s337 + $0x1c] sm:$0xf]
      %v531 = vld [vmem:[%s337 + $0x20] sm:$0xf]
      %v532 = vld [vmem:[%s337 + $0x24] sm:$0xf]
      %v533 = vld [vmem:[%s337 + $0x28] sm:$0xf]
      %v534 = vld [vmem:[%s337 + $0x2c] sm:$0xf]
      %v535 = vld [vmem:[%s337 + $0x30] sm:$0xf]
      %v536 = vld [vmem:[%s337 + $0x34] sm:$0xf]
      %v537 = vld [vmem:[%s337 + $0x38] sm:$0xf]
      %v538 = vld [vmem:[%s337 + $0x3c] sm:$0xf]
      %v555 = vunpack.c.l.b16 %v523
      %v556 = vunpack.c.l.b16 %v524
      %v557 = vunpack.c.l.b16 %v525
      %v558 = vunpack.c.l.b16 %v526
      %v559 = vunpack.c.l.b16 %v527
      %v560 = vunpack.c.l.b16 %v528
      %v561 = vunpack.c.l.b16 %v529
      %v562 = vunpack.c.l.b16 %v530
      %v563 = vunpack.c.l.b16 %v531
      %v564 = vunpack.c.l.b16 %v532
      %v565 = vunpack.c.l.b16 %v533
      %v566 = vunpack.c.l.b16 %v534
      %v567 = vunpack.c.l.b16 %v535
      %v568 = vunpack.c.l.b16 %v536
      %v569 = vunpack.c.l.b16 %v537
      %v570 = vunpack.c.l.b16 %v538
      %v571 = vpack.c.b16 %v556, %v555
      %v572 = vpack.c.b16 %v558, %v557
      %v573 = vpack.c.b16 %v560, %v559
      %v574 = vpack.c.b16 %v562, %v561
      %v575 = vpack.c.b16 %v564, %v563
      %v576 = vpack.c.b16 %v566, %v565
      %v577 = vpack.c.b16 %v568, %v567
      %v578 = vpack.c.b16 %v570, %v569
      %587 = vmatprep.subr.bf16.mxu0 0
      %588 = vmatpush1.bf16.msra.mxu0 %v578
      %589 = vmatprep.subr.bf16.mxu0 0
      %590 = vmatpush1.bf16.msra.mxu0 %v577
      %591 = vmatprep.subr.bf16.mxu0 0
      %592 = vmatpush1.bf16.msra.mxu0 %v576
      %593 = vmatprep.subr.bf16.mxu0 0
      %594 = vmatpush1.bf16.msra.mxu0 %v575
      %595 = vmatprep.subr.bf16.mxu0 0
      %596 = vmatpush1.bf16.msra.mxu0 %v574
      %597 = vmatprep.subr.bf16.mxu0 0
      %598 = vmatpush1.bf16.msra.mxu0 %v573
      %599 = vmatprep.subr.bf16.mxu0 0
      %600 = vmatpush1.bf16.msra.mxu0 %v572
      %601 = vmatprep.subr.bf16.mxu0 0
      %602 = vmatpush1.bf16.msra.mxu0 %v571
      %603 = vmatprep.subr.bf16.mxu0 0
      %604 = vmatpush2.bf16.msra.mxu0 0
      %605 = vmatprep.subr.bf16.mxu0 0
      %606 = vmatpush2.bf16.msra.mxu0 0
      %607 = vmatprep.subr.bf16.mxu0 0
      %608 = vmatpush2.bf16.msra.mxu0 0
      %609 = vmatprep.subr.bf16.mxu0 0
      %610 = vmatpush2.bf16.msra.mxu0 0
      %611 = vmatprep.subr.bf16.mxu0 0
      %612 = vmatpush2.bf16.msra.mxu0 0
      %613 = vmatprep.subr.bf16.mxu0 0
      %614 = vmatpush2.bf16.msra.mxu0 0
      %615 = vmatprep.subr.bf16.mxu0 0
      %616 = vmatpush2.bf16.msra.mxu0 0
      %617 = vmatprep.subr.bf16.mxu0 0
      %618 = vmatpush2.bf16.msra.mxu0 0
      %619 = vmatprep.mubr.bf16.mxu0 0
      %620 = vmatmul.mubr.bf16.gmra.mxu0 %v520
      %v621 = vpop.f32.mrf.mxu0
      %v622 = vadd.f32 0.0, %v621
      %v623 = vpop.f32.mrf.mxu0
      %v624 = vpop.f32.mrf.mxu0
      %v625 = vadd.f32 0.0, %v624
      %v626 = vpop.f32.mrf.mxu0
      %627 = vdwg.mxu0
      %v628 = vadd.f32 %v521, %v622
      %v629 = vadd.f32 %v522, %v625
      %630 = vst.msk [vmem:[#allocation3] sm:$0xff] %vm465, %v628
      %631 = vst.msk [vmem:[#allocation3 + $0x8] sm:$0xff] %vm465, %v629
      // Predicated region
      $region53: #{_lambda_.6} parent=47 // pred_check
        %p632 = pneg %p345
      $region54: #{_lambda_.6} parent=47 // pred_check_branch
        %634 = sbr.rel (%p632) target = $region56
      $region55: #{_lambda_.6} parent=47 // pred_region
        %v635 = vld [vmem:[#allocation3] sm:$0xff]
        %v636 = vld [vmem:[#allocation3 + $0x8] sm:$0xff]
        %637 = vst.msk [vmem:[%s343] sm:$0xff] %vm465, %v635
        %638 = vst.msk [vmem:[%s343 + $0x8] sm:$0xff] %vm465, %v636
      $region56: #{_lambda_.6} parent=47 // pred_fallthru
        _
      %p639 = scmp.lt.s32.totalorder %s22, 1
      %s640 = scalar_select %p639, %s22, 1
      %s641 = smul.addr %s640, 2
      %s642 = smul.addr %s641, 8
      %s643 = scalar_lea.vmem %s7, %s642
      // Predicated region
      $region57: #{_lambda_.6} parent=47 // pred_check
        %p644 = pneg %p215
      $region58: #{_lambda_.6} parent=47 // pred_check_branch
        %646 = sbr.rel (%p644) target = $region60
      $region59: #{_lambda_.6} parent=47 // pred_region
        _
      $region60: #{_lambda_.6} parent=47 // pred_fallthru
        _
    $region48: #{_lambda_.6} parent=5 // pred_fallthru
      _
    %p647 = scmp.le.s32.totalorder 2, %s13
    // Predicated region
    $region61: #{_lambda_.6} parent=5 // pred_check
      %p648 = pneg %p647
    $region62: #{_lambda_.6} parent=5 // pred_check_branch
      %650 = sbr.rel (%p648) target = $region64
    $region63: #{_lambda_.6} parent=5 // pred_region
      %s651 = ssub.s32 %s13, 2
      // Predicated region
      $region65: #{_lambda_.6} parent=63 // pred_check
        %p652 = pneg %p221
      $region66: #{_lambda_.6} parent=63 // pred_check_branch
        %654 = sbr.rel (%p652) target = $region68
      $region67: #{_lambda_.6} parent=63 // pred_region
        %p655 = scmp.lt.s32.totalorder %s24, 1
        %s656 = scalar_select %p655, %s24, 1
        %s657 = smul.addr %s656, 2
        %s658 = smul.addr %s657, 8
        %s659 = scalar_lea.vmem %s7, %s658
      $region68: #{_lambda_.6} parent=63 // pred_fallthru
        _
    $region64: #{_lambda_.6} parent=5 // pred_fallthru
      _
  $region6: #{_lambda_.6} parent=0 // loop_footer
    %s17 = sadd.s32 1, %s13
  $region7: #{_lambda_.6} parent=0 // loop_footer_branch
    %12 = sbr.rel target = $region3
  $region8: #{_lambda_.6} parent=0 // loop_exit
    _

// kernel: _lambda_.5
$region0: #{_lambda_.5}
  #allocation0 [shape = 'u32[]', space=smem, size = 0x4, offset = 0x4, fixed_abs, tag = 'smem constant byte address 0x4 - core index']
  #allocation1 [shape = 'u32[144,128]{1,0:T(1,128)}', space=vmem, size = 0x12000, scoped, tag = 'internal scratch']
  #allocation2 [shape = 'bf16[16,64]{1,0:T(8,128)(2,1)}', space=vmem, size = 0x1000, scoped, tag = 'scratch operand']
  #allocation3 [shape = 'bf16[4,16,16]{2,1,0:T(8,128)(2,1)}', space=vmem, size = 0x4000, scoped, tag = 'scratch operand']
  #allocation4 [shape = 'bf16[4,16,16]{2,1,0:T(8,128)(2,1)}', space=vmem, size = 0x4000, scoped, tag = 'scratch operand']
  #allocation5 [shape = 'bf16[4,16,16]{2,1,0:T(8,128)(2,1)}', space=vmem, size = 0x4000, scoped, tag = 'scratch operand']
  #allocation6 [shape = 'f32[4,16,1]{2,1,0:T(8,128)}', space=vmem, size = 0x8000, scoped, tag = 'scratch operand']
  #allocation7 [shape = 'f32[4,16,1]{2,1,0:T(8,128)}', space=vmem, size = 0x8000, scoped, tag = 'scratch operand']
  #allocation8 [shape = 'f32[4,16,16]{2,1,0:T(8,128)}', space=vmem, size = 0x8000, scoped, tag = 'scratch operand']
  #allocation9 [shape = 'bf16[16,64]{1,0:T(8,128)(2,1)}', space=vmem, size = 0x1000, scoped, tag = 'scratch operand']
  %s0 = inlined_call_operand.vmem [shape: f32[2,16,64], index: 0, kind: input, shape index: {}]
  %s1 = inlined_call_operand.vmem [shape: f32[1,64], index: 1, kind: input, shape index: {}]
  %s2 = inlined_call_operand.vmem [shape: f32[1,64], index: 2, kind: input, shape index: {}]
  %s3 = inlined_call_operand.vmem [shape: bf16[64,64], index: 3, kind: input, shape index: {}]
  %s4 = inlined_call_operand.vmem [shape: f32[1,64], index: 4, kind: input, shape index: {}]
  %s5 = inlined_call_operand.vmem [shape: bf16[64,128], index: 5, kind: input, shape index: {}]
  %s6 = inlined_call_operand.vmem [shape: f32[1,128], index: 6, kind: input, shape index: {}]
  %s7 = inlined_call_operand.vmem [shape: bf16[64,64], index: 7, kind: input, shape index: {}]
  %s8 = inlined_call_operand.vmem [shape: f32[1,64], index: 8, kind: input, shape index: {}]
  %s9 = inlined_call_operand.vmem [shape: f32[2,16,64], index: 9, kind: output, shape index: {}]
  %s10 = sld [smem:[#allocation0]]
  $region80: #{_lambda_.5} parent=0
    _
  %s12 = ssub.s32 1, %s10
  %s13 = scalar_select 0, %s12, %s10
  loop: start=0, step=1, limit=4
  $region2: #{_lambda_.5} parent=0 // loop_pre_header
    _
  $region3: #{_lambda_.5} parent=0 // loop_header
    %s15 = sphi 0, %s19
    %p16 = scmp.ge.s32.totalorder %s15, 4
    %s22 = sphi 0, %s34
    %s23 = sphi 0, %s30
    %s24 = sphi 0, %s22
    %s25 = sphi 0, %s23
    %s26 = sphi 0, %s24
    %s27 = sphi 0, %s25
    %s37 = sphi 0, %s39
    %s40 = sphi 0, %s37
    %s41 = sphi 0, %s40
    %s57 = sphi 0, %s41
    %s61 = sphi 0, %s61
    %s63 = sphi 0, %s61
    %s64 = sphi 0, %s63
    %s78 = sphi 0, %s64
    %s82 = sphi 0, %s82
    %s84 = sphi 0, %s82
    %s85 = sphi 0, %s84
    %s99 = sphi 0, %s85
    %s103 = sphi 0, %s103
    %s105 = sphi 0, %s103
    %s106 = sphi 0, %s105
    %s120 = sphi 0, %s106
    %s124 = sphi 0, %s124
    %s126 = sphi 0, %s124
    %s127 = sphi 0, %s126
    %s141 = sphi 0, %s127
    %s145 = sphi 0, %s145
    %s147 = sphi 0, %s145
    %s148 = sphi 0, %s147
    %s162 = sphi 0, %s148
    %s166 = sphi 0, %s166
    %s168 = sphi 0, %s166
    %s169 = sphi 0, %s168
    %s183 = sphi 0, %s169
    %s187 = sphi 0, %s187
    %s189 = sphi 0, %s187
    %s190 = sphi 0, %s189
    %s204 = sphi 0, %s190
    %s208 = sphi 0, %s208
    %s210 = sphi 0, %s208
    %s211 = sphi 0, %s210
    %s225 = sphi 0, %s211
    %s233 = sphi 0, %s235
    %s236 = sphi 0, %s233
    %s237 = sphi 0, %s236
    %s253 = sphi 0, %s237
  $region4: #{_lambda_.5} parent=0 // loop_header_branch
    %18 = sbr.rel (%p16) target = $region8
  $region5: #{_lambda_.5} parent=0 // loop_body
    %s20 = ssub.s32 %s15, 1
    %s21 = ssub.s32 %s15, 2
    %s28 = sadd.s32 1, %s23
    %p29 = scmp.ge.s32.totalorder %s28, 1
    %s30 = scalar_select %p29, 0, %s28
    %s31 = sadd.s32 1, %s22
    %s32 = scalar_select %p29, %s31, %s22
    %p33 = scmp.ge.s32.totalorder %s32, 2
    %s34 = scalar_select %p33, 0, %s32
    %s35 = ssub.s32 %s22, %s34
    %p36 = scmp.eq.s32.totalorder %s35, 0
    %s38 = sadd.s32 %s37, 1
    %s39 = scalar_select %p36, %s37, %s38
    %p42 = pneg %p36
    %p43 = scmp.eq.s32.totalorder %s15, 1
    %p44 = por %p42, %p43
    %p45 = scmp.ne.s32.totalorder %s37, %s40
    %p46 = scmp.eq.s32.totalorder %s15, 0
    %p47 = por %p45, %p46
    %p48 = scmp.ne.s32.totalorder %s37, %s40
    %p49 = scmp.eq.s32.totalorder %s20, 1
    %p50 = por %p48, %p49
    %p51 = scmp.ne.s32.totalorder %s40, %s41
    %p52 = scmp.eq.s32.totalorder %s20, 0
    %p53 = por %p51, %p52
    %p54 = scmp.ne.s32.totalorder %s40, %s41
    %p55 = scmp.eq.s32.totalorder %s21, 1
    %p56 = por %p54, %p55
    %p58 = scmp.ne.s32.totalorder %s41, %s57
    %p59 = scmp.eq.s32.totalorder %s21, 0
    %p60 = por %p58, %p59
    %s62 = sadd.s32 %s61, 1
    %p65 = scmp.eq.s32.totalorder %s15, 1
    %p66 = scmp.ne.s32.totalorder %s61, %s63
    %p67 = scmp.eq.s32.totalorder %s15, 0
    %p68 = por %p66, %p67
    %p69 = scmp.ne.s32.totalorder %s61, %s63
    %p70 = scmp.eq.s32.totalorder %s20, 1
    %p71 = por %p69, %p70
    %p72 = scmp.ne.s32.totalorder %s63, %s64
    %p73 = scmp.eq.s32.totalorder %s20, 0
    %p74 = por %p72, %p73
    %p75 = scmp.ne.s32.totalorder %s63, %s64
    %p76 = scmp.eq.s32.totalorder %s21, 1
    %p77 = por %p75, %p76
    %p79 = scmp.ne.s32.totalorder %s64, %s78
    %p80 = scmp.eq.s32.totalorder %s21, 0
    %p81 = por %p79, %p80
    %s83 = sadd.s32 %s82, 1
    %p86 = scmp.eq.s32.totalorder %s15, 1
    %p87 = scmp.ne.s32.totalorder %s82, %s84
    %p88 = scmp.eq.s32.totalorder %s15, 0
    %p89 = por %p87, %p88
    %p90 = scmp.ne.s32.totalorder %s82, %s84
    %p91 = scmp.eq.s32.totalorder %s20, 1
    %p92 = por %p90, %p91
    %p93 = scmp.ne.s32.totalorder %s84, %s85
    %p94 = scmp.eq.s32.totalorder %s20, 0
    %p95 = por %p93, %p94
    %p96 = scmp.ne.s32.totalorder %s84, %s85
    %p97 = scmp.eq.s32.totalorder %s21, 1
    %p98 = por %p96, %p97
    %p100 = scmp.ne.s32.totalorder %s85, %s99
    %p101 = scmp.eq.s32.totalorder %s21, 0
    %p102 = por %p100, %p101
    %s104 = sadd.s32 %s103, 1
    %p107 = scmp.eq.s32.totalorder %s15, 1
    %p108 = scmp.ne.s32.totalorder %s103, %s105
    %p109 = scmp.eq.s32.totalorder %s15, 0
    %p110 = por %p108, %p109
    %p111 = scmp.ne.s32.totalorder %s103, %s105
    %p112 = scmp.eq.s32.totalorder %s20, 1
    %p113 = por %p111, %p112
    %p114 = scmp.ne.s32.totalorder %s105, %s106
    %p115 = scmp.eq.s32.totalorder %s20, 0
    %p116 = por %p114, %p115
    %p117 = scmp.ne.s32.totalorder %s105, %s106
    %p118 = scmp.eq.s32.totalorder %s21, 1
    %p119 = por %p117, %p118
    %p121 = scmp.ne.s32.totalorder %s106, %s120
    %p122 = scmp.eq.s32.totalorder %s21, 0
    %p123 = por %p121, %p122
    %s125 = sadd.s32 %s124, 1
    %p128 = scmp.eq.s32.totalorder %s15, 1
    %p129 = scmp.ne.s32.totalorder %s124, %s126
    %p130 = scmp.eq.s32.totalorder %s15, 0
    %p131 = por %p129, %p130
    %p132 = scmp.ne.s32.totalorder %s124, %s126
    %p133 = scmp.eq.s32.totalorder %s20, 1
    %p134 = por %p132, %p133
    %p135 = scmp.ne.s32.totalorder %s126, %s127
    %p136 = scmp.eq.s32.totalorder %s20, 0
    %p137 = por %p135, %p136
    %p138 = scmp.ne.s32.totalorder %s126, %s127
    %p139 = scmp.eq.s32.totalorder %s21, 1
    %p140 = por %p138, %p139
    %p142 = scmp.ne.s32.totalorder %s127, %s141
    %p143 = scmp.eq.s32.totalorder %s21, 0
    %p144 = por %p142, %p143
    %s146 = sadd.s32 %s145, 1
    %p149 = scmp.eq.s32.totalorder %s15, 1
    %p150 = scmp.ne.s32.totalorder %s145, %s147
    %p151 = scmp.eq.s32.totalorder %s15, 0
    %p152 = por %p150, %p151
    %p153 = scmp.ne.s32.totalorder %s145, %s147
    %p154 = scmp.eq.s32.totalorder %s20, 1
    %p155 = por %p153, %p154
    %p156 = scmp.ne.s32.totalorder %s147, %s148
    %p157 = scmp.eq.s32.totalorder %s20, 0
    %p158 = por %p156, %p157
    %p159 = scmp.ne.s32.totalorder %s147, %s148
    %p160 = scmp.eq.s32.totalorder %s21, 1
    %p161 = por %p159, %p160
    %p163 = scmp.ne.s32.totalorder %s148, %s162
    %p164 = scmp.eq.s32.totalorder %s21, 0
    %p165 = por %p163, %p164
    %s167 = sadd.s32 %s166, 1
    %p170 = scmp.eq.s32.totalorder %s15, 1
    %p171 = scmp.ne.s32.totalorder %s166, %s168
    %p172 = scmp.eq.s32.totalorder %s15, 0
    %p173 = por %p171, %p172
    %p174 = scmp.ne.s32.totalorder %s166, %s168
    %p175 = scmp.eq.s32.totalorder %s20, 1
    %p176 = por %p174, %p175
    %p177 = scmp.ne.s32.totalorder %s168, %s169
    %p178 = scmp.eq.s32.totalorder %s20, 0
    %p179 = por %p177, %p178
    %p180 = scmp.ne.s32.totalorder %s168, %s169
    %p181 = scmp.eq.s32.totalorder %s21, 1
    %p182 = por %p180, %p181
    %p184 = scmp.ne.s32.totalorder %s169, %s183
    %p185 = scmp.eq.s32.totalorder %s21, 0
    %p186 = por %p184, %p185
    %s188 = sadd.s32 %s187, 1
    %p191 = scmp.eq.s32.totalorder %s15, 1
    %p192 = scmp.ne.s32.totalorder %s187, %s189
    %p193 = scmp.eq.s32.totalorder %s15, 0
    %p194 = por %p192, %p193
    %p195 = scmp.ne.s32.totalorder %s187, %s189
    %p196 = scmp.eq.s32.totalorder %s20, 1
    %p197 = por %p195, %p196
    %p198 = scmp.ne.s32.totalorder %s189, %s190
    %p199 = scmp.eq.s32.totalorder %s20, 0
    %p200 = por %p198, %p199
    %p201 = scmp.ne.s32.totalorder %s189, %s190
    %p202 = scmp.eq.s32.totalorder %s21, 1
    %p203 = por %p201, %p202
    %p205 = scmp.ne.s32.totalorder %s190, %s204
    %p206 = scmp.eq.s32.totalorder %s21, 0
    %p207 = por %p205, %p206
    %s209 = sadd.s32 %s208, 1
    %p212 = scmp.eq.s32.totalorder %s15, 1
    %p213 = scmp.ne.s32.totalorder %s208, %s210
    %p214 = scmp.eq.s32.totalorder %s15, 0
    %p215 = por %p213, %p214
    %p216 = scmp.ne.s32.totalorder %s208, %s210
    %p217 = scmp.eq.s32.totalorder %s20, 1
    %p218 = por %p216, %p217
    %p219 = scmp.ne.s32.totalorder %s210, %s211
    %p220 = scmp.eq.s32.totalorder %s20, 0
    %p221 = por %p219, %p220
    %p222 = scmp.ne.s32.totalorder %s210, %s211
    %p223 = scmp.eq.s32.totalorder %s21, 1
    %p224 = por %p222, %p223
    %p226 = scmp.ne.s32.totalorder %s211, %s225
    %p227 = scmp.eq.s32.totalorder %s21, 0
    %p228 = por %p226, %p227
    %s229 = ssub.s32 %s22, %s34
    %s230 = ssub.s32 %s23, %s30
    %s231 = sor.u32 %s229, %s230
    %p232 = scmp.eq.s32.totalorder %s231, 0
    %s234 = sadd.s32 %s233, 1
    %s235 = scalar_select %p232, %s233, %s234
    %p238 = pneg %p232
    %p239 = scmp.eq.s32.totalorder %s15, 1
    %p240 = por %p238, %p239
    %p241 = scmp.ne.s32.totalorder %s233, %s236
    %p242 = scmp.eq.s32.totalorder %s15, 0
    %p243 = por %p241, %p242
    %p244 = scmp.ne.s32.totalorder %s233, %s236
    %p245 = scmp.eq.s32.totalorder %s20, 1
    %p246 = por %p244, %p245
    %p247 = scmp.ne.s32.totalorder %s236, %s237
    %p248 = scmp.eq.s32.totalorder %s20, 0
    %p249 = por %p247, %p248
    %p250 = scmp.ne.s32.totalorder %s236, %s237
    %p251 = scmp.eq.s32.totalorder %s21, 1
    %p252 = por %p250, %p251
    %p254 = scmp.ne.s32.totalorder %s237, %s253
    %p255 = scmp.eq.s32.totalorder %s21, 0
    %p256 = por %p254, %p255
    %p257 = scmp.le.s32.totalorder 1, %s15
    %p258 = scmp.lt.s32.totalorder %s15, 3
    %p259 = pnand %p257, %p258
    %p260 = pneg %p259
    // Predicated region
    $region9: #{_lambda_.5} parent=5 // pred_check
      _
    $region10: #{_lambda_.5} parent=5 // pred_check_branch
      %262 = sbr.rel (%p259) target = $region12
    $region11: #{_lambda_.5} parent=5 // pred_region
      %s263 = ssub.s32 %s15, 1
      // Predicated region
      $region13: #{_lambda_.5} parent=11 // pred_check
        %p264 = pneg %p74
      $region14: #{_lambda_.5} parent=11 // pred_check_branch
        %266 = sbr.rel (%p264) target = $region16
      $region15: #{_lambda_.5} parent=11 // pred_region
        _
      $region16: #{_lambda_.5} parent=11 // pred_fallthru
        _
      // Predicated region
      $region17: #{_lambda_.5} parent=11 // pred_check
        %p267 = pneg %p95
      $region18: #{_lambda_.5} parent=11 // pred_check_branch
        %269 = sbr.rel (%p267) target = $region20
      $region19: #{_lambda_.5} parent=11 // pred_region
        _
      $region20: #{_lambda_.5} parent=11 // pred_fallthru
        _
      // Predicated region
      $region21: #{_lambda_.5} parent=11 // pred_check
        %p270 = pneg %p116
      $region22: #{_lambda_.5} parent=11 // pred_check_branch
        %272 = sbr.rel (%p270) target = $region24
      $region23: #{_lambda_.5} parent=11 // pred_region
        _
      $region24: #{_lambda_.5} parent=11 // pred_fallthru
        _
      // Predicated region
      $region25: #{_lambda_.5} parent=11 // pred_check
        %p273 = pneg %p137
      $region26: #{_lambda_.5} parent=11 // pred_check_branch
        %275 = sbr.rel (%p273) target = $region28
      $region27: #{_lambda_.5} parent=11 // pred_region
        _
      $region28: #{_lambda_.5} parent=11 // pred_fallthru
        _
      // Predicated region
      $region29: #{_lambda_.5} parent=11 // pred_check
        %p276 = pneg %p158
      $region30: #{_lambda_.5} parent=11 // pred_check_branch
        %278 = sbr.rel (%p276) target = $region32
      $region31: #{_lambda_.5} parent=11 // pred_region
        _
      $region32: #{_lambda_.5} parent=11 // pred_fallthru
        _
      // Predicated region
      $region33: #{_lambda_.5} parent=11 // pred_check
        %p279 = pneg %p179
      $region34: #{_lambda_.5} parent=11 // pred_check_branch
        %281 = sbr.rel (%p279) target = $region36
      $region35: #{_lambda_.5} parent=11 // pred_region
        _
      $region36: #{_lambda_.5} parent=11 // pred_fallthru
        _
      // Predicated region
      $region37: #{_lambda_.5} parent=11 // pred_check
        %p282 = pneg %p200
      $region38: #{_lambda_.5} parent=11 // pred_check_branch
        %284 = sbr.rel (%p282) target = $region40
      $region39: #{_lambda_.5} parent=11 // pred_region
        _
      $region40: #{_lambda_.5} parent=11 // pred_fallthru
        _
      // Predicated region
      $region41: #{_lambda_.5} parent=11 // pred_check
        %p285 = pneg %p221
      $region42: #{_lambda_.5} parent=11 // pred_check_branch
        %287 = sbr.rel (%p285) target = $region44
      $region43: #{_lambda_.5} parent=11 // pred_region
        _
      $region44: #{_lambda_.5} parent=11 // pred_fallthru
        _
    $region12: #{_lambda_.5} parent=5 // pred_fallthru
      _
    %p288 = scmp.lt.s32.totalorder %s15, 2
    // Predicated region
    $region45: #{_lambda_.5} parent=5 // pred_check
      %p289 = pneg %p288
    $region46: #{_lambda_.5} parent=5 // pred_check_branch
      %291 = sbr.rel (%p289) target = $region48
    $region47: #{_lambda_.5} parent=5 // pred_region
      // Predicated region
      $region49: #{_lambda_.5} parent=47 // pred_check
        %p292 = pneg %p47
      $region50: #{_lambda_.5} parent=47 // pred_check_branch
        %294 = sbr.rel (%p292) target = $region52
      $region51: #{_lambda_.5} parent=47 // pred_region
        %p295 = scmp.lt.s32.totalorder %s22, 1
        %s296 = scalar_select %p295, %s22, 1
        %s297 = smul.addr %s296, 2
        %s298 = smul.addr %s297, 8
        %s299 = scalar_lea.vmem %s0, %s298
      $region52: #{_lambda_.5} parent=47 // pred_fallthru
        _
    $region48: #{_lambda_.5} parent=5 // pred_fallthru
      _
    %p300 = scmp.le.s32.totalorder 1, %s15
    %p301 = scmp.lt.s32.totalorder %s15, 3
    %p302 = pnand %p300, %p301
    %p303 = pneg %p302
    // Predicated region
    $region53: #{_lambda_.5} parent=5 // pred_check
      _
    $region54: #{_lambda_.5} parent=5 // pred_check_branch
      %305 = sbr.rel (%p302) target = $region56
    $region55: #{_lambda_.5} parent=5 // pred_region
      %s306 = ssub.s32 %s15, 1
      %p307 = scmp.lt.s32.totalorder %s24, 1
      %s308 = scalar_select %p307, %s24, 1
      %s309 = smul.addr %s308, 2
      %s310 = smul.addr %s309, 8
      %s311 = scalar_lea.vmem %s0, %s310
      %p312 = pneg %p53
      %p313 = pneg %p50
      %p314 = pneg %p74
      %p315 = pneg %p71
      %p316 = pneg %p95
      %p317 = pneg %p92
      %p318 = pneg %p116
      %p319 = pneg %p113
      %p320 = pneg %p137
      %p321 = pneg %p134
      %p322 = pneg %p158
      %p323 = pneg %p155
      %p324 = pneg %p179
      %p325 = pneg %p176
      %p326 = pneg %p200
      %p327 = pneg %p197
      %p328 = pneg %p221
      %p329 = pneg %p218
      %p330 = pneg %p249
      %p331 = pneg %p246
      %s332 = smul.u32 2, %s25
      %p333 = scmp.lt.s32.totalorder %s24, 1
      %s334 = scalar_select %p333, %s24, 1
      %p335 = scmp.lt.s32.totalorder %s332, 1
      %s336 = scalar_select %p335, %s332, 1
      %s337 = smul.addr %s334, 2
      %s338 = sadd.s32 %s336, %s337
      %s339 = smul.addr %s338, 8
      %s340 = scalar_lea.vmem %s9, %s339
      %p341 = scmp.lt.s32.totalorder %s24, 1
      %s342 = scalar_select %p341, %s24, 1
      %s343 = smul.addr %s342, 2
      %s344 = smul.addr %s343, 8
      %s345 = scalar_lea.vmem %s0, %s344
      %s346 = smul.u32 2, %s25
      %p347 = scmp.lt.s32.totalorder %s24, 1
      %s348 = scalar_select %p347, %s24, 1
      %p349 = scmp.lt.s32.totalorder %s346, 1
      %s350 = scalar_select %p349, %s346, 1
      %s351 = smul.addr %s348, 2
      %s352 = sadd.s32 %s350, %s351
      %s353 = smul.addr %s352, 8
      %s354 = scalar_lea.vmem %s9, %s353
      %s355 = smul.u32 2, %s25
      %p357 = scmp.eq.s32.totalorder %s25, 0
      // Predicated region
      $region57: #{_lambda_.5} parent=55 // pred_check
        %p358 = pneg %p357
      $region58: #{_lambda_.5} parent=55 // pred_check_branch
        %360 = sbr.rel (%p358) target = $region60
      $region59: #{_lambda_.5} parent=55 // pred_region
        %v361 = vld [vmem:[%s345] sm:$0xff]
        %v362 = vld [vmem:[%s345 + $0x8] sm:$0xff]
        %v363 = vld [vmem:[%s1] sm:$0x1]
        %v364 = vld [vmem:[%s2] sm:$0x1]
        %vm365 = vcmask 523264
        %v366 = vsel %vm365, %v361, 0.0
        %367 = vadd.xlane.f32.xlu0 %v366
        %v368 = vpop.xlane.xlu0 %367
        %v369 = vsel %vm365, %v362, 0.0
        %370 = vadd.xlane.f32.xlu0 %v369
        %v371 = vpop.xlane.xlu0 %370
        %v372 = vrcp.pop 64.0
        %v373 = vmul.f32 %v368, %v372
        %v374 = vmul.f32 %v371, %v372
        %v375 = vsub.f32 %v361, %v373
        %v376 = vsub.f32 %v362, %v374
        %v377 = vmul.f32 %v375, %v375
        %v378 = vmul.f32 %v376, %v376
        %v379 = vsel %vm365, %v377, 0.0
        %380 = vadd.xlane.f32.xlu0 %v379
        %v381 = vpop.xlane.xlu0 %380
        %v382 = vsel %vm365, %v378, 0.0
        %383 = vadd.xlane.f32.xlu0 %v382
        %v384 = vpop.xlane.xlu0 %383
        %v385 = vmul.f32 %v381, %v372
        %v386 = vmul.f32 %v384, %v372
        %v387 = vadd.f32 %v385, 1e-05
        %v388 = vadd.f32 %v386, 1e-05
        %v389 = vrsqrt.pop %v387
        %v390 = vrsqrt.pop %v388
        %v391 = vmul.f32 %v375, %v389
        %v392 = vmul.f32 %v376, %v390
        %v394 = vlaneseq
        %v395 = vshrl.u32 %v394, 7
        %v396 = vsub.s32 0, %v395
        %v397 = vrot.slane %v363, %v396
        %v399 = vmul.f32 %v391, %v397
        %v400 = vmul.f32 %v392, %v397
        %v402 = vlaneseq
        %v403 = vshrl.u32 %v402, 7
        %v404 = vsub.s32 0, %v403
        %v405 = vrot.slane %v364, %v404
        %v407 = vadd.f32 %v399, %v405
        %v408 = vadd.f32 %v400, %v405
        %v409 = vpack.c.bf16 %v408, %v407
        %v411 = vunpack.c.l.b16 %v409
        %v412 = vunpack.c.h.b16 %v409
        %v413 = vpack.c.b16 %v411, %v411
        %v414 = vpack.c.b16 %v412, %v412
        %vm417 = vcmask 519168
        %418 = vst.msk [vmem:[#allocation2] sm:$0xf] %vm417, %v413
        %419 = vst.msk [vmem:[#allocation2 + $0x4] sm:$0xf] %vm417, %v414
        %v420 = vld [vmem:[%s5] sm:$0xf]
        %v421 = vld [vmem:[%s5 + $0x4] sm:$0xf]
        %v422 = vld [vmem:[%s5 + $0x8] sm:$0xf]
        %v423 = vld [vmem:[%s5 + $0xc] sm:$0xf]
        %v424 = vld [vmem:[%s5 + $0x10] sm:$0xf]
        %v425 = vld [vmem:[%s5 + $0x14] sm:$0xf]
        %v426 = vld [vmem:[%s5 + $0x18] sm:$0xf]
        %v427 = vld [vmem:[%s5 + $0x1c] sm:$0xf]
        %v428 = vld [vmem:[%s6] sm:$0x1]
        %v430 = vlaneseq
        %v431 = vshrl.u32 %v430, 7
        %v432 = vsub.s32 0, %v431
        %v433 = vrot.slane %v428, %v432
        %v443 = vunpack.c.l.b16 %v420
        %v444 = vunpack.c.l.b16 %v421
        %v445 = vunpack.c.l.b16 %v422
        %v446 = vunpack.c.l.b16 %v423
        %v447 = vunpack.c.l.b16 %v424
        %v448 = vunpack.c.l.b16 %v425
        %v449 = vunpack.c.l.b16 %v426
        %v450 = vunpack.c.l.b16 %v427
        %v451 = vpack.c.b16 %v444, %v443
        %v452 = vpack.c.b16 %v446, %v445
        %v453 = vpack.c.b16 %v448, %v447
        %v454 = vpack.c.b16 %v450, %v449
        %v460 = vsel %vm365, %v409, 0
        %462 = vmatprep.subr.bf16.mxu0 0
        %463 = vmatpush1.bf16.msra.mxu0 0
        %464 = vmatprep.subr.bf16.mxu0 0
        %465 = vmatpush1.bf16.msra.mxu0 0
        %466 = vmatprep.subr.bf16.mxu0 0
        %467 = vmatpush1.bf16.msra.mxu0 0
        %468 = vmatprep.subr.bf16.mxu0 0
        %469 = vmatpush1.bf16.msra.mxu0 0
        %470 = vmatprep.subr.bf16.mxu0 0
        %471 = vmatpush1.bf16.msra.mxu0 %v454
        %472 = vmatprep.subr.bf16.mxu0 0
        %473 = vmatpush1.bf16.msra.mxu0 %v453
        %474 = vmatprep.subr.bf16.mxu0 0
        %475 = vmatpush1.bf16.msra.mxu0 %v452
        %476 = vmatprep.subr.bf16.mxu0 0
        %477 = vmatpush1.bf16.msra.mxu0 %v451
        %478 = vmatprep.subr.bf16.mxu0 0
        %479 = vmatpush2.bf16.msra.mxu0 0
        %480 = vmatprep.subr.bf16.mxu0 0
        %481 = vmatpush2.bf16.msra.mxu0 0
        %482 = vmatprep.subr.bf16.mxu0 0
        %483 = vmatpush2.bf16.msra.mxu0 0
        %484 = vmatprep.subr.bf16.mxu0 0
        %485 = vmatpush2.bf16.msra.mxu0 0
        %486 = vmatprep.subr.bf16.mxu0 0
        %487 = vmatpush2.bf16.msra.mxu0 0
        %488 = vmatprep.subr.bf16.mxu0 0
        %489 = vmatpush2.bf16.msra.mxu0 0
        %490 = vmatprep.subr.bf16.mxu0 0
        %491 = vmatpush2.bf16.msra.mxu0 0
        %492 = vmatprep.subr.bf16.mxu0 0
        %493 = vmatpush2.bf16.msra.mxu0 0
        %494 = vmatprep.mubr.bf16.mxu0 0
        %495 = vmatmul.mubr.bf16.gmra.mxu0 %v460
        %v496 = vpop.f32.mrf.mxu0
        %v497 = vadd.f32 %v433, %v496
        %v498 = vpop.f32.mrf.mxu0
        %v499 = vpop.f32.mrf.mxu0
        %v500 = vadd.f32 %v433, %v499
        %v501 = vpop.f32.mrf.mxu0
        %502 = vdwg.mxu0
        %v503 = vpack.c.bf16 %v500, %v497
        %v505 = vunpack.c.l.b16 %v503
        %v506 = vunpack.c.h.b16 %v503
        %v507 = vpack.c.b16 %v505, %v505
        %v508 = vpack.c.b16 %v506, %v506
        %vm511 = vcmask 125952
        %512 = vst.msk [vmem:[#allocation3] sm:$0xf] %vm511, %v507
        %513 = vst.msk [vmem:[#allocation3 + $0x4] sm:$0xf] %vm511, %v508
        %514 = vrot.lane.b32.xlu0 %v507, 64
        %v515 = vpop.permute.xlu0 %514
        %516 = vrot.lane.b32.xlu0 %v508, 64
        %v517 = vpop.permute.xlu0 %516
        %520 = vst.msk [vmem:[#allocation4] sm:$0xf] %vm511, %v515
        %521 = vst.msk [vmem:[#allocation4 + $0x4] sm:$0xf] %vm511, %v517
        %522 = vrot.lane.b32.xlu0 %v507, 112
        %v523 = vpop.permute.xlu0 %522
        %524 = vrot.lane.b32.xlu0 %v508, 112
        %v525 = vpop.permute.xlu0 %524
        %s528 = scalar_lea.vmem [#allocation3], 8
        %529 = vst.msk [vmem:[%s528] sm:$0xf] %vm511, %v523
        %530 = vst.msk [vmem:[%s528 + $0x4] sm:$0xf] %vm511, %v525
        %531 = vrot.lane.b32.xlu0 %v507, 48
        %v532 = vpop.permute.xlu0 %531
        %533 = vrot.lane.b32.xlu0 %v508, 48
        %v534 = vpop.permute.xlu0 %533
        %s537 = scalar_lea.vmem [#allocation4], 8
        %538 = vst.msk [vmem:[%s537] sm:$0xf] %vm511, %v532
        %539 = vst.msk [vmem:[%s537 + $0x4] sm:$0xf] %vm511, %v534
        %540 = vrot.lane.b32.xlu0 %v507, 96
        %v541 = vpop.permute.xlu0 %540
        %542 = vrot.lane.b32.xlu0 %v508, 96
        %v543 = vpop.permute.xlu0 %542
        %s546 = scalar_lea.vmem [#allocation3], 16
        %547 = vst.msk [vmem:[%s546] sm:$0xf] %vm511, %v541
        %548 = vst.msk [vmem:[%s546 + $0x4] sm:$0xf] %vm511, %v543
        %549 = vrot.lane.b32.xlu0 %v507, 32
        %v550 = vpop.permute.xlu0 %549
        %551 = vrot.lane.b32.xlu0 %v508, 32
        %v552 = vpop.permute.xlu0 %551
        %s555 = scalar_lea.vmem [#allocation4], 16
        %556 = vst.msk [vmem:[%s555] sm:$0xf] %vm511, %v550
        %557 = vst.msk [vmem:[%s555 + $0x4] sm:$0xf] %vm511, %v552
        %558 = vrot.lane.b32.xlu0 %v507, 80
        %v559 = vpop.permute.xlu0 %558
        %560 = vrot.lane.b32.xlu0 %v508, 80
        %v561 = vpop.permute.xlu0 %560
        %s564 = scalar_lea.vmem [#allocation3], 24
        %565 = vst.msk [vmem:[%s564] sm:$0xf] %vm511, %v559
        %566 = vst.msk [vmem:[%s564 + $0x4] sm:$0xf] %vm511, %v561
        %567 = vrot.lane.b32.xlu0 %v507, 16
        %v568 = vpop.permute.xlu0 %567
        %569 = vrot.lane.b32.xlu0 %v508, 16
        %v570 = vpop.permute.xlu0 %569
        %s573 = scalar_lea.vmem [#allocation4], 24
        %574 = vst.msk [vmem:[%s573] sm:$0xf] %vm511, %v568
        %575 = vst.msk [vmem:[%s573 + $0x4] sm:$0xf] %vm511, %v570
      $region60: #{_lambda_.5} parent=55 // pred_fallthru
        _
      %s576 = smul.u32 %s25, 16
      %s577 = scalar_lea.vmem %s345, %s576
      %v578 = vld [vmem:[%s577] sm:$0xff]
      %v579 = vld [vmem:[%s577 + $0x8] sm:$0xff]
      %s580 = sshra.s32 %s576, 3
      %s581 = sand.u32 %s576, 7
      %s582 = smul.addr %s580, 4
      %s583 = scalar_lea.vmem [#allocation2], %s582
      %v584 = vld [vmem:[%s583] sm:$0xf]
      %v585 = vld [vmem:[%s583 + $0x4] sm:$0xf]
      %v586 = vld [vmem:[%s3] sm:$0xf]
      %v587 = vld [vmem:[%s3 + $0x4] sm:$0xf]
      %v588 = vld [vmem:[%s3 + $0x8] sm:$0xf]
      %v589 = vld [vmem:[%s3 + $0xc] sm:$0xf]
      %v590 = vld [vmem:[%s3 + $0x10] sm:$0xf]
      %v591 = vld [vmem:[%s3 + $0x14] sm:$0xf]
      %v592 = vld [vmem:[%s3 + $0x18] sm:$0xf]
      %v593 = vld [vmem:[%s3 + $0x1c] sm:$0xf]
      %v594 = vld [vmem:[%s4] sm:$0x1]
      %v596 = vlaneseq
      %v597 = vshrl.u32 %v596, 7
      %v598 = vsub.s32 0, %v597
      %v599 = vrot.slane %v594, %v598
      %v603 = vunpack.c.l.b16 %v584
      %v604 = vunpack.c.l.b16 %v585
      %v605 = vpack.c.b16 %v604, %v603
      %v614 = vunpack.c.l.b16 %v586
      %v615 = vunpack.c.l.b16 %v587
      %v616 = vunpack.c.l.b16 %v588
      %v617 = vunpack.c.l.b16 %v589
      %v618 = vunpack.c.l.b16 %v590
      %v619 = vunpack.c.l.b16 %v591
      %v620 = vunpack.c.l.b16 %v592
      %v621 = vunpack.c.l.b16 %v593
      %v622 = vpack.c.b16 %v615, %v614
      %v623 = vpack.c.b16 %v617, %v616
      %v624 = vpack.c.b16 %v619, %v618
      %v625 = vpack.c.b16 %v621, %v620
      %vm630 = vcmask 523264
      %v632 = vsel %vm630, %v605, 0
      %634 = vmatprep.subr.bf16.mxu0 0
      %635 = vmatpush1.bf16.msra.mxu0 0
      %636 = vmatprep.subr.bf16.mxu0 0
      %637 = vmatpush1.bf16.msra.mxu0 0
      %638 = vmatprep.subr.bf16.mxu0 0
      %639 = vmatpush1.bf16.msra.mxu0 0
      %640 = vmatprep.subr.bf16.mxu0 0
      %641 = vmatpush1.bf16.msra.mxu0 0
      %642 = vmatprep.subr.bf16.mxu0 0
      %643 = vmatpush1.bf16.msra.mxu0 %v625
      %644 = vmatprep.subr.bf16.mxu0 0
      %645 = vmatpush1.bf16.msra.mxu0 %v624
      %646 = vmatprep.subr.bf16.mxu0 0
      %647 = vmatpush1.bf16.msra.mxu0 %v623
      %648 = vmatprep.subr.bf16.mxu0 0
      %649 = vmatpush1.bf16.msra.mxu0 %v622
      %650 = vmatprep.subr.bf16.mxu0 0
      %651 = vmatpush2.bf16.msra.mxu0 0
      %652 = vmatprep.subr.bf16.mxu0 0
      %653 = vmatpush2.bf16.msra.mxu0 0
      %654 = vmatprep.subr.bf16.mxu0 0
      %655 = vmatpush2.bf16.msra.mxu0 0
      %656 = vmatprep.subr.bf16.mxu0 0
      %657 = vmatpush2.bf16.msra.mxu0 0
      %658 = vmatprep.subr.bf16.mxu0 0
      %659 = vmatpush2.bf16.msra.mxu0 0
      %660 = vmatprep.subr.bf16.mxu0 0
      %661 = vmatpush2.bf16.msra.mxu0 0
      %662 = vmatprep.subr.bf16.mxu0 0
      %663 = vmatpush2.bf16.msra.mxu0 0
      %664 = vmatprep.subr.bf16.mxu0 0
      %665 = vmatpush2.bf16.msra.mxu0 0
      %666 = vmatprep.mubr.bf16.mxu0 0
      %667 = vmatmul.mubr.bf16.gmra.mxu0 %v632
      %v668 = vpop.f32.mrf.mxu0
      %v669 = vadd.f32 %v599, %v668
      %v670 = vpop.f32.mrf.mxu0
      %v671 = vpop.f32.mrf.mxu0
      %v672 = vadd.f32 %v599, %v671
      %v673 = vpop.f32.mrf.mxu0
      %674 = vdwg.mxu0
      %v675 = vpack.c.bf16 %v672, %v669
      %v677 = vunpack.c.l.b16 %v675
      %v678 = vunpack.c.h.b16 %v675
      %v679 = vpack.c.b16 %v677, %v677
      %v680 = vpack.c.b16 %v678, %v678
      %vm683 = vcmask 125952
      %684 = vst.msk [vmem:[#allocation5] sm:$0xf] %vm683, %v679
      %685 = vst.msk [vmem:[#allocation5 + $0x4] sm:$0xf] %vm683, %v680
      %686 = vrot.lane.b32.xlu0 %v679, 112
      %v687 = vpop.permute.xlu0 %686
      %688 = vrot.lane.b32.xlu0 %v680, 112
      %v689 = vpop.permute.xlu0 %688
      %s692 = scalar_lea.vmem [#allocation5], 8
      %693 = vst.msk [vmem:[%s692] sm:$0xf] %vm683, %v687
      %694 = vst.msk [vmem:[%s692 + $0x4] sm:$0xf] %vm683, %v689
      %695 = vrot.lane.b32.xlu0 %v679, 96
      %v696 = vpop.permute.xlu0 %695
      %697 = vrot.lane.b32.xlu0 %v680, 96
      %v698 = vpop.permute.xlu0 %697
      %s701 = scalar_lea.vmem [#allocation5], 16
      %702 = vst.msk [vmem:[%s701] sm:$0xf] %vm683, %v696
      %703 = vst.msk [vmem:[%s701 + $0x4] sm:$0xf] %vm683, %v698
      %704 = vrot.lane.b32.xlu0 %v679, 80
      %v705 = vpop.permute.xlu0 %704
      %706 = vrot.lane.b32.xlu0 %v680, 80
      %v707 = vpop.permute.xlu0 %706
      %s710 = scalar_lea.vmem [#allocation5], 24
      %711 = vst.msk [vmem:[%s710] sm:$0xf] %vm683, %v705
      %712 = vst.msk [vmem:[%s710 + $0x4] sm:$0xf] %vm683, %v707
      %v713 = vld [vmem:[#allocation5] sm:$0xf]
      %v714 = vld [vmem:[#allocation5 + $0x4] sm:$0xf]
      %v715 = vld [vmem:[#allocation5 + $0x8] sm:$0xf]
      %v716 = vld [vmem:[#allocation5 + $0xc] sm:$0xf]
      %v717 = vld [vmem:[#allocation5 + $0x10] sm:$0xf]
      %v718 = vld [vmem:[#allocation5 + $0x14] sm:$0xf]
      %v719 = vld [vmem:[#allocation5 + $0x18] sm:$0xf]
      %v720 = vld [vmem:[#allocation5 + $0x1c] sm:$0xf]
      %vm721 = vcmask 7168
      %722 = vst.msk [vmem:[#allocation6] sm:$0xff] %vm721, -1e+30
      %723 = vst.msk [vmem:[#allocation6 + $0x8] sm:$0xff] %vm721, -1e+30
      %724 = vst.msk [vmem:[#allocation6 + $0x10] sm:$0xff] %vm721, -1e+30
      %725 = vst.msk [vmem:[#allocation6 + $0x18] sm:$0xff] %vm721, -1e+30
      %726 = vst.msk [vmem:[#allocation6 + $0x20] sm:$0xff] %vm721, -1e+30
      %727 = vst.msk [vmem:[#allocation6 + $0x28] sm:$0xff] %vm721, -1e+30
      %728 = vst.msk [vmem:[#allocation6 + $0x30] sm:$0xff] %vm721, -1e+30
      %729 = vst.msk [vmem:[#allocation6 + $0x38] sm:$0xff] %vm721, -1e+30
      %730 = vst.msk [vmem:[#allocation7] sm:$0xff] %vm721, 0.0
      %731 = vst.msk [vmem:[#allocation7 + $0x8] sm:$0xff] %vm721, 0.0
      %732 = vst.msk [vmem:[#allocation7 + $0x10] sm:$0xff] %vm721, 0.0
      %733 = vst.msk [vmem:[#allocation7 + $0x18] sm:$0xff] %vm721, 0.0
      %734 = vst.msk [vmem:[#allocation7 + $0x20] sm:$0xff] %vm721, 0.0
      %735 = vst.msk [vmem:[#allocation7 + $0x28] sm:$0xff] %vm721, 0.0
      %736 = vst.msk [vmem:[#allocation7 + $0x30] sm:$0xff] %vm721, 0.0
      %737 = vst.msk [vmem:[#allocation7 + $0x38] sm:$0xff] %vm721, 0.0
      %vm738 = vcmask 130048
      %739 = vst.msk [vmem:[#allocation8] sm:$0xff] %vm738, 0.0
      %740 = vst.msk [vmem:[#allocation8 + $0x8] sm:$0xff] %vm738, 0.0
      %741 = vst.msk [vmem:[#allocation8 + $0x10] sm:$0xff] %vm738, 0.0
      %742 = vst.msk [vmem:[#allocation8 + $0x18] sm:$0xff] %vm738, 0.0
      %743 = vst.msk [vmem:[#allocation8 + $0x20] sm:$0xff] %vm738, 0.0
      %744 = vst.msk [vmem:[#allocation8 + $0x28] sm:$0xff] %vm738, 0.0
      %745 = vst.msk [vmem:[#allocation8 + $0x30] sm:$0xff] %vm738, 0.0
      %746 = vst.msk [vmem:[#allocation8 + $0x38] sm:$0xff] %vm738, 0.0
      %v747 = vlaneseq
      %v748 = vshrl.u32 %v747, 7
      %v749 = vadd.s32 %v748, 8
      %v750 = vstv %s576
      %v751 = vadd.s32 %v750, %v748
      %v752 = vadd.s32 %v750, %v749
      %s753 = sadd.s32 %s25, 1
      // While loop
      $region61: #{_lambda_.5} parent=55 // loop_pre_header
        _
      $region62: #{_lambda_.5} parent=55 // loop_header
        %s755 = sphi 0, %s757
        %p756 = scmp.ge.s32.totalorder %s755, %s753
      $region63: #{_lambda_.5} parent=55 // loop_header_branch
        %759 = sbr.rel (%p756) target = $region67
      $region64: #{_lambda_.5} parent=55 // loop_body
        %s760 = smul.u32 %s755, 16
        %s761 = sshra.s32 %s760, 3
        %s762 = sand.u32 %s760, 7
        %s763 = smul.addr %s761, 4
        %s764 = scalar_lea.vmem [#allocation3], %s763
        %v765 = vld [vmem:[%s764] sm:$0xf]
        %v766 = vld [vmem:[%s764 + $0x4] sm:$0xf]
        %v767 = vld [vmem:[%s764 + $0x8] sm:$0xf]
        %v768 = vld [vmem:[%s764 + $0xc] sm:$0xf]
        %v769 = vld [vmem:[%s764 + $0x10] sm:$0xf]
        %v770 = vld [vmem:[%s764 + $0x14] sm:$0xf]
        %v771 = vld [vmem:[%s764 + $0x18] sm:$0xf]
        %v772 = vld [vmem:[%s764 + $0x1c] sm:$0xf]
        %s773 = smul.addr %s761, 4
        %s774 = scalar_lea.vmem [#allocation4], %s773
        %v775 = vld [vmem:[%s774] sm:$0xf]
        %v776 = vld [vmem:[%s774 + $0x4] sm:$0xf]
        %v777 = vld [vmem:[%s774 + $0x8] sm:$0xf]
        %v778 = vld [vmem:[%s774 + $0xc] sm:$0xf]
        %v779 = vld [vmem:[%s774 + $0x10] sm:$0xf]
        %v780 = vld [vmem:[%s774 + $0x14] sm:$0xf]
        %v781 = vld [vmem:[%s774 + $0x18] sm:$0xf]
        %v782 = vld [vmem:[%s774 + $0x1c] sm:$0xf]
        %v785 = vunpack.c.l.b16 %v713
        %v786 = vunpack.c.l.b16 %v714
        %v787 = vpack.c.b16 %v786, %v785
        %v790 = vunpack.c.l.b16 %v765
        %v791 = vunpack.c.l.b16 %v766
        %v792 = vpack.c.b16 %v791, %v790
        %v794 = vsel %vm738, %v787, 0
        %v797 = vsel %vm738, %v792, 0
        %799 = vmatprep.subr.bf16.mxu0 0
        %800 = vmatpush1.bf16.xpose.msra.mxu0 0
        %801 = vmatprep.subr.bf16.mxu0 0
        %802 = vmatpush1.bf16.xpose.msra.mxu0 0
        %803 = vmatprep.subr.bf16.mxu0 0
        %804 = vmatpush1.bf16.xpose.msra.mxu0 0
        %805 = vmatprep.subr.bf16.mxu0 0
        %806 = vmatpush1.bf16.xpose.msra.mxu0 0
        %807 = vmatprep.subr.bf16.mxu0 0
        %808 = vmatpush1.bf16.xpose.msra.mxu0 0
        %809 = vmatprep.subr.bf16.mxu0 0
        %810 = vmatpush1.bf16.xpose.msra.mxu0 0
        %811 = vmatprep.subr.bf16.mxu0 0
        %812 = vmatpush1.bf16.xpose.msra.mxu0 0
        %813 = vmatprep.subr.bf16.mxu0 0
        %814 = vmatpush1.bf16.xpose.msra.mxu0 %v797
        %815 = vmatprep.subr.bf16.mxu0 0
        %816 = vmatpush2.bf16.xpose.msra.mxu0 0
        %817 = vmatprep.subr.bf16.mxu0 0
        %818 = vmatpush2.bf16.xpose.msra.mxu0 0
        %819 = vmatprep.subr.bf16.mxu0 0
        %820 = vmatpush2.bf16.xpose.msra.mxu0 0
        %821 = vmatprep.subr.bf16.mxu0 0
        %822 = vmatpush2.bf16.xpose.msra.mxu0 0
        %823 = vmatprep.subr.bf16.mxu0 0
        %824 = vmatpush2.bf16.xpose.msra.mxu0 0
        %825 = vmatprep.subr.bf16.mxu0 0
        %826 = vmatpush2.bf16.xpose.msra.mxu0 0
        %827 = vmatprep.subr.bf16.mxu0 0
        %828 = vmatpush2.bf16.xpose.msra.mxu0 0
        %829 = vmatprep.subr.bf16.mxu0 0
        %830 = vmatpush2.bf16.xpose.msra.mxu0 0
        %831 = vmatprep.mubr.bf16.mxu0 0
        %832 = vmatmul.mubr.bf16.gmra.mxu0 %v794
        %v833 = vpop.f32.mrf.mxu0
        %v834 = vadd.f32 0.0, %v833
        %v835 = vpop.f32.mrf.mxu0
        %v836 = vpop.f32.mrf.mxu0
        %v837 = vadd.f32 0.0, %v836
        %v838 = vpop.f32.mrf.mxu0
        %839 = vdwg.mxu0
        %v842 = vunpack.c.l.b16 %v715
        %v843 = vunpack.c.l.b16 %v716
        %v844 = vpack.c.b16 %v843, %v842
        %v847 = vunpack.c.l.b16 %v767
        %v848 = vunpack.c.l.b16 %v768
        %v849 = vpack.c.b16 %v848, %v847
        %v851 = vsel %vm738, %v844, 0
        %v854 = vsel %vm738, %v849, 0
        %856 = vmatprep.subr.bf16.mxu0 0
        %857 = vmatpush1.bf16.xpose.msra.mxu0 0
        %858 = vmatprep.subr.bf16.mxu0 0
        %859 = vmatpush1.bf16.xpose.msra.mxu0 0
        %860 = vmatprep.subr.bf16.mxu0 0
        %861 = vmatpush1.bf16.xpose.msra.mxu0 0
        %862 = vmatprep.subr.bf16.mxu0 0
        %863 = vmatpush1.bf16.xpose.msra.mxu0 0
        %864 = vmatprep.subr.bf16.mxu0 0
        %865 = vmatpush1.bf16.xpose.msra.mxu0 0
        %866 = vmatprep.subr.bf16.mxu0 0
        %867 = vmatpush1.bf16.xpose.msra.mxu0 0
        %868 = vmatprep.subr.bf16.mxu0 0
        %869 = vmatpush1.bf16.xpose.msra.mxu0 0
        %870 = vmatprep.subr.bf16.mxu0 0
        %871 = vmatpush1.bf16.xpose.msra.mxu0 %v854
        %872 = vmatprep.subr.bf16.mxu0 0
        %873 = vmatpush2.bf16.xpose.msra.mxu0 0
        %874 = vmatprep.subr.bf16.mxu0 0
        %875 = vmatpush2.bf16.xpose.msra.mxu0 0
        %876 = vmatprep.subr.bf16.mxu0 0
        %877 = vmatpush2.bf16.xpose.msra.mxu0 0
        %878 = vmatprep.subr.bf16.mxu0 0
        %879 = vmatpush2.bf16.xpose.msra.mxu0 0
        %880 = vmatprep.subr.bf16.mxu0 0
        %881 = vmatpush2.bf16.xpose.msra.mxu0 0
        %882 = vmatprep.subr.bf16.mxu0 0
        %883 = vmatpush2.bf16.xpose.msra.mxu0 0
        %884 = vmatprep.subr.bf16.mxu0 0
        %885 = vmatpush2.bf16.xpose.msra.mxu0 0
        %886 = vmatprep.subr.bf16.mxu0 0
        %887 = vmatpush2.bf16.xpose.msra.mxu0 0
        %888 = vmatprep.mubr.bf16.mxu0 0
        %889 = vmatmul.mubr.bf16.gmra.mxu0 %v851
        %v890 = vpop.f32.mrf.mxu0
        %v891 = vadd.f32 0.0, %v890
        %v892 = vpop.f32.mrf.mxu0
        %v893 = vpop.f32.mrf.mxu0
        %v894 = vadd.f32 0.0, %v893
        %v895 = vpop.f32.mrf.mxu0
        %896 = vdwg.mxu0
        %v899 = vunpack.c.l.b16 %v717
        %v900 = vunpack.c.l.b16 %v718
        %v901 = vpack.c.b16 %v900, %v899
        %v904 = vunpack.c.l.b16 %v769
        %v905 = vunpack.c.l.b16 %v770
        %v906 = vpack.c.b16 %v905, %v904
        %v908 = vsel %vm738, %v901, 0
        %v911 = vsel %vm738, %v906, 0
        %913 = vmatprep.subr.bf16.mxu0 0
        %914 = vmatpush1.bf16.xpose.msra.mxu0 0
        %915 = vmatprep.subr.bf16.mxu0 0
        %916 = vmatpush1.bf16.xpose.msra.mxu0 0
        %917 = vmatprep.subr.bf16.mxu0 0
        %918 = vmatpush1.bf16.xpose.msra.mxu0 0
        %919 = vmatprep.subr.bf16.mxu0 0
        %920 = vmatpush1.bf16.xpose.msra.mxu0 0
        %921 = vmatprep.subr.bf16.mxu0 0
        %922 = vmatpush1.bf16.xpose.msra.mxu0 0
        %923 = vmatprep.subr.bf16.mxu0 0
        %924 = vmatpush1.bf16.xpose.msra.mxu0 0
        %925 = vmatprep.subr.bf16.mxu0 0
        %926 = vmatpush1.bf16.xpose.msra.mxu0 0
        %927 = vmatprep.subr.bf16.mxu0 0
        %928 = vmatpush1.bf16.xpose.msra.mxu0 %v911
        %929 = vmatprep.subr.bf16.mxu0 0
        %930 = vmatpush2.bf16.xpose.msra.mxu0 0
        %931 = vmatprep.subr.bf16.mxu0 0
        %932 = vmatpush2.bf16.xpose.msra.mxu0 0
        %933 = vmatprep.subr.bf16.mxu0 0
        %934 = vmatpush2.bf16.xpose.msra.mxu0 0
        %935 = vmatprep.subr.bf16.mxu0 0
        %936 = vmatpush2.bf16.xpose.msra.mxu0 0
        %937 = vmatprep.subr.bf16.mxu0 0
        %938 = vmatpush2.bf16.xpose.msra.mxu0 0
        %939 = vmatprep.subr.bf16.mxu0 0
        %940 = vmatpush2.bf16.xpose.msra.mxu0 0
        %941 = vmatprep.subr.bf16.mxu0 0
        %942 = vmatpush2.bf16.xpose.msra.mxu0 0
        %943 = vmatprep.subr.bf16.mxu0 0
        %944 = vmatpush2.bf16.xpose.msra.mxu0 0
        %945 = vmatprep.mubr.bf16.mxu0 0
        %946 = vmatmul.mubr.bf16.gmra.mxu0 %v908
        %v947 = vpop.f32.mrf.mxu0
        %v948 = vadd.f32 0.0, %v947
        %v949 = vpop.f32.mrf.mxu0
        %v950 = vpop.f32.mrf.mxu0
        %v951 = vadd.f32 0.0, %v950
        %v952 = vpop.f32.mrf.mxu0
        %953 = vdwg.mxu0
        %v956 = vunpack.c.l.b16 %v719
        %v957 = vunpack.c.l.b16 %v720
        %v958 = vpack.c.b16 %v957, %v956
        %v961 = vunpack.c.l.b16 %v771
        %v962 = vunpack.c.l.b16 %v772
        %v963 = vpack.c.b16 %v962, %v961
        %v965 = vsel %vm738, %v958, 0
        %v968 = vsel %vm738, %v963, 0
        %970 = vmatprep.subr.bf16.mxu0 0
        %971 = vmatpush1.bf16.xpose.msra.mxu0 0
        %972 = vmatprep.subr.bf16.mxu0 0
        %973 = vmatpush1.bf16.xpose.msra.mxu0 0
        %974 = vmatprep.subr.bf16.mxu0 0
        %975 = vmatpush1.bf16.xpose.msra.mxu0 0
        %976 = vmatprep.subr.bf16.mxu0 0
        %977 = vmatpush1.bf16.xpose.msra.mxu0 0
        %978 = vmatprep.subr.bf16.mxu0 0
        %979 = vmatpush1.bf16.xpose.msra.mxu0 0
        %980 = vmatprep.subr.bf16.mxu0 0
        %981 = vmatpush1.bf16.xpose.msra.mxu0 0
        %982 = vmatprep.subr.bf16.mxu0 0
        %983 = vmatpush1.bf16.xpose.msra.mxu0 0
        %984 = vmatprep.subr.bf16.mxu0 0
        %985 = vmatpush1.bf16.xpose.msra.mxu0 %v968
        %986 = vmatprep.subr.bf16.mxu0 0
        %987 = vmatpush2.bf16.xpose.msra.mxu0 0
        %988 = vmatprep.subr.bf16.mxu0 0
        %989 = vmatpush2.bf16.xpose.msra.mxu0 0
        %990 = vmatprep.subr.bf16.mxu0 0
        %991 = vmatpush2.bf16.xpose.msra.mxu0 0
        %992 = vmatprep.subr.bf16.mxu0 0
        %993 = vmatpush2.bf16.xpose.msra.mxu0 0
        %994 = vmatprep.subr.bf16.mxu0 0
        %995 = vmatpush2.bf16.xpose.msra.mxu0 0
        %996 = vmatprep.subr.bf16.mxu0 0
        %997 = vmatpush2.bf16.xpose.msra.mxu0 0
        %998 = vmatprep.subr.bf16.mxu0 0
        %999 = vmatpush2.bf16.xpose.msra.mxu0 0
        %1000 = vmatprep.subr.bf16.mxu0 0
        %1001 = vmatpush2.bf16.xpose.msra.mxu0 0
        %1002 = vmatprep.mubr.bf16.mxu0 0
        %1003 = vmatmul.mubr.bf16.gmra.mxu0 %v965
        %v1004 = vpop.f32.mrf.mxu0
        %v1005 = vadd.f32 0.0, %v1004
        %v1006 = vpop.f32.mrf.mxu0
        %v1007 = vpop.f32.mrf.mxu0
        %v1008 = vadd.f32 0.0, %v1007
        %v1009 = vpop.f32.mrf.mxu0
        %1010 = vdwg.mxu0
        %v1011 = vmul.f32 %v834, 0.25
        %v1012 = vmul.f32 %v837, 0.25
        %v1013 = vmul.f32 %v891, 0.25
        %v1014 = vmul.f32 %v894, 0.25
        %v1015 = vmul.f32 %v948, 0.25
        %v1016 = vmul.f32 %v951, 0.25
        %v1017 = vmul.f32 %v1005, 0.25
        %v1018 = vmul.f32 %v1008, 0.25
        %v1019 = vlaneseq
        %v1020 = vand.u32 %v1019, 127
        %v1021 = vstv %s760
        %v1022 = vadd.s32 %v1021, %v1020
        %vm1023 = vcmp.le.s32.totalorder %v1022, %v751
        %vm1024 = vcmp.le.s32.totalorder %v1022, %v752
        %v1025 = vsel %vm1023, 1, 0
        %v1026 = vsel %vm1024, 1, 0
        %vm1027 = vcmp.eq.s32.totalorder %v1025, 1
        %vm1028 = vcmp.eq.s32.totalorder %v1026, 1
        %v1029 = vsel %vm1027, %v1011, -1e+30
        %v1030 = vsel %vm1028, %v1012, -1e+30
        %v1031 = vsel %vm1027, %v1013, -1e+30
        %v1032 = vsel %vm1028, %v1014, -1e+30
        %v1033 = vsel %vm1027, %v1015, -1e+30
        %v1034 = vsel %vm1028, %v1016, -1e+30
        %v1035 = vsel %vm1027, %v1017, -1e+30
        %v1036 = vsel %vm1028, %v1018, -1e+30
        %v1037 = vld [vmem:[#allocation6] sm:$0xff]
        %v1038 = vld [vmem:[#allocation6 + $0x8] sm:$0xff]
        %v1039 = vld [vmem:[#allocation6 + $0x10] sm:$0xff]
        %v1040 = vld [vmem:[#allocation6 + $0x18] sm:$0xff]
        %v1041 = vld [vmem:[#allocation6 + $0x20] sm:$0xff]
        %v1042 = vld [vmem:[#allocation6 + $0x28] sm:$0xff]
        %v1043 = vld [vmem:[#allocation6 + $0x30] sm:$0xff]
        %v1044 = vld [vmem:[#allocation6 + $0x38] sm:$0xff]
        %v1045 = vsel %vm738, %v1029, -inf
        %1046 = vmax.xlane.f32.xlu0 %v1045
        %v1047 = vpop.xlane.xlu0 %1046
        %v1048 = vsel %vm738, %v1030, -inf
        %1049 = vmax.xlane.f32.xlu0 %v1048
        %v1050 = vpop.xlane.xlu0 %1049
        %v1051 = vsel %vm738, %v1031, -inf
        %1052 = vmax.xlane.f32.xlu0 %v1051
        %v1053 = vpop.xlane.xlu0 %1052
        %v1054 = vsel %vm738, %v1032, -inf
        %1055 = vmax.xlane.f32.xlu0 %v1054
        %v1056 = vpop.xlane.xlu0 %1055
        %v1057 = vsel %vm738, %v1033, -inf
        %1058 = vmax.xlane.f32.xlu0 %v1057
        %v1059 = vpop.xlane.xlu0 %1058
        %v1060 = vsel %vm738, %v1034, -inf
        %1061 = vmax.xlane.f32.xlu0 %v1060
        %v1062 = vpop.xlane.xlu0 %1061
        %v1063 = vsel %vm738, %v1035, -inf
        %1064 = vmax.xlane.f32.xlu0 %v1063
        %v1065 = vpop.xlane.xlu0 %1064
        %v1066 = vsel %vm738, %v1036, -inf
        %1067 = vmax.xlane.f32.xlu0 %v1066
        %v1068 = vpop.xlane.xlu0 %1067
        %v1069 = vmax.f32 %v1037, %v1047
        %v1070 = vmax.f32 %v1038, %v1050
        %v1071 = vmax.f32 %v1039, %v1053
        %v1072 = vmax.f32 %v1040, %v1056
        %v1073 = vmax.f32 %v1041, %v1059
        %v1074 = vmax.f32 %v1042, %v1062
        %v1075 = vmax.f32 %v1043, %v1065
        %v1076 = vmax.f32 %v1044, %v1068
        %v1077 = vsub.f32 %v1037, %v1069
        %v1078 = vsub.f32 %v1038, %v1070
        %v1079 = vsub.f32 %v1039, %v1071
        %v1080 = vsub.f32 %v1040, %v1072
        %v1081 = vsub.f32 %v1041, %v1073
        %v1082 = vsub.f32 %v1042, %v1074
        %v1083 = vsub.f32 %v1043, %v1075
        %v1084 = vsub.f32 %v1044, %v1076
        %v1085 = vmul.f32 %v1077, 1.442695
        %v1086 = vpow.pop %v1085
        %v1087 = vmul.f32 %v1078, 1.442695
        %v1088 = vpow.pop %v1087
        %v1089 = vmul.f32 %v1079, 1.442695
        %v1090 = vpow.pop %v1089
        %v1091 = vmul.f32 %v1080, 1.442695
        %v1092 = vpow.pop %v1091
        %v1093 = vmul.f32 %v1081, 1.442695
        %v1094 = vpow.pop %v1093
        %v1095 = vmul.f32 %v1082, 1.442695
        %v1096 = vpow.pop %v1095
        %v1097 = vmul.f32 %v1083, 1.442695
        %v1098 = vpow.pop %v1097
        %v1099 = vmul.f32 %v1084, 1.442695
        %v1100 = vpow.pop %v1099
        %1102 = vset.pattern.permute.xlu0 0
        %1103 = vperm.xlu0 %1102, %v1069
        %v1104 = vpop.permute.xlu0 %1103
        %1107 = vset.pattern.permute.xlu0 0
        %1108 = vperm.xlu0 %1107, %v1070
        %v1109 = vpop.permute.xlu0 %1108
        %1112 = vset.pattern.permute.xlu0 0
        %1113 = vperm.xlu0 %1112, %v1071
        %v1114 = vpop.permute.xlu0 %1113
        %1117 = vset.pattern.permute.xlu0 0
        %1118 = vperm.xlu0 %1117, %v1072
        %v1119 = vpop.permute.xlu0 %1118
        %1122 = vset.pattern.permute.xlu0 0
        %1123 = vperm.xlu0 %1122, %v1073
        %v1124 = vpop.permute.xlu0 %1123
        %1127 = vset.pattern.permute.xlu0 0
        %1128 = vperm.xlu0 %1127, %v1074
        %v1129 = vpop.permute.xlu0 %1128
        %1132 = vset.pattern.permute.xlu0 0
        %1133 = vperm.xlu0 %1132, %v1075
        %v1134 = vpop.permute.xlu0 %1133
        %1137 = vset.pattern.permute.xlu0 0
        %1138 = vperm.xlu0 %1137, %v1076
        %v1139 = vpop.permute.xlu0 %1138
        %v1141 = vsub.f32 %v1029, %v1104
        %v1142 = vsub.f32 %v1030, %v1109
        %v1143 = vsub.f32 %v1031, %v1114
        %v1144 = vsub.f32 %v1032, %v1119
        %v1145 = vsub.f32 %v1033, %v1124
        %v1146 = vsub.f32 %v1034, %v1129
        %v1147 = vsub.f32 %v1035, %v1134
        %v1148 = vsub.f32 %v1036, %v1139
        %v1149 = vmul.f32 %v1141, 1.442695
        %v1150 = vpow.pop %v1149
        %v1151 = vmul.f32 %v1142, 1.442695
        %v1152 = vpow.pop %v1151
        %v1153 = vmul.f32 %v1143, 1.442695
        %v1154 = vpow.pop %v1153
        %v1155 = vmul.f32 %v1144, 1.442695
        %v1156 = vpow.pop %v1155
        %v1157 = vmul.f32 %v1145, 1.442695
        %v1158 = vpow.pop %v1157
        %v1159 = vmul.f32 %v1146, 1.442695
        %v1160 = vpow.pop %v1159
        %v1161 = vmul.f32 %v1147, 1.442695
        %v1162 = vpow.pop %v1161
        %v1163 = vmul.f32 %v1148, 1.442695
        %v1164 = vpow.pop %v1163
        %v1165 = vld [vmem:[#allocation7] sm:$0xff]
        %v1166 = vld [vmem:[#allocation7 + $0x8] sm:$0xff]
        %v1167 = vld [vmem:[#allocation7 + $0x10] sm:$0xff]
        %v1168 = vld [vmem:[#allocation7 + $0x18] sm:$0xff]
        %v1169 = vld [vmem:[#allocation7 + $0x20] sm:$0xff]
        %v1170 = vld [vmem:[#allocation7 + $0x28] sm:$0xff]
        %v1171 = vld [vmem:[#allocation7 + $0x30] sm:$0xff]
        %v1172 = vld [vmem:[#allocation7 + $0x38] sm:$0xff]
        %v1173 = vmul.f32 %v1086, %v1165
        %v1174 = vmul.f32 %v1088, %v1166
        %v1175 = vmul.f32 %v1090, %v1167
        %v1176 = vmul.f32 %v1092, %v1168
        %v1177 = vmul.f32 %v1094, %v1169
        %v1178 = vmul.f32 %v1096, %v1170
        %v1179 = vmul.f32 %v1098, %v1171
        %v1180 = vmul.f32 %v1100, %v1172
        %v1181 = vsel %vm738, %v1150, 0.0
        %1182 = vadd.xlane.f32.xlu0 %v1181
        %v1183 = vpop.xlane.xlu0 %1182
        %v1184 = vsel %vm738, %v1152, 0.0
        %1185 = vadd.xlane.f32.xlu0 %v1184
        %v1186 = vpop.xlane.xlu0 %1185
        %v1187 = vsel %vm738, %v1154, 0.0
        %1188 = vadd.xlane.f32.xlu0 %v1187
        %v1189 = vpop.xlane.xlu0 %1188
        %v1190 = vsel %vm738, %v1156, 0.0
        %1191 = vadd.xlane.f32.xlu0 %v1190
        %v1192 = vpop.xlane.xlu0 %1191
        %v1193 = vsel %vm738, %v1158, 0.0
        %1194 = vadd.xlane.f32.xlu0 %v1193
        %v1195 = vpop.xlane.xlu0 %1194
        %v1196 = vsel %vm738, %v1160, 0.0
        %1197 = vadd.xlane.f32.xlu0 %v1196
        %v1198 = vpop.xlane.xlu0 %1197
        %v1199 = vsel %vm738, %v1162, 0.0
        %1200 = vadd.xlane.f32.xlu0 %v1199
        %v1201 = vpop.xlane.xlu0 %1200
        %v1202 = vsel %vm738, %v1164, 0.0
        %1203 = vadd.xlane.f32.xlu0 %v1202
        %v1204 = vpop.xlane.xlu0 %1203
        %v1205 = vadd.f32 %v1173, %v1183
        %v1206 = vadd.f32 %v1174, %v1186
        %v1207 = vadd.f32 %v1175, %v1189
        %v1208 = vadd.f32 %v1176, %v1192
        %v1209 = vadd.f32 %v1177, %v1195
        %v1210 = vadd.f32 %v1178, %v1198
        %v1211 = vadd.f32 %v1179, %v1201
        %v1212 = vadd.f32 %v1180, %v1204
        %1213 = vst.msk [vmem:[#allocation7] sm:$0xff] %vm721, %v1205
        %1214 = vst.msk [vmem:[#allocation7 + $0x8] sm:$0xff] %vm721, %v1206
        %1215 = vst.msk [vmem:[#allocation7 + $0x10] sm:$0xff] %vm721, %v1207
        %1216 = vst.msk [vmem:[#allocation7 + $0x18] sm:$0xff] %vm721, %v1208
        %1217 = vst.msk [vmem:[#allocation7 + $0x20] sm:$0xff] %vm721, %v1209
        %1218 = vst.msk [vmem:[#allocation7 + $0x28] sm:$0xff] %vm721, %v1210
        %1219 = vst.msk [vmem:[#allocation7 + $0x30] sm:$0xff] %vm721, %v1211
        %1220 = vst.msk [vmem:[#allocation7 + $0x38] sm:$0xff] %vm721, %v1212
        %v1221 = vld [vmem:[#allocation8] sm:$0xff]
        %v1222 = vld [vmem:[#allocation8 + $0x8] sm:$0xff]
        %v1223 = vld [vmem:[#allocation8 + $0x10] sm:$0xff]
        %v1224 = vld [vmem:[#allocation8 + $0x18] sm:$0xff]
        %v1225 = vld [vmem:[#allocation8 + $0x20] sm:$0xff]
        %v1226 = vld [vmem:[#allocation8 + $0x28] sm:$0xff]
        %v1227 = vld [vmem:[#allocation8 + $0x30] sm:$0xff]
        %v1228 = vld [vmem:[#allocation8 + $0x38] sm:$0xff]
        %1230 = vset.pattern.permute.xlu0 0
        %1231 = vperm.xlu0 %1230, %v1086
        %v1232 = vpop.permute.xlu0 %1231
        %1235 = vset.pattern.permute.xlu0 0
        %1236 = vperm.xlu0 %1235, %v1088
        %v1237 = vpop.permute.xlu0 %1236
        %1240 = vset.pattern.permute.xlu0 0
        %1241 = vperm.xlu0 %1240, %v1090
        %v1242 = vpop.permute.xlu0 %1241
        %1245 = vset.pattern.permute.xlu0 0
        %1246 = vperm.xlu0 %1245, %v1092
        %v1247 = vpop.permute.xlu0 %1246
        %1250 = vset.pattern.permute.xlu0 0
        %1251 = vperm.xlu0 %1250, %v1094
        %v1252 = vpop.permute.xlu0 %1251
        %1255 = vset.pattern.permute.xlu0 0
        %1256 = vperm.xlu0 %1255, %v1096
        %v1257 = vpop.permute.xlu0 %1256
        %1260 = vset.pattern.permute.xlu0 0
        %1261 = vperm.xlu0 %1260, %v1098
        %v1262 = vpop.permute.xlu0 %1261
        %1265 = vset.pattern.permute.xlu0 0
        %1266 = vperm.xlu0 %1265, %v1100
        %v1267 = vpop.permute.xlu0 %1266
        %v1269 = vmul.f32 %v1232, %v1221
        %v1270 = vmul.f32 %v1237, %v1222
        %v1271 = vmul.f32 %v1242, %v1223
        %v1272 = vmul.f32 %v1247, %v1224
        %v1273 = vmul.f32 %v1252, %v1225
        %v1274 = vmul.f32 %v1257, %v1226
        %v1275 = vmul.f32 %v1262, %v1227
        %v1276 = vmul.f32 %v1267, %v1228
        %v1277 = vpack.c.bf16 %v1152, %v1150
        %v1278 = vpack.c.bf16 %v1156, %v1154
        %v1279 = vpack.c.bf16 %v1160, %v1158
        %v1280 = vpack.c.bf16 %v1164, %v1162
        %v1283 = vunpack.c.l.b16 %v775
        %v1284 = vunpack.c.l.b16 %v776
        %v1285 = vpack.c.b16 %v1284, %v1283
        %v1288 = vsel %vm738, %v1277, 0
        %1290 = vmatprep.subr.bf16.mxu0 0
        %1291 = vmatpush1.bf16.msra.mxu0 0
        %1292 = vmatprep.subr.bf16.mxu0 0
        %1293 = vmatpush1.bf16.msra.mxu0 0
        %1294 = vmatprep.subr.bf16.mxu0 0
        %1295 = vmatpush1.bf16.msra.mxu0 0
        %1296 = vmatprep.subr.bf16.mxu0 0
        %1297 = vmatpush1.bf16.msra.mxu0 0
        %1298 = vmatprep.subr.bf16.mxu0 0
        %1299 = vmatpush1.bf16.msra.mxu0 0
        %1300 = vmatprep.subr.bf16.mxu0 0
        %1301 = vmatpush1.bf16.msra.mxu0 0
        %1302 = vmatprep.subr.bf16.mxu0 0
        %1303 = vmatpush1.bf16.msra.mxu0 0
        %1304 = vmatprep.subr.bf16.mxu0 0
        %1305 = vmatpush1.bf16.msra.mxu0 %v1285
        %1306 = vmatprep.subr.bf16.mxu0 0
        %1307 = vmatpush2.bf16.msra.mxu0 0
        %1308 = vmatprep.subr.bf16.mxu0 0
        %1309 = vmatpush2.bf16.msra.mxu0 0
        %1310 = vmatprep.subr.bf16.mxu0 0
        %1311 = vmatpush2.bf16.msra.mxu0 0
        %1312 = vmatprep.subr.bf16.mxu0 0
        %1313 = vmatpush2.bf16.msra.mxu0 0
        %1314 = vmatprep.subr.bf16.mxu0 0
        %1315 = vmatpush2.bf16.msra.mxu0 0
        %1316 = vmatprep.subr.bf16.mxu0 0
        %1317 = vmatpush2.bf16.msra.mxu0 0
        %1318 = vmatprep.subr.bf16.mxu0 0
        %1319 = vmatpush2.bf16.msra.mxu0 0
        %1320 = vmatprep.subr.bf16.mxu0 0
        %1321 = vmatpush2.bf16.msra.mxu0 0
        %1322 = vmatprep.mubr.bf16.mxu0 0
        %1323 = vmatmul.mubr.bf16.gmra.mxu0 %v1288
        %v1324 = vpop.f32.mrf.mxu0
        %v1325 = vadd.f32 0.0, %v1324
        %v1326 = vpop.f32.mrf.mxu0
        %v1327 = vpop.f32.mrf.mxu0
        %v1328 = vadd.f32 0.0, %v1327
        %v1329 = vpop.f32.mrf.mxu0
        %1330 = vdwg.mxu0
        %v1333 = vunpack.c.l.b16 %v777
        %v1334 = vunpack.c.l.b16 %v778
        %v1335 = vpack.c.b16 %v1334, %v1333
        %v1338 = vsel %vm738, %v1278, 0
        %1340 = vmatprep.subr.bf16.mxu0 0
        %1341 = vmatpush1.bf16.msra.mxu0 0
        %1342 = vmatprep.subr.bf16.mxu0 0
        %1343 = vmatpush1.bf16.msra.mxu0 0
        %1344 = vmatprep.subr.bf16.mxu0 0
        %1345 = vmatpush1.bf16.msra.mxu0 0
        %1346 = vmatprep.subr.bf16.mxu0 0
        %1347 = vmatpush1.bf16.msra.mxu0 0
        %1348 = vmatprep.subr.bf16.mxu0 0
        %1349 = vmatpush1.bf16.msra.mxu0 0
        %1350 = vmatprep.subr.bf16.mxu0 0
        %1351 = vmatpush1.bf16.msra.mxu0 0
        %1352 = vmatprep.subr.bf16.mxu0 0
        %1353 = vmatpush1.bf16.msra.mxu0 0
        %1354 = vmatprep.subr.bf16.mxu0 0
        %1355 = vmatpush1.bf16.msra.mxu0 %v1335
        %1356 = vmatprep.subr.bf16.mxu0 0
        %1357 = vmatpush2.bf16.msra.mxu0 0
        %1358 = vmatprep.subr.bf16.mxu0 0
        %1359 = vmatpush2.bf16.msra.mxu0 0
        %1360 = vmatprep.subr.bf16.mxu0 0
        %1361 = vmatpush2.bf16.msra.mxu0 0
        %1362 = vmatprep.subr.bf16.mxu0 0
        %1363 = vmatpush2.bf16.msra.mxu0 0
        %1364 = vmatprep.subr.bf16.mxu0 0
        %1365 = vmatpush2.bf16.msra.mxu0 0
        %1366 = vmatprep.subr.bf16.mxu0 0
        %1367 = vmatpush2.bf16.msra.mxu0 0
        %1368 = vmatprep.subr.bf16.mxu0 0
        %1369 = vmatpush2.bf16.msra.mxu0 0
        %1370 = vmatprep.subr.bf16.mxu0 0
        %1371 = vmatpush2.bf16.msra.mxu0 0
        %1372 = vmatprep.mubr.bf16.mxu0 0
        %1373 = vmatmul.mubr.bf16.gmra.mxu0 %v1338
        %v1374 = vpop.f32.mrf.mxu0
        %v1375 = vadd.f32 0.0, %v1374
        %v1376 = vpop.f32.mrf.mxu0
        %v1377 = vpop.f32.mrf.mxu0
        %v1378 = vadd.f32 0.0, %v1377
        %v1379 = vpop.f32.mrf.mxu0
        %1380 = vdwg.mxu0
        %v1383 = vunpack.c.l.b16 %v779
        %v1384 = vunpack.c.l.b16 %v780
        %v1385 = vpack.c.b16 %v1384, %v1383
        %v1388 = vsel %vm738, %v1279, 0
        %1390 = vmatprep.subr.bf16.mxu0 0
        %1391 = vmatpush1.bf16.msra.mxu0 0
        %1392 = vmatprep.subr.bf16.mxu0 0
        %1393 = vmatpush1.bf16.msra.mxu0 0
        %1394 = vmatprep.subr.bf16.mxu0 0
        %1395 = vmatpush1.bf16.msra.mxu0 0
        %1396 = vmatprep.subr.bf16.mxu0 0
        %1397 = vmatpush1.bf16.msra.mxu0 0
        %1398 = vmatprep.subr.bf16.mxu0 0
        %1399 = vmatpush1.bf16.msra.mxu0 0
        %1400 = vmatprep.subr.bf16.mxu0 0
        %1401 = vmatpush1.bf16.msra.mxu0 0
        %1402 = vmatprep.subr.bf16.mxu0 0
        %1403 = vmatpush1.bf16.msra.mxu0 0
        %1404 = vmatprep.subr.bf16.mxu0 0
        %1405 = vmatpush1.bf16.msra.mxu0 %v1385
        %1406 = vmatprep.subr.bf16.mxu0 0
        %1407 = vmatpush2.bf16.msra.mxu0 0
        %1408 = vmatprep.subr.bf16.mxu0 0
        %1409 = vmatpush2.bf16.msra.mxu0 0
        %1410 = vmatprep.subr.bf16.mxu0 0
        %1411 = vmatpush2.bf16.msra.mxu0 0
        %1412 = vmatprep.subr.bf16.mxu0 0
        %1413 = vmatpush2.bf16.msra.mxu0 0
        %1414 = vmatprep.subr.bf16.mxu0 0
        %1415 = vmatpush2.bf16.msra.mxu0 0
        %1416 = vmatprep.subr.bf16.mxu0 0
        %1417 = vmatpush2.bf16.msra.mxu0 0
        %1418 = vmatprep.subr.bf16.mxu0 0
        %1419 = vmatpush2.bf16.msra.mxu0 0
        %1420 = vmatprep.subr.bf16.mxu0 0
        %1421 = vmatpush2.bf16.msra.mxu0 0
        %1422 = vmatprep.mubr.bf16.mxu0 0
        %1423 = vmatmul.mubr.bf16.gmra.mxu0 %v1388
        %v1424 = vpop.f32.mrf.mxu0
        %v1425 = vadd.f32 0.0, %v1424
        %v1426 = vpop.f32.mrf.mxu0
        %v1427 = vpop.f32.mrf.mxu0
        %v1428 = vadd.f32 0.0, %v1427
        %v1429 = vpop.f32.mrf.mxu0
        %1430 = vdwg.mxu0
        %v1433 = vunpack.c.l.b16 %v781
        %v1434 = vunpack.c.l.b16 %v782
        %v1435 = vpack.c.b16 %v1434, %v1433
        %v1438 = vsel %vm738, %v1280, 0
        %1440 = vmatprep.subr.bf16.mxu0 0
        %1441 = vmatpush1.bf16.msra.mxu0 0
        %1442 = vmatprep.subr.bf16.mxu0 0
        %1443 = vmatpush1.bf16.msra.mxu0 0
        %1444 = vmatprep.subr.bf16.mxu0 0
        %1445 = vmatpush1.bf16.msra.mxu0 0
        %1446 = vmatprep.subr.bf16.mxu0 0
        %1447 = vmatpush1.bf16.msra.mxu0 0
        %1448 = vmatprep.subr.bf16.mxu0 0
        %1449 = vmatpush1.bf16.msra.mxu0 0
        %1450 = vmatprep.subr.bf16.mxu0 0
        %1451 = vmatpush1.bf16.msra.mxu0 0
        %1452 = vmatprep.subr.bf16.mxu0 0
        %1453 = vmatpush1.bf16.msra.mxu0 0
        %1454 = vmatprep.subr.bf16.mxu0 0
        %1455 = vmatpush1.bf16.msra.mxu0 %v1435
        %1456 = vmatprep.subr.bf16.mxu0 0
        %1457 = vmatpush2.bf16.msra.mxu0 0
        %1458 = vmatprep.subr.bf16.mxu0 0
        %1459 = vmatpush2.bf16.msra.mxu0 0
        %1460 = vmatprep.subr.bf16.mxu0 0
        %1461 = vmatpush2.bf16.msra.mxu0 0
        %1462 = vmatprep.subr.bf16.mxu0 0
        %1463 = vmatpush2.bf16.msra.mxu0 0
        %1464 = vmatprep.subr.bf16.mxu0 0
        %1465 = vmatpush2.bf16.msra.mxu0 0
        %1466 = vmatprep.subr.bf16.mxu0 0
        %1467 = vmatpush2.bf16.msra.mxu0 0
        %1468 = vmatprep.subr.bf16.mxu0 0
        %1469 = vmatpush2.bf16.msra.mxu0 0
        %1470 = vmatprep.subr.bf16.mxu0 0
        %1471 = vmatpush2.bf16.msra.mxu0 0
        %1472 = vmatprep.mubr.bf16.mxu0 0
        %1473 = vmatmul.mubr.bf16.gmra.mxu0 %v1438
        %v1474 = vpop.f32.mrf.mxu0
        %v1475 = vadd.f32 0.0, %v1474
        %v1476 = vpop.f32.mrf.mxu0
        %v1477 = vpop.f32.mrf.mxu0
        %v1478 = vadd.f32 0.0, %v1477
        %v1479 = vpop.f32.mrf.mxu0
        %1480 = vdwg.mxu0
        %v1481 = vadd.f32 %v1269, %v1325
        %v1482 = vadd.f32 %v1270, %v1328
        %v1483 = vadd.f32 %v1271, %v1375
        %v1484 = vadd.f32 %v1272, %v1378
        %v1485 = vadd.f32 %v1273, %v1425
        %v1486 = vadd.f32 %v1274, %v1428
        %v1487 = vadd.f32 %v1275, %v1475
        %v1488 = vadd.f32 %v1276, %v1478
        %1489 = vst.msk [vmem:[#allocation8] sm:$0xff] %vm738, %v1481
        %1490 = vst.msk [vmem:[#allocation8 + $0x8] sm:$0xff] %vm738, %v1482
        %1491 = vst.msk [vmem:[#allocation8 + $0x10] sm:$0xff] %vm738, %v1483
        %1492 = vst.msk [vmem:[#allocation8 + $0x18] sm:$0xff] %vm738, %v1484
        %1493 = vst.msk [vmem:[#allocation8 + $0x20] sm:$0xff] %vm738, %v1485
        %1494 = vst.msk [vmem:[#allocation8 + $0x28] sm:$0xff] %vm738, %v1486
        %1495 = vst.msk [vmem:[#allocation8 + $0x30] sm:$0xff] %vm738, %v1487
        %1496 = vst.msk [vmem:[#allocation8 + $0x38] sm:$0xff] %vm738, %v1488
        %1497 = vst.msk [vmem:[#allocation6] sm:$0xff] %vm721, %v1069
        %1498 = vst.msk [vmem:[#allocation6 + $0x8] sm:$0xff] %vm721, %v1070
        %1499 = vst.msk [vmem:[#allocation6 + $0x10] sm:$0xff] %vm721, %v1071
        %1500 = vst.msk [vmem:[#allocation6 + $0x18] sm:$0xff] %vm721, %v1072
        %1501 = vst.msk [vmem:[#allocation6 + $0x20] sm:$0xff] %vm721, %v1073
        %1502 = vst.msk [vmem:[#allocation6 + $0x28] sm:$0xff] %vm721, %v1074
        %1503 = vst.msk [vmem:[#allocation6 + $0x30] sm:$0xff] %vm721, %v1075
        %1504 = vst.msk [vmem:[#allocation6 + $0x38] sm:$0xff] %vm721, %v1076
      $region65: #{_lambda_.5} parent=55 // loop_footer
        %s757 = sadd.s32 %s755, 1
      $region66: #{_lambda_.5} parent=55 // loop_footer_branch
        %754 = sbr.rel target = $region62
      $region67: #{_lambda_.5} parent=55 // loop_exit
        _
      %v1505 = vld [vmem:[#allocation8] sm:$0xff]
      %v1506 = vld [vmem:[#allocation8 + $0x8] sm:$0xff]
      %v1507 = vld [vmem:[#allocation8 + $0x10] sm:$0xff]
      %v1508 = vld [vmem:[#allocation8 + $0x18] sm:$0xff]
      %v1509 = vld [vmem:[#allocation8 + $0x20] sm:$0xff]
      %v1510 = vld [vmem:[#allocation8 + $0x28] sm:$0xff]
      %v1511 = vld [vmem:[#allocation8 + $0x30] sm:$0xff]
      %v1512 = vld [vmem:[#allocation8 + $0x38] sm:$0xff]
      %v1513 = vld [vmem:[#allocation7] sm:$0xff]
      %v1514 = vld [vmem:[#allocation7 + $0x8] sm:$0xff]
      %v1515 = vld [vmem:[#allocation7 + $0x10] sm:$0xff]
      %v1516 = vld [vmem:[#allocation7 + $0x18] sm:$0xff]
      %v1517 = vld [vmem:[#allocation7 + $0x20] sm:$0xff]
      %v1518 = vld [vmem:[#allocation7 + $0x28] sm:$0xff]
      %v1519 = vld [vmem:[#allocation7 + $0x30] sm:$0xff]
      %v1520 = vld [vmem:[#allocation7 + $0x38] sm:$0xff]
      %v1521 = vrcp.pop %v1513
      %v1522 = vrcp.pop %v1514
      %v1523 = vrcp.pop %v1515
      %v1524 = vrcp.pop %v1516
      %v1525 = vrcp.pop %v1517
      %v1526 = vrcp.pop %v1518
      %v1527 = vrcp.pop %v1519
      %v1528 = vrcp.pop %v1520
      %1530 = vset.pattern.permute.xlu0 0
      %1531 = vperm.xlu0 %1530, %v1521
      %v1532 = vpop.permute.xlu0 %1531
      %1535 = vset.pattern.permute.xlu0 0
      %1536 = vperm.xlu0 %1535, %v1522
      %v1537 = vpop.permute.xlu0 %1536
      %1540 = vset.pattern.permute.xlu0 0
      %1541 = vperm.xlu0 %1540, %v1523
      %v1542 = vpop.permute.xlu0 %1541
      %1545 = vset.pattern.permute.xlu0 0
      %1546 = vperm.xlu0 %1545, %v1524
      %v1547 = vpop.permute.xlu0 %1546
      %1550 = vset.pattern.permute.xlu0 0
      %1551 = vperm.xlu0 %1550, %v1525
      %v1552 = vpop.permute.xlu0 %1551
      %1555 = vset.pattern.permute.xlu0 0
      %1556 = vperm.xlu0 %1555, %v1526
      %v1557 = vpop.permute.xlu0 %1556
      %1560 = vset.pattern.permute.xlu0 0
      %1561 = vperm.xlu0 %1560, %v1527
      %v1562 = vpop.permute.xlu0 %1561
      %1565 = vset.pattern.permute.xlu0 0
      %1566 = vperm.xlu0 %1565, %v1528
      %v1567 = vpop.permute.xlu0 %1566
      %v1569 = vmul.f32 %v1505, %v1532
      %v1570 = vmul.f32 %v1506, %v1537
      %v1571 = vmul.f32 %v1507, %v1542
      %v1572 = vmul.f32 %v1508, %v1547
      %v1573 = vmul.f32 %v1509, %v1552
      %v1574 = vmul.f32 %v1510, %v1557
      %v1575 = vmul.f32 %v1511, %v1562
      %v1576 = vmul.f32 %v1512, %v1567
      %v1577 = vpack.c.bf16 %v1570, %v1569
      %v1578 = vpack.c.bf16 %v1572, %v1571
      %v1579 = vpack.c.bf16 %v1574, %v1573
      %v1580 = vpack.c.bf16 %v1576, %v1575
      %v1582 = vunpack.c.l.b16 %v1577
      %v1583 = vunpack.c.h.b16 %v1577
      %v1584 = vpack.c.b16 %v1582, %v1582
      %v1585 = vpack.c.b16 %v1583, %v1583
      %1588 = vst.msk [vmem:[#allocation9] sm:$0xf] %vm683, %v1584
      %1589 = vst.msk [vmem:[#allocation9 + $0x4] sm:$0xf] %vm683, %v1585
      %v1591 = vunpack.c.l.b16 %v1578
      %v1592 = vunpack.c.h.b16 %v1578
      %v1593 = vpack.c.b16 %v1591, %v1591
      %v1594 = vpack.c.b16 %v1592, %v1592
      %1595 = vrot.lane.b32.xlu0 %v1593, 16
      %v1596 = vpop.permute.xlu0 %1595
      %1597 = vrot.lane.b32.xlu0 %v1594, 16
      %v1598 = vpop.permute.xlu0 %1597
      %vm1601 = vcmask 257152
      %1602 = vst.msk [vmem:[#allocation9] sm:$0xf] %vm1601, %v1596
      %1603 = vst.msk [vmem:[#allocation9 + $0x4] sm:$0xf] %vm1601, %v1598
      %v1605 = vunpack.c.l.b16 %v1579
      %v1606 = vunpack.c.h.b16 %v1579
      %v1607 = vpack.c.b16 %v1605, %v1605
      %v1608 = vpack.c.b16 %v1606, %v1606
      %1609 = vrot.lane.b32.xlu0 %v1607, 32
      %v1610 = vpop.permute.xlu0 %1609
      %1611 = vrot.lane.b32.xlu0 %v1608, 32
      %v1612 = vpop.permute.xlu0 %1611
      %vm1615 = vcmask 388352
      %1616 = vst.msk [vmem:[#allocation9] sm:$0xf] %vm1615, %v1610
      %1617 = vst.msk [vmem:[#allocation9 + $0x4] sm:$0xf] %vm1615, %v1612
      %v1619 = vunpack.c.l.b16 %v1580
      %v1620 = vunpack.c.h.b16 %v1580
      %v1621 = vpack.c.b16 %v1619, %v1619
      %v1622 = vpack.c.b16 %v1620, %v1620
      %1623 = vrot.lane.b32.xlu0 %v1621, 48
      %v1624 = vpop.permute.xlu0 %1623
      %1625 = vrot.lane.b32.xlu0 %v1622, 48
      %v1626 = vpop.permute.xlu0 %1625
      %vm1629 = vcmask 519552
      %1630 = vst.msk [vmem:[#allocation9] sm:$0xf] %vm1629, %v1624
      %1631 = vst.msk [vmem:[#allocation9 + $0x4] sm:$0xf] %vm1629, %v1626
      %v1632 = vld [vmem:[#allocation9] sm:$0xf]
      %v1633 = vld [vmem:[#allocation9 + $0x4] sm:$0xf]
      %v1634 = vld [vmem:[%s7] sm:$0xf]
      %v1635 = vld [vmem:[%s7 + $0x4] sm:$0xf]
      %v1636 = vld [vmem:[%s7 + $0x8] sm:$0xf]
      %v1637 = vld [vmem:[%s7 + $0xc] sm:$0xf]
      %v1638 = vld [vmem:[%s7 + $0x10] sm:$0xf]
      %v1639 = vld [vmem:[%s7 + $0x14] sm:$0xf]
      %v1640 = vld [vmem:[%s7 + $0x18] sm:$0xf]
      %v1641 = vld [vmem:[%s7 + $0x1c] sm:$0xf]
      %v1644 = vunpack.c.l.b16 %v1632
      %v1645 = vunpack.c.l.b16 %v1633
      %v1646 = vpack.c.b16 %v1645, %v1644
      %v1655 = vunpack.c.l.b16 %v1634
      %v1656 = vunpack.c.l.b16 %v1635
      %v1657 = vunpack.c.l.b16 %v1636
      %v1658 = vunpack.c.l.b16 %v1637
      %v1659 = vunpack.c.l.b16 %v1638
      %v1660 = vunpack.c.l.b16 %v1639
      %v1661 = vunpack.c.l.b16 %v1640
      %v1662 = vunpack.c.l.b16 %v1641
      %v1663 = vpack.c.b16 %v1656, %v1655
      %v1664 = vpack.c.b16 %v1658, %v1657
      %v1665 = vpack.c.b16 %v1660, %v1659
      %v1666 = vpack.c.b16 %v1662, %v1661
      %v1672 = vsel %vm630, %v1646, 0
      %1674 = vmatprep.subr.bf16.mxu0 0
      %1675 = vmatpush1.bf16.msra.mxu0 0
      %1676 = vmatprep.subr.bf16.mxu0 0
      %1677 = vmatpush1.bf16.msra.mxu0 0
      %1678 = vmatprep.subr.bf16.mxu0 0
      %1679 = vmatpush1.bf16.msra.mxu0 0
      %1680 = vmatprep.subr.bf16.mxu0 0
      %1681 = vmatpush1.bf16.msra.mxu0 0
      %1682 = vmatprep.subr.bf16.mxu0 0
      %1683 = vmatpush1.bf16.msra.mxu0 %v1666
      %1684 = vmatprep.subr.bf16.mxu0 0
      %1685 = vmatpush1.bf16.msra.mxu0 %v1665
      %1686 = vmatprep.subr.bf16.mxu0 0
      %1687 = vmatpush1.bf16.msra.mxu0 %v1664
      %1688 = vmatprep.subr.bf16.mxu0 0
      %1689 = vmatpush1.bf16.msra.mxu0 %v1663
      %1690 = vmatprep.subr.bf16.mxu0 0
      %1691 = vmatpush2.bf16.msra.mxu0 0
      %1692 = vmatprep.subr.bf16.mxu0 0
      %1693 = vmatpush2.bf16.msra.mxu0 0
      %1694 = vmatprep.subr.bf16.mxu0 0
      %1695 = vmatpush2.bf16.msra.mxu0 0
      %1696 = vmatprep.subr.bf16.mxu0 0
      %1697 = vmatpush2.bf16.msra.mxu0 0
      %1698 = vmatprep.subr.bf16.mxu0 0
      %1699 = vmatpush2.bf16.msra.mxu0 0
      %1700 = vmatprep.subr.bf16.mxu0 0
      %1701 = vmatpush2.bf16.msra.mxu0 0
      %1702 = vmatprep.subr.bf16.mxu0 0
      %1703 = vmatpush2.bf16.msra.mxu0 0
      %1704 = vmatprep.subr.bf16.mxu0 0
      %1705 = vmatpush2.bf16.msra.mxu0 0
      %1706 = vmatprep.mubr.bf16.mxu0 0
      %1707 = vmatmul.mubr.bf16.gmra.mxu0 %v1672
      %v1708 = vpop.f32.mrf.mxu0
      %v1709 = vadd.f32 0.0, %v1708
      %v1710 = vpop.f32.mrf.mxu0
      %v1711 = vpop.f32.mrf.mxu0
      %v1712 = vadd.f32 0.0, %v1711
      %v1713 = vpop.f32.mrf.mxu0
      %1714 = vdwg.mxu0
      %v1715 = vadd.f32 %v578, %v1709
      %v1716 = vadd.f32 %v579, %v1712
      %v1717 = vld [vmem:[%s8] sm:$0x1]
      %v1719 = vlaneseq
      %v1720 = vshrl.u32 %v1719, 7
      %v1721 = vsub.s32 0, %v1720
      %v1722 = vrot.slane %v1717, %v1721
      %v1724 = vadd.f32 %v1715, %v1722
      %v1725 = vadd.f32 %v1716, %v1722
      %1726 = vst.msk [vmem:[%s354] sm:$0xff] %vm630, %v1724
      %1727 = vst.msk [vmem:[%s354 + $0x8] sm:$0xff] %vm630, %v1725
      %s1728 = smul.u32 2, %s25
      %p1729 = scmp.lt.s32.totalorder %s24, 1
      %s1730 = scalar_select %p1729, %s24, 1
      %p1731 = scmp.lt.s32.totalorder %s1728, 1
      %s1732 = scalar_select %p1731, %s1728, 1
      %s1733 = smul.addr %s1730, 2
      %s1734 = sadd.s32 %s1732, %s1733
      %s1735 = smul.addr %s1734, 8
      %s1736 = scalar_lea.vmem %s9, %s1735
      // Predicated region
      $region68: #{_lambda_.5} parent=55 // pred_check
        %p1737 = pneg %p246
      $region69: #{_lambda_.5} parent=55 // pred_check_branch
        %1739 = sbr.rel (%p1737) target = $region71
      $region70: #{_lambda_.5} parent=55 // pred_region
        %s1740 = smul.u32 2, %s25
      $region71: #{_lambda_.5} parent=55 // pred_fallthru
        _
    $region56: #{_lambda_.5} parent=5 // pred_fallthru
      _
    %p1741 = scmp.le.s32.totalorder 2, %s15
    // Predicated region
    $region72: #{_lambda_.5} parent=5 // pred_check
      %p1742 = pneg %p1741
    $region73: #{_lambda_.5} parent=5 // pred_check_branch
      %1744 = sbr.rel (%p1742) target = $region75
    $region74: #{_lambda_.5} parent=5 // pred_region
      %s1745 = ssub.s32 %s15, 2
      // Predicated region
      $region76: #{_lambda_.5} parent=74 // pred_check
        %p1746 = pneg %p252
      $region77: #{_lambda_.5} parent=74 // pred_check_branch
        %1748 = sbr.rel (%p1746) target = $region79
      $region78: #{_lambda_.5} parent=74 // pred_region
        %s1749 = smul.u32 2, %s27
        %p1750 = scmp.lt.s32.totalorder %s26, 1
        %s1751 = scalar_select %p1750, %s26, 1
        %p1752 = scmp.lt.s32.totalorder %s1749, 1
        %s1753 = scalar_select %p1752, %s1749, 1
        %s1754 = smul.addr %s1751, 2
        %s1755 = sadd.s32 %s1753, %s1754
        %s1756 = smul.addr %s1755, 8
        %s1757 = scalar_lea.vmem %s9, %s1756
      $region79: #{_lambda_.5} parent=74 // pred_fallthru
        _
    $region75: #{_lambda_.5} parent=5 // pred_fallthru
      _
  $region6: #{_lambda_.5} parent=0 // loop_footer
    %s19 = sadd.s32 1, %s15
  $region7: #{_lambda_.5} parent=0 // loop_footer_branch
    %14 = sbr.rel target = $region3
  $region8: #{_lambda_.5} parent=0 // loop_exit
    _

</llo_original>
